<compile_context>
chip_gen: v7x
topology: tpu7x:2x2x1
jax: 0.10.0
libtpu: 0.0.40
codegen_flags: <defaults>
</compile_context>

<pallas_src>
import jax
import jax.numpy as jnp
from jax.experimental import pallas as pl
from jax.experimental.pallas import tpu as pltpu

_LANE = 128


def _residual_block_kernel(xp_ref, w1_ref, b1_ref, w2_ref, b2_ref, o_ref, zpad_ref):
    # xp_ref : (1, H+2, W+2, Cp)  zero-padded input tile (one batch element)
    # w*_ref : (9*Cp, Cp)         im2col-ordered conv weights
    # b*_ref : (1, Cp)            biases
    # o_ref  : (1, H, W, Cp)      output tile
    # zpad_ref: (H+2, W+2, Cp)    persistent VMEM scratch holding padded z
    _, H, W, Cp = o_ref.shape

    def im2col_3x3(src):
        # src: (H+2, W+2, Cp) value -> (H*W, 9*Cp), tap order (dy, dx) row-major,
        # matching the wrapper's weight reshape.
        taps = [src[dy:dy + H, dx:dx + W, :] for dy in range(3) for dx in range(3)]
        return jnp.concatenate(taps, axis=-1).reshape(H * W, 9 * Cp)

    # ---- conv1 + relu: single fused MXU dot (K = 9*Cp) -----------------------
    z = jnp.dot(im2col_3x3(xp_ref[0]), w1_ref[...],
                preferred_element_type=jnp.float32) + b1_ref[...]
    z = jnp.maximum(z, 0.0)                                  # (H*W, Cp)

    # ---- stage padded z for conv2: zero only the halo, write the interior ----
    zpad_ref[0:1, :, :] = jnp.zeros((1, W + 2, Cp), jnp.float32)
    zpad_ref[H + 1:H + 2, :, :] = jnp.zeros((1, W + 2, Cp), jnp.float32)
    zpad_ref[:, 0:1, :] = jnp.zeros((H + 2, 1, Cp), jnp.float32)
    zpad_ref[:, W + 1:W + 2, :] = jnp.zeros((H + 2, 1, Cp), jnp.float32)
    zpad_ref[1:1 + H, 1:1 + W, :] = z.reshape(H, W, Cp)

    # ---- conv2 (single fused dot), residual add, relu -------------------------
    y = jnp.dot(im2col_3x3(zpad_ref[...]), w2_ref[...],
                preferred_element_type=jnp.float32) + b2_ref[...]
    out = jnp.maximum(z + y, 0.0)                            # (H*W, Cp)
    o_ref[...] = out.reshape(1, H, W, Cp).astype(o_ref.dtype)


def residual_block(x_nchw, w1_oihw, b1, w2_oihw, b2):
    """Forward pass of Residual_Block. Input/output are NCHW float32."""
    N, C, H, W = x_nchw.shape
    Cp = ((C + _LANE - 1) // _LANE) * _LANE   # lane-dense channel count
    pad_c = Cp - C

    # Glue (plain JAX): layout conversion, channel padding, spatial zero padding.
    x_nhwc = jnp.transpose(x_nchw, (0, 2, 3, 1)).astype(jnp.float32)
    xp = jnp.pad(x_nhwc, ((0, 0), (1, 1), (1, 1), (0, pad_c)))

    def prep_weight(w_oihw):
        # OIHW -> HWIO -> zero-pad channels -> (9*Cp, Cp) im2col weight matrix.
        w_hwio = jnp.transpose(w_oihw, (2, 3, 1, 0)).astype(jnp.float32)
        w_hwio = jnp.pad(w_hwio, ((0, 0), (0, 0), (0, pad_c), (0, pad_c)))
        return w_hwio.reshape(9 * Cp, Cp)

    w1m = prep_weight(w1_oihw)
    w2m = prep_weight(w2_oihw)
    b1p = jnp.pad(b1.astype(jnp.float32), (0, pad_c)).reshape(1, Cp)
    b2p = jnp.pad(b2.astype(jnp.float32), (0, pad_c)).reshape(1, Cp)

    out_nhwc = pl.pallas_call(
        _residual_block_kernel,
        out_shape=jax.ShapeDtypeStruct((N, H, W, Cp), jnp.float32),
        grid_spec=pltpu.PrefetchScalarGridSpec(
            num_scalar_prefetch=0,
            grid=(N,),
            in_specs=[
                pl.BlockSpec((1, H + 2, W + 2, Cp), lambda n: (n, 0, 0, 0)),
                pl.BlockSpec((9 * Cp, Cp), lambda n: (0, 0)),
                pl.BlockSpec((1, Cp), lambda n: (0, 0)),
                pl.BlockSpec((9 * Cp, Cp), lambda n: (0, 0)),
                pl.BlockSpec((1, Cp), lambda n: (0, 0)),
            ],
            out_specs=pl.BlockSpec((1, H, W, Cp), lambda n: (n, 0, 0, 0)),
            scratch_shapes=[pltpu.VMEM((H + 2, W + 2, Cp), jnp.float32)],
        ),
        compiler_params=pltpu.CompilerParams(
            dimension_semantics=("parallel",)),  # batch axis -> both v7x TCs
    )(xp, w1m, b1p, w2m, b2p)

    # Drop padded channels, back to NCHW.
    return jnp.transpose(out_nhwc[..., :C], (0, 3, 1, 2))


def _reference_forward(x, w1, b1, w2, b2):
    """Pure-JAX reference matching the PyTorch forward (NCHW)."""
    dn = ("NCHW", "OIHW", "NCHW")
    z = jax.lax.conv_general_dilated(x, w1, (1, 1), "SAME",
                                     dimension_numbers=dn) + b1.reshape(1, -1, 1, 1)
    z = jnp.maximum(z, 0.0)
    y = jax.lax.conv_general_dilated(z, w2, (1, 1), "SAME",
                                     dimension_numbers=dn) + b2.reshape(1, -1, 1, 1)
    return jnp.maximum(z + y, 0.0)


if __name__ == "__main__":
    N, C, H, W = 2, 4, 16, 16

    key = jax.random.PRNGKey(0)
    k1, k2, k3, k4, k5 = jax.random.split(key, 5)

    # Deterministic parameter init (PyTorch-like uniform(-1/sqrt(fan_in), +)).
    fan_in = C * 3 * 3
    bound = 1.0 / (fan_in ** 0.5)
    w1 = jax.random.uniform(k1, (C, C, 3, 3), jnp.float32, -bound, bound)
    b1 = jax.random.uniform(k2, (C,), jnp.float32, -bound, bound)
    w2 = jax.random.uniform(k3, (C, C, 3, 3), jnp.float32, -bound, bound)
    b2 = jax.random.uniform(k4, (C,), jnp.float32, -bound, bound)

    x = jax.random.normal(k5, (N, C, H, W), jnp.float32)

    out = residual_block(x, w1, b1, w2, b2)
    out = jax.block_until_ready(out)

    ref = _reference_forward(x, w1, b1, w2, b2)
    assert out.shape == (N, C, H, W)
    assert jnp.allclose(out, ref, atol=1e-4, rtol=1e-4), float(
        jnp.max(jnp.abs(out - ref)))

    print("KERNEL_OK")
</pallas_src>

<mosaic_0001>
module attributes {stable_mosaic.version = 11 : i64} {
  func.func @_residual_block_kernel(%arg0: i32, %arg1: memref<1x18x18x128xf32, #tpu.memory_space<vmem>>, %arg2: memref<1152x128xf32, #tpu.memory_space<vmem>>, %arg3: memref<1x128xf32, #tpu.memory_space<vmem>>, %arg4: memref<1152x128xf32, #tpu.memory_space<vmem>>, %arg5: memref<1x128xf32, #tpu.memory_space<vmem>>, %arg6: memref<1x16x16x128xf32, #tpu.memory_space<vmem>>, %arg7: memref<18x18x128xf32, #tpu.memory_space<vmem>>) attributes {dimension_semantics = [#tpu.dimension_semantics<parallel>], iteration_bounds = array<i64: 2>, scalar_prefetch = 0 : i64, scratch_operands = 1 : i64, tpu.core_type = #tpu.core_type<tc>, window_params = [{transform_indices = @transform_0, window_bounds = array<i64: 1, 18, 18, 128>}, {pipeline_mode = #tpu.pipeline_mode<synchronous>, transform_indices = @transform_1, window_bounds = array<i64: 1152, 128>}, {pipeline_mode = #tpu.pipeline_mode<synchronous>, transform_indices = @transform_2, window_bounds = array<i64: 1, 128>}, {pipeline_mode = #tpu.pipeline_mode<synchronous>, transform_indices = @transform_3, window_bounds = array<i64: 1152, 128>}, {pipeline_mode = #tpu.pipeline_mode<synchronous>, transform_indices = @transform_4, window_bounds = array<i64: 1, 128>}, {transform_indices = @transform_5, window_bounds = array<i64: 1, 16, 16, 128>}]} {
    %c0 = arith.constant 0 : index
    %c0_0 = arith.constant 0 : index
    %c0_1 = arith.constant 0 : index
    %c0_2 = arith.constant 0 : index
    %0 = vector.load %arg1[%c0, %c0_0, %c0_1, %c0_2] : memref<1x18x18x128xf32, #tpu.memory_space<vmem>>, vector<1x18x18x128xf32>
    %1 = vector.shape_cast %0 : vector<1x18x18x128xf32> to vector<18x18x128xf32>
    %2 = vector.extract_strided_slice %1 {offsets = [0, 0, 0], sizes = [16, 16, 128], strides = [1, 1, 1]} : vector<18x18x128xf32> to vector<16x16x128xf32>
    %3 = vector.extract_strided_slice %1 {offsets = [0, 1, 0], sizes = [16, 16, 128], strides = [1, 1, 1]} : vector<18x18x128xf32> to vector<16x16x128xf32>
    %4 = vector.extract_strided_slice %1 {offsets = [0, 2, 0], sizes = [16, 16, 128], strides = [1, 1, 1]} : vector<18x18x128xf32> to vector<16x16x128xf32>
    %5 = vector.extract_strided_slice %1 {offsets = [1, 0, 0], sizes = [16, 16, 128], strides = [1, 1, 1]} : vector<18x18x128xf32> to vector<16x16x128xf32>
    %6 = vector.extract_strided_slice %1 {offsets = [1, 1, 0], sizes = [16, 16, 128], strides = [1, 1, 1]} : vector<18x18x128xf32> to vector<16x16x128xf32>
    %7 = vector.extract_strided_slice %1 {offsets = [1, 2, 0], sizes = [16, 16, 128], strides = [1, 1, 1]} : vector<18x18x128xf32> to vector<16x16x128xf32>
    %8 = vector.extract_strided_slice %1 {offsets = [2, 0, 0], sizes = [16, 16, 128], strides = [1, 1, 1]} : vector<18x18x128xf32> to vector<16x16x128xf32>
    %9 = vector.extract_strided_slice %1 {offsets = [2, 1, 0], sizes = [16, 16, 128], strides = [1, 1, 1]} : vector<18x18x128xf32> to vector<16x16x128xf32>
    %10 = vector.extract_strided_slice %1 {offsets = [2, 2, 0], sizes = [16, 16, 128], strides = [1, 1, 1]} : vector<18x18x128xf32> to vector<16x16x128xf32>
    %11 = tpu.concatenate %2, %3, %4, %5, %6, %7, %8, %9, %10 in 2 : vector<16x16x128xf32>, vector<16x16x128xf32>, vector<16x16x128xf32>, vector<16x16x128xf32>, vector<16x16x128xf32>, vector<16x16x128xf32>, vector<16x16x128xf32>, vector<16x16x128xf32>, vector<16x16x128xf32> -> vector<16x16x1152xf32>
    %12 = vector.shape_cast %11 : vector<16x16x1152xf32> to vector<256x1152xf32>
    %c0_3 = arith.constant 0 : index
    %c0_4 = arith.constant 0 : index
    %13 = vector.load %arg2[%c0_3, %c0_4] : memref<1152x128xf32, #tpu.memory_space<vmem>>, vector<1152x128xf32>
    %cst = arith.constant dense<0.000000e+00> : vector<256x128xf32>
    %14 = tpu.matmul %12, %13, %cst {dimension_numbers = #tpu.dot_dimension_numbers<[1], [0], [0], [1], [0, 0, 1, 1], [], []>} : vector<256x1152xf32>, vector<1152x128xf32>, vector<256x128xf32> -> vector<256x128xf32>
    %c0_5 = arith.constant 0 : index
    %c0_6 = arith.constant 0 : index
    %15 = vector.load %arg3[%c0_5, %c0_6] : memref<1x128xf32, #tpu.memory_space<vmem>>, vector<1x128xf32>
    %16 = vector.broadcast %15 : vector<1x128xf32> to vector<256x128xf32>
    %17 = arith.addf %14, %16 : vector<256x128xf32>
    %cst_7 = arith.constant 0.000000e+00 : f32
    %18 = vector.broadcast %cst_7 : f32 to vector<256x128xf32>
    %19 = arith.maximumf %17, %18 : vector<256x128xf32>
    %cst_8 = arith.constant 0.000000e+00 : f32
    %20 = vector.broadcast %cst_8 : f32 to vector<1x18x128xf32>
    %c0_9 = arith.constant 0 : index
    %c0_10 = arith.constant 0 : index
    %c0_11 = arith.constant 0 : index
    %21 = vector.load %arg7[%c0_9, %c0_10, %c0_11] : memref<18x18x128xf32, #tpu.memory_space<vmem>>, vector<1x18x128xf32>
    tpu.vector_store %arg7[%c0_9, %c0_10, %c0_11], %20 {strides = array<i32>} : memref<18x18x128xf32, #tpu.memory_space<vmem>>, vector<1x18x128xf32>,
    %cst_12 = arith.constant 0.000000e+00 : f32
    %22 = vector.broadcast %cst_12 : f32 to vector<1x18x128xf32>
    %c17 = arith.constant 17 : index
    %c0_13 = arith.constant 0 : index
    %c0_14 = arith.constant 0 : index
    %23 = vector.load %arg7[%c17, %c0_13, %c0_14] : memref<18x18x128xf32, #tpu.memory_space<vmem>>, vector<1x18x128xf32>
    tpu.vector_store %arg7[%c17, %c0_13, %c0_14], %22 {strides = array<i32>} : memref<18x18x128xf32, #tpu.memory_space<vmem>>, vector<1x18x128xf32>,
    %cst_15 = arith.constant 0.000000e+00 : f32
    %24 = vector.broadcast %cst_15 : f32 to vector<18x1x128xf32>
    %c0_16 = arith.constant 0 : index
    %c0_17 = arith.constant 0 : index
    %c0_18 = arith.constant 0 : index
    %25 = vector.load %arg7[%c0_16, %c0_17, %c0_18] : memref<18x18x128xf32, #tpu.memory_space<vmem>>, vector<18x1x128xf32>
    tpu.vector_store %arg7[%c0_16, %c0_17, %c0_18], %24 {strides = array<i32>} : memref<18x18x128xf32, #tpu.memory_space<vmem>>, vector<18x1x128xf32>,
    %cst_19 = arith.constant 0.000000e+00 : f32
    %26 = vector.broadcast %cst_19 : f32 to vector<18x1x128xf32>
    %c0_20 = arith.constant 0 : index
    %c17_21 = arith.constant 17 : index
    %c0_22 = arith.constant 0 : index
    %27 = vector.load %arg7[%c0_20, %c17_21, %c0_22] : memref<18x18x128xf32, #tpu.memory_space<vmem>>, vector<18x1x128xf32>
    tpu.vector_store %arg7[%c0_20, %c17_21, %c0_22], %26 {strides = array<i32>} : memref<18x18x128xf32, #tpu.memory_space<vmem>>, vector<18x1x128xf32>,
    %28 = vector.shape_cast %19 : vector<256x128xf32> to vector<16x16x128xf32>
    %c1 = arith.constant 1 : index
    %c1_23 = arith.constant 1 : index
    %c0_24 = arith.constant 0 : index
    %29 = vector.load %arg7[%c1, %c1_23, %c0_24] : memref<18x18x128xf32, #tpu.memory_space<vmem>>, vector<16x16x128xf32>
    tpu.vector_store %arg7[%c1, %c1_23, %c0_24], %28 {strides = array<i32>} : memref<18x18x128xf32, #tpu.memory_space<vmem>>, vector<16x16x128xf32>,
    %c0_25 = arith.constant 0 : index
    %c0_26 = arith.constant 0 : index
    %c0_27 = arith.constant 0 : index
    %30 = vector.load %arg7[%c0_25, %c0_26, %c0_27] : memref<18x18x128xf32, #tpu.memory_space<vmem>>, vector<18x18x128xf32>
    %31 = vector.extract_strided_slice %30 {offsets = [0, 0, 0], sizes = [16, 16, 128], strides = [1, 1, 1]} : vector<18x18x128xf32> to vector<16x16x128xf32>
    %32 = vector.extract_strided_slice %30 {offsets = [0, 1, 0], sizes = [16, 16, 128], strides = [1, 1, 1]} : vector<18x18x128xf32> to vector<16x16x128xf32>
    %33 = vector.extract_strided_slice %30 {offsets = [0, 2, 0], sizes = [16, 16, 128], strides = [1, 1, 1]} : vector<18x18x128xf32> to vector<16x16x128xf32>
    %34 = vector.extract_strided_slice %30 {offsets = [1, 0, 0], sizes = [16, 16, 128], strides = [1, 1, 1]} : vector<18x18x128xf32> to vector<16x16x128xf32>
    %35 = vector.extract_strided_slice %30 {offsets = [1, 1, 0], sizes = [16, 16, 128], strides = [1, 1, 1]} : vector<18x18x128xf32> to vector<16x16x128xf32>
    %36 = vector.extract_strided_slice %30 {offsets = [1, 2, 0], sizes = [16, 16, 128], strides = [1, 1, 1]} : vector<18x18x128xf32> to vector<16x16x128xf32>
    %37 = vector.extract_strided_slice %30 {offsets = [2, 0, 0], sizes = [16, 16, 128], strides = [1, 1, 1]} : vector<18x18x128xf32> to vector<16x16x128xf32>
    %38 = vector.extract_strided_slice %30 {offsets = [2, 1, 0], sizes = [16, 16, 128], strides = [1, 1, 1]} : vector<18x18x128xf32> to vector<16x16x128xf32>
    %39 = vector.extract_strided_slice %30 {offsets = [2, 2, 0], sizes = [16, 16, 128], strides = [1, 1, 1]} : vector<18x18x128xf32> to vector<16x16x128xf32>
    %40 = tpu.concatenate %31, %32, %33, %34, %35, %36, %37, %38, %39 in 2 : vector<16x16x128xf32>, vector<16x16x128xf32>, vector<16x16x128xf32>, vector<16x16x128xf32>, vector<16x16x128xf32>, vector<16x16x128xf32>, vector<16x16x128xf32>, vector<16x16x128xf32>, vector<16x16x128xf32> -> vector<16x16x1152xf32>
    %41 = vector.shape_cast %40 : vector<16x16x1152xf32> to vector<256x1152xf32>
    %c0_28 = arith.constant 0 : index
    %c0_29 = arith.constant 0 : index
    %42 = vector.load %arg4[%c0_28, %c0_29] : memref<1152x128xf32, #tpu.memory_space<vmem>>, vector<1152x128xf32>
    %cst_30 = arith.constant dense<0.000000e+00> : vector<256x128xf32>
    %43 = tpu.matmul %41, %42, %cst_30 {dimension_numbers = #tpu.dot_dimension_numbers<[1], [0], [0], [1], [0, 0, 1, 1], [], []>} : vector<256x1152xf32>, vector<1152x128xf32>, vector<256x128xf32> -> vector<256x128xf32>
    %c0_31 = arith.constant 0 : index
    %c0_32 = arith.constant 0 : index
    %44 = vector.load %arg5[%c0_31, %c0_32] : memref<1x128xf32, #tpu.memory_space<vmem>>, vector<1x128xf32>
    %45 = vector.broadcast %44 : vector<1x128xf32> to vector<256x128xf32>
    %46 = arith.addf %43, %45 : vector<256x128xf32>
    %47 = arith.addf %19, %46 : vector<256x128xf32>
    %cst_33 = arith.constant 0.000000e+00 : f32
    %48 = vector.broadcast %cst_33 : f32 to vector<256x128xf32>
    %49 = arith.maximumf %47, %48 : vector<256x128xf32>
    %50 = vector.shape_cast %49 : vector<256x128xf32> to vector<1x16x16x128xf32>
    %c0_34 = arith.constant 0 : index
    %c0_35 = arith.constant 0 : index
    %c0_36 = arith.constant 0 : index
    %c0_37 = arith.constant 0 : index
    %51 = vector.load %arg6[%c0_34, %c0_35, %c0_36, %c0_37] : memref<1x16x16x128xf32, #tpu.memory_space<vmem>>, vector<1x16x16x128xf32>
    tpu.vector_store %arg6[%c0_34, %c0_35, %c0_36, %c0_37], %50 {strides = array<i32>} : memref<1x16x16x128xf32, #tpu.memory_space<vmem>>, vector<1x16x16x128xf32>,
    return
  }
  func.func @transform_0(%arg0: i32) -> (i32, i32, i32, i32) {
    %c0_i32 = arith.constant 0 : i32
    %c0_i32_0 = arith.constant 0 : i32
    %c0_i32_1 = arith.constant 0 : i32
    %c0_i32_2 = arith.constant 0 : i32
    return %arg0, %c0_i32, %c0_i32_0, %c0_i32_1 : i32, i32, i32, i32
  }
  func.func @transform_1(%arg0: i32) -> (i32, i32) {
    %c0_i32 = arith.constant 0 : i32
    %c0_i32_0 = arith.constant 0 : i32
    %c0_i32_1 = arith.constant 0 : i32
    return %c0_i32, %c0_i32_0 : i32, i32
  }
  func.func @transform_2(%arg0: i32) -> (i32, i32) {
    %c0_i32 = arith.constant 0 : i32
    %c0_i32_0 = arith.constant 0 : i32
    %c0_i32_1 = arith.constant 0 : i32
    return %c0_i32, %c0_i32_0 : i32, i32
  }
  func.func @transform_3(%arg0: i32) -> (i32, i32) {
    %c0_i32 = arith.constant 0 : i32
    %c0_i32_0 = arith.constant 0 : i32
    %c0_i32_1 = arith.constant 0 : i32
    return %c0_i32, %c0_i32_0 : i32, i32
  }
  func.func @transform_4(%arg0: i32) -> (i32, i32) {
    %c0_i32 = arith.constant 0 : i32
    %c0_i32_0 = arith.constant 0 : i32
    %c0_i32_1 = arith.constant 0 : i32
    return %c0_i32, %c0_i32_0 : i32, i32
  }
  func.func @transform_5(%arg0: i32) -> (i32, i32, i32, i32) {
    %c0_i32 = arith.constant 0 : i32
    %c0_i32_0 = arith.constant 0 : i32
    %c0_i32_1 = arith.constant 0 : i32
    %c0_i32_2 = arith.constant 0 : i32
    return %arg0, %c0_i32, %c0_i32_0, %c0_i32_1 : i32, i32, i32, i32
  }
}

</mosaic_0001>

<llo_original>
// kernel: tpu_custom_call.1
$region0: #{tpu_custom_call.1}
  #allocation0 [shape = 'u32[]', space=smem, size = 0x4, offset = 0x4, fixed_abs, tag = 'smem constant byte address 0x4 - core index']
  #allocation1 [shape = 'u32[144,128]{1,0:T(1,128)}', space=vmem, size = 0x12000, scoped, tag = 'internal scratch']
  #allocation2 [shape = 'f32[18,18,128]{2,1,0:T(8,128)}', space=vmem, size = 0x36000, scoped, tag = 'scratch operand']
  %s0 = inlined_call_operand.vmem [shape: f32[2,18,18,128], index: 0, kind: input, shape index: {}]
  %s1 = inlined_call_operand.vmem [shape: f32[1152,128], index: 1, kind: input, shape index: {}]
  %s2 = inlined_call_operand.vmem [shape: f32[1,128], index: 2, kind: input, shape index: {}]
  %s3 = inlined_call_operand.hbm [shape: f32[1152,128], index: 3, kind: input, shape index: {}]
  %s4 = inlined_call_operand.vmem [shape: f32[1,128], index: 4, kind: input, shape index: {}]
  %s5 = inlined_call_operand.hbm [shape: f32[2,16,16,128], index: 5, kind: output, shape index: {}]
  %s6 = sld [smem:[#allocation0]]
  $region57: #{tpu_custom_call.1} parent=0
    _
  %s8 = ssub.s32 1, %s6
  %s9 = scalar_select 0, %s8, %s6
  $region1: #{tpu_custom_call.1} parent=0
    #allocation3 [shape = 'u8[589824]{0}', space=vmem, size = 0x90000, scoped, tag = 'input window, operand 3, single buffered']
    #allocation4 [shape = 's32[2]{0}', space=sflag, size = 0x8, scoped, tag = 'scoped memory for tpu_custom_call.1']
    #allocation5 [shape = 's32[2]{0}', space=sflag, size = 0x8, scoped, tag = 'scoped memory for tpu_custom_call.1']
    #allocation6 [shape = 'u8[262144]{0}', space=vmem, size = 0x40000, scoped, tag = 'output window, operand 0']
    %10 = vsyncpa [#allocation4], 0
    %11 = vsyncpa [#allocation5], 0
    %s12 = scalar_lea.sflag [#allocation5], 1
    %13 = vsyncpa %s12, 0
    loop: start=0, step=1, limit=4
    $region2: #{tpu_custom_call.1} parent=1 // loop_pre_header
      _
    $region3: #{tpu_custom_call.1} parent=1 // loop_header
      %s15 = sphi 0, %s19
      %p16 = scmp.ge.s32.totalorder %s15, 4
      %s25 = sphi 0, %s27
      %s28 = sphi 0, %s25
      %s29 = sphi 0, %s28
      %s45 = sphi 0, %s29
      %s49 = sphi 0, %s49
      %s51 = sphi 0, %s49
      %s52 = sphi 0, %s51
      %s66 = sphi 0, %s52
      %s70 = sphi 0, %s70
      %s72 = sphi 0, %s70
      %s73 = sphi 0, %s72
      %s87 = sphi 0, %s73
      %s91 = sphi 0, %s91
      %s93 = sphi 0, %s91
      %s94 = sphi 0, %s93
      %s108 = sphi 0, %s94
      %s112 = sphi 0, %s112
      %s114 = sphi 0, %s112
      %s115 = sphi 0, %s114
      %s129 = sphi 0, %s115
      %s135 = sphi 0, %s137
      %s138 = sphi 0, %s135
      %s139 = sphi 0, %s138
      %s155 = sphi 0, %s139
    $region4: #{tpu_custom_call.1} parent=1 // loop_header_branch
      %18 = sbr.rel (%p16) target = $region8
    $region5: #{tpu_custom_call.1} parent=1 // loop_body
      %s20 = ssub.s32 %s15, 1
      %s21 = ssub.s32 %s15, 2
      %s22 = sadd.s32 %s15, 1
      %s23 = ssub.s32 %s15, %s22
      %p24 = scmp.eq.s32.totalorder %s23, 0
      %s26 = sadd.s32 %s25, 1
      %s27 = scalar_select %p24, %s25, %s26
      %p30 = pneg %p24
      %p31 = scmp.eq.s32.totalorder %s15, 1
      %p32 = por %p30, %p31
      %p33 = scmp.ne.s32.totalorder %s25, %s28
      %p34 = scmp.eq.s32.totalorder %s15, 0
      %p35 = por %p33, %p34
      %p36 = scmp.ne.s32.totalorder %s25, %s28
      %p37 = scmp.eq.s32.totalorder %s20, 1
      %p38 = por %p36, %p37
      %p39 = scmp.ne.s32.totalorder %s28, %s29
      %p40 = scmp.eq.s32.totalorder %s20, 0
      %p41 = por %p39, %p40
      %p42 = scmp.ne.s32.totalorder %s28, %s29
      %p43 = scmp.eq.s32.totalorder %s21, 1
      %p44 = por %p42, %p43
      %p46 = scmp.ne.s32.totalorder %s29, %s45
      %p47 = scmp.eq.s32.totalorder %s21, 0
      %p48 = por %p46, %p47
      %s50 = sadd.s32 %s49, 1
      %p53 = scmp.eq.s32.totalorder %s15, 1
      %p54 = scmp.ne.s32.totalorder %s49, %s51
      %p55 = scmp.eq.s32.totalorder %s15, 0
      %p56 = por %p54, %p55
      %p57 = scmp.ne.s32.totalorder %s49, %s51
      %p58 = scmp.eq.s32.totalorder %s20, 1
      %p59 = por %p57, %p58
      %p60 = scmp.ne.s32.totalorder %s51, %s52
      %p61 = scmp.eq.s32.totalorder %s20, 0
      %p62 = por %p60, %p61
      %p63 = scmp.ne.s32.totalorder %s51, %s52
      %p64 = scmp.eq.s32.totalorder %s21, 1
      %p65 = por %p63, %p64
      %p67 = scmp.ne.s32.totalorder %s52, %s66
      %p68 = scmp.eq.s32.totalorder %s21, 0
      %p69 = por %p67, %p68
      %s71 = sadd.s32 %s70, 1
      %p74 = scmp.eq.s32.totalorder %s15, 1
      %p75 = scmp.ne.s32.totalorder %s70, %s72
      %p76 = scmp.eq.s32.totalorder %s15, 0
      %p77 = por %p75, %p76
      %p78 = scmp.ne.s32.totalorder %s70, %s72
      %p79 = scmp.eq.s32.totalorder %s20, 1
      %p80 = por %p78, %p79
      %p81 = scmp.ne.s32.totalorder %s72, %s73
      %p82 = scmp.eq.s32.totalorder %s20, 0
      %p83 = por %p81, %p82
      %p84 = scmp.ne.s32.totalorder %s72, %s73
      %p85 = scmp.eq.s32.totalorder %s21, 1
      %p86 = por %p84, %p85
      %p88 = scmp.ne.s32.totalorder %s73, %s87
      %p89 = scmp.eq.s32.totalorder %s21, 0
      %p90 = por %p88, %p89
      %s92 = sadd.s32 %s91, 1
      %p95 = scmp.eq.s32.totalorder %s15, 1
      %p96 = scmp.ne.s32.totalorder %s91, %s93
      %p97 = scmp.eq.s32.totalorder %s15, 0
      %p98 = por %p96, %p97
      %p99 = scmp.ne.s32.totalorder %s91, %s93
      %p100 = scmp.eq.s32.totalorder %s20, 1
      %p101 = por %p99, %p100
      %p102 = scmp.ne.s32.totalorder %s93, %s94
      %p103 = scmp.eq.s32.totalorder %s20, 0
      %p104 = por %p102, %p103
      %p105 = scmp.ne.s32.totalorder %s93, %s94
      %p106 = scmp.eq.s32.totalorder %s21, 1
      %p107 = por %p105, %p106
      %p109 = scmp.ne.s32.totalorder %s94, %s108
      %p110 = scmp.eq.s32.totalorder %s21, 0
      %p111 = por %p109, %p110
      %s113 = sadd.s32 %s112, 1
      %p116 = scmp.eq.s32.totalorder %s15, 1
      %p117 = scmp.ne.s32.totalorder %s112, %s114
      %p118 = scmp.eq.s32.totalorder %s15, 0
      %p119 = por %p117, %p118
      %p120 = scmp.ne.s32.totalorder %s112, %s114
      %p121 = scmp.eq.s32.totalorder %s20, 1
      %p122 = por %p120, %p121
      %p123 = scmp.ne.s32.totalorder %s114, %s115
      %p124 = scmp.eq.s32.totalorder %s20, 0
      %p125 = por %p123, %p124
      %p126 = scmp.ne.s32.totalorder %s114, %s115
      %p127 = scmp.eq.s32.totalorder %s21, 1
      %p128 = por %p126, %p127
      %p130 = scmp.ne.s32.totalorder %s115, %s129
      %p131 = scmp.eq.s32.totalorder %s21, 0
      %p132 = por %p130, %p131
      %s133 = ssub.s32 %s15, %s22
      %p134 = scmp.eq.s32.totalorder %s133, 0
      %s136 = sadd.s32 %s135, 1
      %s137 = scalar_select %p134, %s135, %s136
      %p140 = pneg %p134
      %p141 = scmp.eq.s32.totalorder %s15, 1
      %p142 = por %p140, %p141
      %p143 = scmp.ne.s32.totalorder %s135, %s138
      %p144 = scmp.eq.s32.totalorder %s15, 0
      %p145 = por %p143, %p144
      %p146 = scmp.ne.s32.totalorder %s135, %s138
      %p147 = scmp.eq.s32.totalorder %s20, 1
      %p148 = por %p146, %p147
      %p149 = scmp.ne.s32.totalorder %s138, %s139
      %p150 = scmp.eq.s32.totalorder %s20, 0
      %p151 = por %p149, %p150
      %p152 = scmp.ne.s32.totalorder %s138, %s139
      %p153 = scmp.eq.s32.totalorder %s21, 1
      %p154 = por %p152, %p153
      %p156 = scmp.ne.s32.totalorder %s139, %s155
      %p157 = scmp.eq.s32.totalorder %s21, 0
      %p158 = por %p156, %p157
      %p159 = scmp.le.s32.totalorder 1, %s15
      %p160 = scmp.lt.s32.totalorder %s15, 3
      %p161 = pnand %p159, %p160
      %p162 = pneg %p161
      // Predicated region
      $region9: #{tpu_custom_call.1} parent=5 // pred_check
        _
      $region10: #{tpu_custom_call.1} parent=5 // pred_check_branch
        %164 = sbr.rel (%p161) target = $region12
      $region11: #{tpu_custom_call.1} parent=5 // pred_region
        %s165 = ssub.s32 %s15, 1
        // Predicated region
        $region13: #{tpu_custom_call.1} parent=11 // pred_check
          %p166 = pneg %p62
        $region14: #{tpu_custom_call.1} parent=11 // pred_check_branch
          %168 = sbr.rel (%p166) target = $region16
        $region15: #{tpu_custom_call.1} parent=11 // pred_region
          _
        $region16: #{tpu_custom_call.1} parent=11 // pred_fallthru
          _
        // Predicated region
        $region17: #{tpu_custom_call.1} parent=11 // pred_check
          %p169 = pneg %p83
        $region18: #{tpu_custom_call.1} parent=11 // pred_check_branch
          %171 = sbr.rel (%p169) target = $region20
        $region19: #{tpu_custom_call.1} parent=11 // pred_region
          _
        $region20: #{tpu_custom_call.1} parent=11 // pred_fallthru
          _
        // Predicated region
        $region21: #{tpu_custom_call.1} parent=11 // pred_check
          %p172 = pneg %p104
        $region22: #{tpu_custom_call.1} parent=11 // pred_check_branch
          %174 = sbr.rel (%p172) target = $region24
        $region23: #{tpu_custom_call.1} parent=11 // pred_region
          %s176 = ssub.s32 18432, 18432
          %177 = vsyncadd [#allocation4], %s176
          %s178 = sshll.u32 [#allocation3], 4
          %s179 = int_to_ptr.vmem [resolvable:$true] %s178
          %184 = dma.hbm_to_vmem [thread:$0]  %s3, 18432, %s179, [#allocation4], 128, 128, 8
        $region24: #{tpu_custom_call.1} parent=11 // pred_fallthru
          _
        // Predicated region
        $region25: #{tpu_custom_call.1} parent=11 // pred_check
          %p185 = pneg %p125
        $region26: #{tpu_custom_call.1} parent=11 // pred_check_branch
          %187 = sbr.rel (%p185) target = $region28
        $region27: #{tpu_custom_call.1} parent=11 // pred_region
          _
        $region28: #{tpu_custom_call.1} parent=11 // pred_fallthru
          _
      $region12: #{tpu_custom_call.1} parent=5 // pred_fallthru
        _
      %p188 = scmp.lt.s32.totalorder %s15, 2
      // Predicated region
      $region29: #{tpu_custom_call.1} parent=5 // pred_check
        %p189 = pneg %p188
      $region30: #{tpu_custom_call.1} parent=5 // pred_check_branch
        %191 = sbr.rel (%p189) target = $region32
      $region31: #{tpu_custom_call.1} parent=5 // pred_region
        // Predicated region
        $region33: #{tpu_custom_call.1} parent=31 // pred_check
          %p192 = pneg %p35
        $region34: #{tpu_custom_call.1} parent=31 // pred_check_branch
          %194 = sbr.rel (%p192) target = $region36
        $region35: #{tpu_custom_call.1} parent=31 // pred_region
          %p195 = scmp.lt.s32.totalorder %s15, 1
          %s196 = scalar_select %p195, %s15, 1
          %s197 = smul.addr %s196, 54
          %s198 = smul.addr %s197, 8
          %s199 = scalar_lea.vmem %s0, %s198
        $region36: #{tpu_custom_call.1} parent=31 // pred_fallthru
          _
      $region32: #{tpu_custom_call.1} parent=5 // pred_fallthru
        _
      %p200 = scmp.le.s32.totalorder 1, %s15
      %p201 = scmp.lt.s32.totalorder %s15, 3
      %p202 = pnand %p200, %p201
      %p203 = pneg %p202
      // Predicated region
      $region37: #{tpu_custom_call.1} parent=5 // pred_check
        _
      $region38: #{tpu_custom_call.1} parent=5 // pred_check_branch
        %205 = sbr.rel (%p202) target = $region40
      $region39: #{tpu_custom_call.1} parent=5 // pred_region
        %s206 = ssub.s32 %s15, 1
        // Predicated region
        $region41: #{tpu_custom_call.1} parent=39 // pred_check
          %p207 = pneg %p104
        $region42: #{tpu_custom_call.1} parent=39 // pred_check_branch
          %209 = sbr.rel (%p207) target = $region44
        $region43: #{tpu_custom_call.1} parent=39 // pred_region
          %210 = dma.done [#allocation4], 18432
        $region44: #{tpu_custom_call.1} parent=39 // pred_fallthru
          _
        %p211 = scmp.lt.s32.totalorder %s20, 1
        %s212 = scalar_select %p211, %s20, 1
        %s213 = smul.addr %s212, 54
        %s214 = smul.addr %s213, 8
        %s215 = scalar_lea.vmem %s0, %s214
        %p216 = pneg %p41
        %p217 = pneg %p38
        %p218 = pneg %p62
        %p219 = pneg %p59
        %p220 = pneg %p83
        %p221 = pneg %p80
        %p222 = pneg %p104
        %p223 = pneg %p101
        %p224 = pneg %p125
        %p225 = pneg %p122
        %p226 = pneg %p151
        %p227 = pneg %p148
        %s228 = sand.u32 %s138, 1
        %s229 = scalar_lea.sflag [#allocation5], %s228
        %s230 = sand.u32 %s138, 1
        %s231 = smul.addr %s230, 256
        %s232 = scalar_lea.vmem [#allocation6], %s231
        %p233 = scmp.lt.s32.totalorder %s20, 1
        %s234 = scalar_select %p233, %s20, 1
        %s235 = smul.addr %s234, 54
        %s236 = smul.addr %s235, 8
        %s237 = scalar_lea.vmem %s0, %s236
        %v238 = vld [vmem:[%s237] sm:$0xff]
        %v239 = vld [vmem:[%s237 + $0x8] sm:$0xff]
        %v240 = vld [vmem:[%s237 + $0x10] sm:$0x3]
        %v241 = vld [vmem:[%s237 + $0x18] sm:$0xff]
        %v242 = vld [vmem:[%s237 + $0x20] sm:$0xff]
        %v243 = vld [vmem:[%s237 + $0x28] sm:$0x3]
        %v244 = vld [vmem:[%s237 + $0x30] sm:$0xff]
        %v245 = vld [vmem:[%s237 + $0x38] sm:$0xff]
        %v246 = vld [vmem:[%s237 + $0x40] sm:$0x3]
        %v247 = vld [vmem:[%s237 + $0x48] sm:$0xff]
        %v248 = vld [vmem:[%s237 + $0x50] sm:$0xff]
        %v249 = vld [vmem:[%s237 + $0x58] sm:$0x3]
        %v250 = vld [vmem:[%s237 + $0x60] sm:$0xff]
        %v251 = vld [vmem:[%s237 + $0x68] sm:$0xff]
        %v252 = vld [vmem:[%s237 + $0x70] sm:$0x3]
        %v253 = vld [vmem:[%s237 + $0x78] sm:$0xff]
        %v254 = vld [vmem:[%s237 + $0x80] sm:$0xff]
        %v255 = vld [vmem:[%s237 + $0x88] sm:$0x3]
        %v256 = vld [vmem:[%s237 + $0x90] sm:$0xff]
        %v257 = vld [vmem:[%s237 + $0x98] sm:$0xff]
        %v258 = vld [vmem:[%s237 + $0xa0] sm:$0x3]
        %v259 = vld [vmem:[%s237 + $0xa8] sm:$0xff]
        %v260 = vld [vmem:[%s237 + $0xb0] sm:$0xff]
        %v261 = vld [vmem:[%s237 + $0xb8] sm:$0x3]
        %v262 = vld [vmem:[%s237 + $0xc0] sm:$0xff]
        %v263 = vld [vmem:[%s237 + $0xc8] sm:$0xff]
        %v264 = vld [vmem:[%s237 + $0xd0] sm:$0x3]
        %v265 = vld [vmem:[%s237 + $0xd8] sm:$0xff]
        %v266 = vld [vmem:[%s237 + $0xe0] sm:$0xff]
        %v267 = vld [vmem:[%s237 + $0xe8] sm:$0x3]
        %v268 = vld [vmem:[%s237 + $0xf0] sm:$0xff]
        %v269 = vld [vmem:[%s237 + $0xf8] sm:$0xff]
        %v270 = vld [vmem:[%s237 + $0x100] sm:$0x3]
        %v271 = vld [vmem:[%s237 + $0x108] sm:$0xff]
        %v272 = vld [vmem:[%s237 + $0x110] sm:$0xff]
        %v273 = vld [vmem:[%s237 + $0x118] sm:$0x3]
        %v274 = vld [vmem:[%s237 + $0x120] sm:$0xff]
        %v275 = vld [vmem:[%s237 + $0x128] sm:$0xff]
        %v276 = vld [vmem:[%s237 + $0x130] sm:$0x3]
        %v277 = vld [vmem:[%s237 + $0x138] sm:$0xff]
        %v278 = vld [vmem:[%s237 + $0x140] sm:$0xff]
        %v279 = vld [vmem:[%s237 + $0x148] sm:$0x3]
        %v280 = vld [vmem:[%s237 + $0x150] sm:$0xff]
        %v281 = vld [vmem:[%s237 + $0x158] sm:$0xff]
        %v282 = vld [vmem:[%s237 + $0x160] sm:$0x3]
        %v283 = vld [vmem:[%s237 + $0x168] sm:$0xff]
        %v284 = vld [vmem:[%s237 + $0x170] sm:$0xff]
        %v285 = vld [vmem:[%s237 + $0x178] sm:$0x3]
        %v286 = vld [vmem:[%s237 + $0x180] sm:$0xff]
        %v287 = vld [vmem:[%s237 + $0x188] sm:$0xff]
        %v288 = vld [vmem:[%s237 + $0x190] sm:$0x3]
        %v289 = vld [vmem:[%s237 + $0x198] sm:$0xff]
        %v290 = vld [vmem:[%s237 + $0x1a0] sm:$0xff]
        %v291 = vld [vmem:[%s237 + $0x1a8] sm:$0x3]
        %vm340 = vcmask 1046528
        %v341 = vrot.slane %v238, 1
        %v342 = vrot.slane %v239, 1
        %v343 = vsel %vm340, %v341, %v342
        %v344 = vrot.slane %v240, 1
        %v345 = vsel %vm340, %v342, %v344
        %v346 = vrot.slane %v241, 1
        %v347 = vrot.slane %v242, 1
        %v348 = vsel %vm340, %v346, %v347
        %v349 = vrot.slane %v243, 1
        %v350 = vsel %vm340, %v347, %v349
        %v351 = vrot.slane %v244, 1
        %v352 = vrot.slane %v245, 1
        %v353 = vsel %vm340, %v351, %v352
        %v354 = vrot.slane %v246, 1
        %v355 = vsel %vm340, %v352, %v354
        %v356 = vrot.slane %v247, 1
        %v357 = vrot.slane %v248, 1
        %v358 = vsel %vm340, %v356, %v357
        %v359 = vrot.slane %v249, 1
        %v360 = vsel %vm340, %v357, %v359
        %v361 = vrot.slane %v250, 1
        %v362 = vrot.slane %v251, 1
        %v363 = vsel %vm340, %v361, %v362
        %v364 = vrot.slane %v252, 1
        %v365 = vsel %vm340, %v362, %v364
        %v366 = vrot.slane %v253, 1
        %v367 = vrot.slane %v254, 1
        %v368 = vsel %vm340, %v366, %v367
        %v369 = vrot.slane %v255, 1
        %v370 = vsel %vm340, %v367, %v369
        %v371 = vrot.slane %v256, 1
        %v372 = vrot.slane %v257, 1
        %v373 = vsel %vm340, %v371, %v372
        %v374 = vrot.slane %v258, 1
        %v375 = vsel %vm340, %v372, %v374
        %v376 = vrot.slane %v259, 1
        %v377 = vrot.slane %v260, 1
        %v378 = vsel %vm340, %v376, %v377
        %v379 = vrot.slane %v261, 1
        %v380 = vsel %vm340, %v377, %v379
        %v381 = vrot.slane %v262, 1
        %v382 = vrot.slane %v263, 1
        %v383 = vsel %vm340, %v381, %v382
        %v384 = vrot.slane %v264, 1
        %v385 = vsel %vm340, %v382, %v384
        %v386 = vrot.slane %v265, 1
        %v387 = vrot.slane %v266, 1
        %v388 = vsel %vm340, %v386, %v387
        %v389 = vrot.slane %v267, 1
        %v390 = vsel %vm340, %v387, %v389
        %v391 = vrot.slane %v268, 1
        %v392 = vrot.slane %v269, 1
        %v393 = vsel %vm340, %v391, %v392
        %v394 = vrot.slane %v270, 1
        %v395 = vsel %vm340, %v392, %v394
        %v396 = vrot.slane %v271, 1
        %v397 = vrot.slane %v272, 1
        %v398 = vsel %vm340, %v396, %v397
        %v399 = vrot.slane %v273, 1
        %v400 = vsel %vm340, %v397, %v399
        %v401 = vrot.slane %v274, 1
        %v402 = vrot.slane %v275, 1
        %v403 = vsel %vm340, %v401, %v402
        %v404 = vrot.slane %v276, 1
        %v405 = vsel %vm340, %v402, %v404
        %v406 = vrot.slane %v277, 1
        %v407 = vrot.slane %v278, 1
        %v408 = vsel %vm340, %v406, %v407
        %v409 = vrot.slane %v279, 1
        %v410 = vsel %vm340, %v407, %v409
        %v411 = vrot.slane %v280, 1
        %v412 = vrot.slane %v281, 1
        %v413 = vsel %vm340, %v411, %v412
        %v414 = vrot.slane %v282, 1
        %v415 = vsel %vm340, %v412, %v414
        %v416 = vrot.slane %v283, 1
        %v417 = vrot.slane %v284, 1
        %v418 = vsel %vm340, %v416, %v417
        %v419 = vrot.slane %v285, 1
        %v420 = vsel %vm340, %v417, %v419
        %vm453 = vcmask 1045504
        %v454 = vrot.slane %v238, 2
        %v455 = vrot.slane %v239, 2
        %v456 = vsel %vm453, %v454, %v455
        %v457 = vrot.slane %v240, 2
        %v458 = vsel %vm453, %v455, %v457
        %v459 = vrot.slane %v241, 2
        %v460 = vrot.slane %v242, 2
        %v461 = vsel %vm453, %v459, %v460
        %v462 = vrot.slane %v243, 2
        %v463 = vsel %vm453, %v460, %v462
        %v464 = vrot.slane %v244, 2
        %v465 = vrot.slane %v245, 2
        %v466 = vsel %vm453, %v464, %v465
        %v467 = vrot.slane %v246, 2
        %v468 = vsel %vm453, %v465, %v467
        %v469 = vrot.slane %v247, 2
        %v470 = vrot.slane %v248, 2
        %v471 = vsel %vm453, %v469, %v470
        %v472 = vrot.slane %v249, 2
        %v473 = vsel %vm453, %v470, %v472
        %v474 = vrot.slane %v250, 2
        %v475 = vrot.slane %v251, 2
        %v476 = vsel %vm453, %v474, %v475
        %v477 = vrot.slane %v252, 2
        %v478 = vsel %vm453, %v475, %v477
        %v479 = vrot.slane %v253, 2
        %v480 = vrot.slane %v254, 2
        %v481 = vsel %vm453, %v479, %v480
        %v482 = vrot.slane %v255, 2
        %v483 = vsel %vm453, %v480, %v482
        %v484 = vrot.slane %v256, 2
        %v485 = vrot.slane %v257, 2
        %v486 = vsel %vm453, %v484, %v485
        %v487 = vrot.slane %v258, 2
        %v488 = vsel %vm453, %v485, %v487
        %v489 = vrot.slane %v259, 2
        %v490 = vrot.slane %v260, 2
        %v491 = vsel %vm453, %v489, %v490
        %v492 = vrot.slane %v261, 2
        %v493 = vsel %vm453, %v490, %v492
        %v494 = vrot.slane %v262, 2
        %v495 = vrot.slane %v263, 2
        %v496 = vsel %vm453, %v494, %v495
        %v497 = vrot.slane %v264, 2
        %v498 = vsel %vm453, %v495, %v497
        %v499 = vrot.slane %v265, 2
        %v500 = vrot.slane %v266, 2
        %v501 = vsel %vm453, %v499, %v500
        %v502 = vrot.slane %v267, 2
        %v503 = vsel %vm453, %v500, %v502
        %v504 = vrot.slane %v268, 2
        %v505 = vrot.slane %v269, 2
        %v506 = vsel %vm453, %v504, %v505
        %v507 = vrot.slane %v270, 2
        %v508 = vsel %vm453, %v505, %v507
        %v509 = vrot.slane %v271, 2
        %v510 = vrot.slane %v272, 2
        %v511 = vsel %vm453, %v509, %v510
        %v512 = vrot.slane %v273, 2
        %v513 = vsel %vm453, %v510, %v512
        %v514 = vrot.slane %v274, 2
        %v515 = vrot.slane %v275, 2
        %v516 = vsel %vm453, %v514, %v515
        %v517 = vrot.slane %v276, 2
        %v518 = vsel %vm453, %v515, %v517
        %v519 = vrot.slane %v277, 2
        %v520 = vrot.slane %v278, 2
        %v521 = vsel %vm453, %v519, %v520
        %v522 = vrot.slane %v279, 2
        %v523 = vsel %vm453, %v520, %v522
        %v524 = vrot.slane %v280, 2
        %v525 = vrot.slane %v281, 2
        %v526 = vsel %vm453, %v524, %v525
        %v527 = vrot.slane %v282, 2
        %v528 = vsel %vm453, %v525, %v527
        %v529 = vrot.slane %v283, 2
        %v530 = vrot.slane %v284, 2
        %v531 = vsel %vm453, %v529, %v530
        %v532 = vrot.slane %v285, 2
        %v533 = vsel %vm453, %v530, %v532
        %v569 = vrot.slane %v286, 1
        %v570 = vrot.slane %v287, 1
        %v571 = vsel %vm340, %v569, %v570
        %v572 = vrot.slane %v288, 1
        %v573 = vsel %vm340, %v570, %v572
        %v576 = vrot.slane %v286, 2
        %v577 = vrot.slane %v287, 2
        %v578 = vsel %vm453, %v576, %v577
        %v579 = vrot.slane %v288, 2
        %v580 = vsel %vm453, %v577, %v579
        %v586 = vrot.slane %v289, 1
        %v587 = vrot.slane %v290, 1
        %v588 = vsel %vm340, %v586, %v587
        %v589 = vrot.slane %v291, 1
        %v590 = vsel %vm340, %v587, %v589
        %v593 = vrot.slane %v289, 2
        %v594 = vrot.slane %v290, 2
        %v595 = vsel %vm453, %v593, %v594
        %v596 = vrot.slane %v291, 2
        %v597 = vsel %vm453, %v594, %v596
        %v600 = vld [vmem:[%s1] sm:$0xff]
        %v601 = vld [vmem:[%s1 + $0x8] sm:$0xff]
        %v602 = vld [vmem:[%s1 + $0x10] sm:$0xff]
        %v603 = vld [vmem:[%s1 + $0x18] sm:$0xff]
        %v604 = vld [vmem:[%s1 + $0x20] sm:$0xff]
        %v605 = vld [vmem:[%s1 + $0x28] sm:$0xff]
        %v606 = vld [vmem:[%s1 + $0x30] sm:$0xff]
        %v607 = vld [vmem:[%s1 + $0x38] sm:$0xff]
        %v608 = vld [vmem:[%s1 + $0x40] sm:$0xff]
        %v609 = vld [vmem:[%s1 + $0x48] sm:$0xff]
        %v610 = vld [vmem:[%s1 + $0x50] sm:$0xff]
        %v611 = vld [vmem:[%s1 + $0x58] sm:$0xff]
        %v612 = vld [vmem:[%s1 + $0x60] sm:$0xff]
        %v613 = vld [vmem:[%s1 + $0x68] sm:$0xff]
        %v614 = vld [vmem:[%s1 + $0x70] sm:$0xff]
        %v615 = vld [vmem:[%s1 + $0x78] sm:$0xff]
        %v616 = vld [vmem:[%s1 + $0x80] sm:$0xff]
        %v617 = vld [vmem:[%s1 + $0x88] sm:$0xff]
        %v618 = vld [vmem:[%s1 + $0x90] sm:$0xff]
        %v619 = vld [vmem:[%s1 + $0x98] sm:$0xff]
        %v620 = vld [vmem:[%s1 + $0xa0] sm:$0xff]
        %v621 = vld [vmem:[%s1 + $0xa8] sm:$0xff]
        %v622 = vld [vmem:[%s1 + $0xb0] sm:$0xff]
        %v623 = vld [vmem:[%s1 + $0xb8] sm:$0xff]
        %v624 = vld [vmem:[%s1 + $0xc0] sm:$0xff]
        %v625 = vld [vmem:[%s1 + $0xc8] sm:$0xff]
        %v626 = vld [vmem:[%s1 + $0xd0] sm:$0xff]
        %v627 = vld [vmem:[%s1 + $0xd8] sm:$0xff]
        %v628 = vld [vmem:[%s1 + $0xe0] sm:$0xff]
        %v629 = vld [vmem:[%s1 + $0xe8] sm:$0xff]
        %v630 = vld [vmem:[%s1 + $0xf0] sm:$0xff]
        %v631 = vld [vmem:[%s1 + $0xf8] sm:$0xff]
        %v632 = vld [vmem:[%s1 + $0x100] sm:$0xff]
        %v633 = vld [vmem:[%s1 + $0x108] sm:$0xff]
        %v634 = vld [vmem:[%s1 + $0x110] sm:$0xff]
        %v635 = vld [vmem:[%s1 + $0x118] sm:$0xff]
        %v636 = vld [vmem:[%s1 + $0x120] sm:$0xff]
        %v637 = vld [vmem:[%s1 + $0x128] sm:$0xff]
        %v638 = vld [vmem:[%s1 + $0x130] sm:$0xff]
        %v639 = vld [vmem:[%s1 + $0x138] sm:$0xff]
        %v640 = vld [vmem:[%s1 + $0x140] sm:$0xff]
        %v641 = vld [vmem:[%s1 + $0x148] sm:$0xff]
        %v642 = vld [vmem:[%s1 + $0x150] sm:$0xff]
        %v643 = vld [vmem:[%s1 + $0x158] sm:$0xff]
        %v644 = vld [vmem:[%s1 + $0x160] sm:$0xff]
        %v645 = vld [vmem:[%s1 + $0x168] sm:$0xff]
        %v646 = vld [vmem:[%s1 + $0x170] sm:$0xff]
        %v647 = vld [vmem:[%s1 + $0x178] sm:$0xff]
        %v648 = vld [vmem:[%s1 + $0x180] sm:$0xff]
        %v649 = vld [vmem:[%s1 + $0x188] sm:$0xff]
        %v650 = vld [vmem:[%s1 + $0x190] sm:$0xff]
        %v651 = vld [vmem:[%s1 + $0x198] sm:$0xff]
        %v652 = vld [vmem:[%s1 + $0x1a0] sm:$0xff]
        %v653 = vld [vmem:[%s1 + $0x1a8] sm:$0xff]
        %v654 = vld [vmem:[%s1 + $0x1b0] sm:$0xff]
        %v655 = vld [vmem:[%s1 + $0x1b8] sm:$0xff]
        %v656 = vld [vmem:[%s1 + $0x1c0] sm:$0xff]
        %v657 = vld [vmem:[%s1 + $0x1c8] sm:$0xff]
        %v658 = vld [vmem:[%s1 + $0x1d0] sm:$0xff]
        %v659 = vld [vmem:[%s1 + $0x1d8] sm:$0xff]
        %v660 = vld [vmem:[%s1 + $0x1e0] sm:$0xff]
        %v661 = vld [vmem:[%s1 + $0x1e8] sm:$0xff]
        %v662 = vld [vmem:[%s1 + $0x1f0] sm:$0xff]
        %v663 = vld [vmem:[%s1 + $0x1f8] sm:$0xff]
        %v664 = vld [vmem:[%s1 + $0x200] sm:$0xff]
        %v665 = vld [vmem:[%s1 + $0x208] sm:$0xff]
        %v666 = vld [vmem:[%s1 + $0x210] sm:$0xff]
        %v667 = vld [vmem:[%s1 + $0x218] sm:$0xff]
        %v668 = vld [vmem:[%s1 + $0x220] sm:$0xff]
        %v669 = vld [vmem:[%s1 + $0x228] sm:$0xff]
        %v670 = vld [vmem:[%s1 + $0x230] sm:$0xff]
        %v671 = vld [vmem:[%s1 + $0x238] sm:$0xff]
        %v672 = vld [vmem:[%s1 + $0x240] sm:$0xff]
        %v673 = vld [vmem:[%s1 + $0x248] sm:$0xff]
        %v674 = vld [vmem:[%s1 + $0x250] sm:$0xff]
        %v675 = vld [vmem:[%s1 + $0x258] sm:$0xff]
        %v676 = vld [vmem:[%s1 + $0x260] sm:$0xff]
        %v677 = vld [vmem:[%s1 + $0x268] sm:$0xff]
        %v678 = vld [vmem:[%s1 + $0x270] sm:$0xff]
        %v679 = vld [vmem:[%s1 + $0x278] sm:$0xff]
        %v680 = vld [vmem:[%s1 + $0x280] sm:$0xff]
        %v681 = vld [vmem:[%s1 + $0x288] sm:$0xff]
        %v682 = vld [vmem:[%s1 + $0x290] sm:$0xff]
        %v683 = vld [vmem:[%s1 + $0x298] sm:$0xff]
        %v684 = vld [vmem:[%s1 + $0x2a0] sm:$0xff]
        %v685 = vld [vmem:[%s1 + $0x2a8] sm:$0xff]
        %v686 = vld [vmem:[%s1 + $0x2b0] sm:$0xff]
        %v687 = vld [vmem:[%s1 + $0x2b8] sm:$0xff]
        %v688 = vld [vmem:[%s1 + $0x2c0] sm:$0xff]
        %v689 = vld [vmem:[%s1 + $0x2c8] sm:$0xff]
        %v690 = vld [vmem:[%s1 + $0x2d0] sm:$0xff]
        %v691 = vld [vmem:[%s1 + $0x2d8] sm:$0xff]
        %v692 = vld [vmem:[%s1 + $0x2e0] sm:$0xff]
        %v693 = vld [vmem:[%s1 + $0x2e8] sm:$0xff]
        %v694 = vld [vmem:[%s1 + $0x2f0] sm:$0xff]
        %v695 = vld [vmem:[%s1 + $0x2f8] sm:$0xff]
        %v696 = vld [vmem:[%s1 + $0x300] sm:$0xff]
        %v697 = vld [vmem:[%s1 + $0x308] sm:$0xff]
        %v698 = vld [vmem:[%s1 + $0x310] sm:$0xff]
        %v699 = vld [vmem:[%s1 + $0x318] sm:$0xff]
        %v700 = vld [vmem:[%s1 + $0x320] sm:$0xff]
        %v701 = vld [vmem:[%s1 + $0x328] sm:$0xff]
        %v702 = vld [vmem:[%s1 + $0x330] sm:$0xff]
        %v703 = vld [vmem:[%s1 + $0x338] sm:$0xff]
        %v704 = vld [vmem:[%s1 + $0x340] sm:$0xff]
        %v705 = vld [vmem:[%s1 + $0x348] sm:$0xff]
        %v706 = vld [vmem:[%s1 + $0x350] sm:$0xff]
        %v707 = vld [vmem:[%s1 + $0x358] sm:$0xff]
        %v708 = vld [vmem:[%s1 + $0x360] sm:$0xff]
        %v709 = vld [vmem:[%s1 + $0x368] sm:$0xff]
        %v710 = vld [vmem:[%s1 + $0x370] sm:$0xff]
        %v711 = vld [vmem:[%s1 + $0x378] sm:$0xff]
        %v712 = vld [vmem:[%s1 + $0x380] sm:$0xff]
        %v713 = vld [vmem:[%s1 + $0x388] sm:$0xff]
        %v714 = vld [vmem:[%s1 + $0x390] sm:$0xff]
        %v715 = vld [vmem:[%s1 + $0x398] sm:$0xff]
        %v716 = vld [vmem:[%s1 + $0x3a0] sm:$0xff]
        %v717 = vld [vmem:[%s1 + $0x3a8] sm:$0xff]
        %v718 = vld [vmem:[%s1 + $0x3b0] sm:$0xff]
        %v719 = vld [vmem:[%s1 + $0x3b8] sm:$0xff]
        %v720 = vld [vmem:[%s1 + $0x3c0] sm:$0xff]
        %v721 = vld [vmem:[%s1 + $0x3c8] sm:$0xff]
        %v722 = vld [vmem:[%s1 + $0x3d0] sm:$0xff]
        %v723 = vld [vmem:[%s1 + $0x3d8] sm:$0xff]
        %v724 = vld [vmem:[%s1 + $0x3e0] sm:$0xff]
        %v725 = vld [vmem:[%s1 + $0x3e8] sm:$0xff]
        %v726 = vld [vmem:[%s1 + $0x3f0] sm:$0xff]
        %v727 = vld [vmem:[%s1 + $0x3f8] sm:$0xff]
        %v728 = vld [vmem:[%s1 + $0x400] sm:$0xff]
        %v729 = vld [vmem:[%s1 + $0x408] sm:$0xff]
        %v730 = vld [vmem:[%s1 + $0x410] sm:$0xff]
        %v731 = vld [vmem:[%s1 + $0x418] sm:$0xff]
        %v732 = vld [vmem:[%s1 + $0x420] sm:$0xff]
        %v733 = vld [vmem:[%s1 + $0x428] sm:$0xff]
        %v734 = vld [vmem:[%s1 + $0x430] sm:$0xff]
        %v735 = vld [vmem:[%s1 + $0x438] sm:$0xff]
        %v736 = vld [vmem:[%s1 + $0x440] sm:$0xff]
        %v737 = vld [vmem:[%s1 + $0x448] sm:$0xff]
        %v738 = vld [vmem:[%s1 + $0x450] sm:$0xff]
        %v739 = vld [vmem:[%s1 + $0x458] sm:$0xff]
        %v740 = vld [vmem:[%s1 + $0x460] sm:$0xff]
        %v741 = vld [vmem:[%s1 + $0x468] sm:$0xff]
        %v742 = vld [vmem:[%s1 + $0x470] sm:$0xff]
        %v743 = vld [vmem:[%s1 + $0x478] sm:$0xff]
        %v744 = vld [vmem:[%s2] sm:$0x1]
        %v746 = vlaneseq
        %v747 = vshrl.u32 %v746, 7
        %v748 = vsub.s32 0, %v747
        %v749 = vrot.slane %v744, %v748
        %751 = vmatprep.subr.mxu0 0.0
        %752 = vmatpush1.msra.mxu0 %v600
        %753 = vmatprep.subr.mxu0 0.0
        %754 = vmatpush1.msra.mxu0 %v601
        %755 = vmatprep.subr.mxu0 0.0
        %756 = vmatpush1.msra.mxu0 %v602
        %757 = vmatprep.subr.mxu0 0.0
        %758 = vmatpush1.msra.mxu0 %v603
        %759 = vmatprep.subr.mxu0 0.0
        %760 = vmatpush1.msra.mxu0 %v604
        %761 = vmatprep.subr.mxu0 0.0
        %762 = vmatpush1.msra.mxu0 %v605
        %763 = vmatprep.subr.mxu0 0.0
        %764 = vmatpush1.msra.mxu0 %v606
        %765 = vmatprep.subr.mxu0 0.0
        %766 = vmatpush1.msra.mxu0 %v607
        %767 = vmatprep.subr.mxu0 0.0
        %768 = vmatpush1.msra.mxu0 %v608
        %769 = vmatprep.subr.mxu0 0.0
        %770 = vmatpush1.msra.mxu0 %v609
        %771 = vmatprep.subr.mxu0 0.0
        %772 = vmatpush1.msra.mxu0 %v610
        %773 = vmatprep.subr.mxu0 0.0
        %774 = vmatpush1.msra.mxu0 %v611
        %775 = vmatprep.subr.mxu0 0.0
        %776 = vmatpush1.msra.mxu0 %v612
        %777 = vmatprep.subr.mxu0 0.0
        %778 = vmatpush1.msra.mxu0 %v613
        %779 = vmatprep.subr.mxu0 0.0
        %780 = vmatpush1.msra.mxu0 %v614
        %781 = vmatprep.subr.mxu0 0.0
        %782 = vmatpush1.msra.mxu0 %v615
        %783 = vmatprep.subr.mxu0 0.0
        %784 = vmatpush1.msra.mxu0 %v616
        %785 = vmatprep.subr.mxu0 0.0
        %786 = vmatpush1.msra.mxu0 %v617
        %787 = vmatprep.subr.mxu0 0.0
        %788 = vmatpush1.msra.mxu0 %v618
        %789 = vmatprep.subr.mxu0 0.0
        %790 = vmatpush1.msra.mxu0 %v619
        %791 = vmatprep.subr.mxu0 0.0
        %792 = vmatpush1.msra.mxu0 %v620
        %793 = vmatprep.subr.mxu0 0.0
        %794 = vmatpush1.msra.mxu0 %v621
        %795 = vmatprep.subr.mxu0 0.0
        %796 = vmatpush1.msra.mxu0 %v622
        %797 = vmatprep.subr.mxu0 0.0
        %798 = vmatpush1.msra.mxu0 %v623
        %799 = vmatprep.subr.mxu0 0.0
        %800 = vmatpush1.msra.mxu0 %v624
        %801 = vmatprep.subr.mxu0 0.0
        %802 = vmatpush1.msra.mxu0 %v625
        %803 = vmatprep.subr.mxu0 0.0
        %804 = vmatpush1.msra.mxu0 %v626
        %805 = vmatprep.subr.mxu0 0.0
        %806 = vmatpush1.msra.mxu0 %v627
        %807 = vmatprep.subr.mxu0 0.0
        %808 = vmatpush1.msra.mxu0 %v628
        %809 = vmatprep.subr.mxu0 0.0
        %810 = vmatpush1.msra.mxu0 %v629
        %811 = vmatprep.subr.mxu0 0.0
        %812 = vmatpush1.msra.mxu0 %v630
        %813 = vmatprep.subr.mxu0 0.0
        %814 = vmatpush1.msra.mxu0 %v631
        %815 = vmatprep.mubr.f32.mxu0 %v343
        %816 = vmatmul.mubr.f32.gmra.mrb[0].mxu0 %v238
        %v817 = vpop.f32.mrb[0].mxu0
        %v818 = vadd.f32 %v749, %v817
        %v819 = vpop.f32.mrb[0].mxu0
        %820 = vmatprep.mubr.f32.mxu0 %v345
        %821 = vmatmul.mubr.f32.gmra.mrb[0].mxu0 %v239
        %v822 = vpop.f32.mrb[0].mxu0
        %v823 = vadd.f32 %v749, %v822
        %v824 = vpop.f32.mrb[0].mxu0
        %825 = vmatprep.mubr.f32.mxu0 %v348
        %826 = vmatmul.mubr.f32.gmra.mrb[0].mxu0 %v241
        %v827 = vpop.f32.mrb[0].mxu0
        %v828 = vadd.f32 %v749, %v827
        %v829 = vpop.f32.mrb[0].mxu0
        %830 = vmatprep.mubr.f32.mxu0 %v350
        %831 = vmatmul.mubr.f32.gmra.mrb[0].mxu0 %v242
        %v832 = vpop.f32.mrb[0].mxu0
        %v833 = vadd.f32 %v749, %v832
        %v834 = vpop.f32.mrb[0].mxu0
        %835 = vmatprep.mubr.f32.mxu0 %v353
        %836 = vmatmul.mubr.f32.gmra.mrb[0].mxu0 %v244
        %v837 = vpop.f32.mrb[0].mxu0
        %v838 = vadd.f32 %v749, %v837
        %v839 = vpop.f32.mrb[0].mxu0
        %840 = vmatprep.mubr.f32.mxu0 %v355
        %841 = vmatmul.mubr.f32.gmra.mrb[0].mxu0 %v245
        %v842 = vpop.f32.mrb[0].mxu0
        %v843 = vadd.f32 %v749, %v842
        %v844 = vpop.f32.mrb[0].mxu0
        %845 = vmatprep.mubr.f32.mxu0 %v358
        %846 = vmatmul.mubr.f32.gmra.mrb[0].mxu0 %v247
        %v847 = vpop.f32.mrb[0].mxu0
        %v848 = vadd.f32 %v749, %v847
        %v849 = vpop.f32.mrb[0].mxu0
        %850 = vmatprep.mubr.f32.mxu0 %v360
        %851 = vmatmul.mubr.f32.gmra.mrb[0].mxu0 %v248
        %v852 = vpop.f32.mrb[0].mxu0
        %v853 = vadd.f32 %v749, %v852
        %v854 = vpop.f32.mrb[0].mxu0
        %855 = vmatprep.mubr.f32.mxu0 %v363
        %856 = vmatmul.mubr.f32.gmra.mrb[0].mxu0 %v250
        %v857 = vpop.f32.mrb[0].mxu0
        %v858 = vadd.f32 %v749, %v857
        %v859 = vpop.f32.mrb[0].mxu0
        %860 = vmatprep.mubr.f32.mxu0 %v365
        %861 = vmatmul.mubr.f32.gmra.mrb[0].mxu0 %v251
        %v862 = vpop.f32.mrb[0].mxu0
        %v863 = vadd.f32 %v749, %v862
        %v864 = vpop.f32.mrb[0].mxu0
        %865 = vmatprep.mubr.f32.mxu0 %v368
        %866 = vmatmul.mubr.f32.gmra.mrb[0].mxu0 %v253
        %v867 = vpop.f32.mrb[0].mxu0
        %v868 = vadd.f32 %v749, %v867
        %v869 = vpop.f32.mrb[0].mxu0
        %870 = vmatprep.mubr.f32.mxu0 %v370
        %871 = vmatmul.mubr.f32.gmra.mrb[0].mxu0 %v254
        %v872 = vpop.f32.mrb[0].mxu0
        %v873 = vadd.f32 %v749, %v872
        %v874 = vpop.f32.mrb[0].mxu0
        %875 = vmatprep.mubr.f32.mxu0 %v373
        %876 = vmatmul.mubr.f32.gmra.mrb[0].mxu0 %v256
        %v877 = vpop.f32.mrb[0].mxu0
        %v878 = vadd.f32 %v749, %v877
        %v879 = vpop.f32.mrb[0].mxu0
        %880 = vmatprep.mubr.f32.mxu0 %v375
        %881 = vmatmul.mubr.f32.gmra.mrb[0].mxu0 %v257
        %v882 = vpop.f32.mrb[0].mxu0
        %v883 = vadd.f32 %v749, %v882
        %v884 = vpop.f32.mrb[0].mxu0
        %885 = vmatprep.mubr.f32.mxu0 %v378
        %886 = vmatmul.mubr.f32.gmra.mrb[0].mxu0 %v259
        %v887 = vpop.f32.mrb[0].mxu0
        %v888 = vadd.f32 %v749, %v887
        %v889 = vpop.f32.mrb[0].mxu0
        %890 = vmatprep.mubr.f32.mxu0 %v380
        %891 = vmatmul.mubr.f32.gmra.mrb[0].mxu0 %v260
        %v892 = vpop.f32.mrb[0].mxu0
        %v893 = vadd.f32 %v749, %v892
        %v894 = vpop.f32.mrb[0].mxu0
        %895 = vmatprep.mubr.f32.mxu0 %v383
        %896 = vmatmul.mubr.f32.gmra.mrb[0].mxu0 %v262
        %v897 = vpop.f32.mrb[0].mxu0
        %v898 = vadd.f32 %v749, %v897
        %v899 = vpop.f32.mrb[0].mxu0
        %900 = vmatprep.mubr.f32.mxu0 %v385
        %901 = vmatmul.mubr.f32.gmra.mrb[0].mxu0 %v263
        %v902 = vpop.f32.mrb[0].mxu0
        %v903 = vadd.f32 %v749, %v902
        %v904 = vpop.f32.mrb[0].mxu0
        %905 = vmatprep.mubr.f32.mxu0 %v388
        %906 = vmatmul.mubr.f32.gmra.mrb[0].mxu0 %v265
        %v907 = vpop.f32.mrb[0].mxu0
        %v908 = vadd.f32 %v749, %v907
        %v909 = vpop.f32.mrb[0].mxu0
        %910 = vmatprep.mubr.f32.mxu0 %v390
        %911 = vmatmul.mubr.f32.gmra.mrb[0].mxu0 %v266
        %v912 = vpop.f32.mrb[0].mxu0
        %v913 = vadd.f32 %v749, %v912
        %v914 = vpop.f32.mrb[0].mxu0
        %915 = vmatprep.mubr.f32.mxu0 %v393
        %916 = vmatmul.mubr.f32.gmra.mrb[0].mxu0 %v268
        %v917 = vpop.f32.mrb[0].mxu0
        %v918 = vadd.f32 %v749, %v917
        %v919 = vpop.f32.mrb[0].mxu0
        %920 = vmatprep.mubr.f32.mxu0 %v395
        %921 = vmatmul.mubr.f32.gmra.mrb[0].mxu0 %v269
        %v922 = vpop.f32.mrb[0].mxu0
        %v923 = vadd.f32 %v749, %v922
        %v924 = vpop.f32.mrb[0].mxu0
        %925 = vmatprep.mubr.f32.mxu0 %v398
        %926 = vmatmul.mubr.f32.gmra.mrb[0].mxu0 %v271
        %v927 = vpop.f32.mrb[0].mxu0
        %v928 = vadd.f32 %v749, %v927
        %v929 = vpop.f32.mrb[0].mxu0
        %930 = vmatprep.mubr.f32.mxu0 %v400
        %931 = vmatmul.mubr.f32.gmra.mrb[0].mxu0 %v272
        %v932 = vpop.f32.mrb[0].mxu0
        %v933 = vadd.f32 %v749, %v932
        %v934 = vpop.f32.mrb[0].mxu0
        %935 = vmatprep.mubr.f32.mxu0 %v403
        %936 = vmatmul.mubr.f32.gmra.mrb[0].mxu0 %v274
        %v937 = vpop.f32.mrb[0].mxu0
        %v938 = vadd.f32 %v749, %v937
        %v939 = vpop.f32.mrb[0].mxu0
        %940 = vmatprep.mubr.f32.mxu0 %v405
        %941 = vmatmul.mubr.f32.gmra.mrb[0].mxu0 %v275
        %v942 = vpop.f32.mrb[0].mxu0
        %v943 = vadd.f32 %v749, %v942
        %v944 = vpop.f32.mrb[0].mxu0
        %945 = vmatprep.mubr.f32.mxu0 %v408
        %946 = vmatmul.mubr.f32.gmra.mrb[0].mxu0 %v277
        %v947 = vpop.f32.mrb[0].mxu0
        %v948 = vadd.f32 %v749, %v947
        %v949 = vpop.f32.mrb[0].mxu0
        %950 = vmatprep.mubr.f32.mxu0 %v410
        %951 = vmatmul.mubr.f32.gmra.mrb[0].mxu0 %v278
        %v952 = vpop.f32.mrb[0].mxu0
        %v953 = vadd.f32 %v749, %v952
        %v954 = vpop.f32.mrb[0].mxu0
        %955 = vmatprep.mubr.f32.mxu0 %v413
        %956 = vmatmul.mubr.f32.gmra.mrb[0].mxu0 %v280
        %v957 = vpop.f32.mrb[0].mxu0
        %v958 = vadd.f32 %v749, %v957
        %v959 = vpop.f32.mrb[0].mxu0
        %960 = vmatprep.mubr.f32.mxu0 %v415
        %961 = vmatmul.mubr.f32.gmra.mrb[0].mxu0 %v281
        %v962 = vpop.f32.mrb[0].mxu0
        %v963 = vadd.f32 %v749, %v962
        %v964 = vpop.f32.mrb[0].mxu0
        %965 = vmatprep.mubr.f32.mxu0 %v418
        %966 = vmatmul.mubr.f32.gmra.mrb[0].mxu0 %v283
        %v967 = vpop.f32.mrb[0].mxu0
        %v968 = vadd.f32 %v749, %v967
        %v969 = vpop.f32.mrb[0].mxu0
        %970 = vmatprep.mubr.f32.mxu0 %v420
        %971 = vmatmul.mubr.f32.gmra.mrb[0].mxu0 %v284
        %v972 = vpop.f32.mrb[0].mxu0
        %v973 = vadd.f32 %v749, %v972
        %v974 = vpop.f32.mrb[0].mxu0
        %975 = vdwg.mxu0
        %976 = vmatprep.subr.mxu0 0.0
        %977 = vmatpush1.msra.mxu0 %v632
        %978 = vmatprep.subr.mxu0 0.0
        %979 = vmatpush1.msra.mxu0 %v633
        %980 = vmatprep.subr.mxu0 0.0
        %981 = vmatpush1.msra.mxu0 %v634
        %982 = vmatprep.subr.mxu0 0.0
        %983 = vmatpush1.msra.mxu0 %v635
        %984 = vmatprep.subr.mxu0 0.0
        %985 = vmatpush1.msra.mxu0 %v636
        %986 = vmatprep.subr.mxu0 0.0
        %987 = vmatpush1.msra.mxu0 %v637
        %988 = vmatprep.subr.mxu0 0.0
        %989 = vmatpush1.msra.mxu0 %v638
        %990 = vmatprep.subr.mxu0 0.0
        %991 = vmatpush1.msra.mxu0 %v639
        %992 = vmatprep.subr.mxu0 0.0
        %993 = vmatpush1.msra.mxu0 %v640
        %994 = vmatprep.subr.mxu0 0.0
        %995 = vmatpush1.msra.mxu0 %v641
        %996 = vmatprep.subr.mxu0 0.0
        %997 = vmatpush1.msra.mxu0 %v642
        %998 = vmatprep.subr.mxu0 0.0
        %999 = vmatpush1.msra.mxu0 %v643
        %1000 = vmatprep.subr.mxu0 0.0
        %1001 = vmatpush1.msra.mxu0 %v644
        %1002 = vmatprep.subr.mxu0 0.0
        %1003 = vmatpush1.msra.mxu0 %v645
        %1004 = vmatprep.subr.mxu0 0.0
        %1005 = vmatpush1.msra.mxu0 %v646
        %1006 = vmatprep.subr.mxu0 0.0
        %1007 = vmatpush1.msra.mxu0 %v647
        %1008 = vmatprep.subr.mxu0 0.0
        %1009 = vmatpush1.msra.mxu0 %v648
        %1010 = vmatprep.subr.mxu0 0.0
        %1011 = vmatpush1.msra.mxu0 %v649
        %1012 = vmatprep.subr.mxu0 0.0
        %1013 = vmatpush1.msra.mxu0 %v650
        %1014 = vmatprep.subr.mxu0 0.0
        %1015 = vmatpush1.msra.mxu0 %v651
        %1016 = vmatprep.subr.mxu0 0.0
        %1017 = vmatpush1.msra.mxu0 %v652
        %1018 = vmatprep.subr.mxu0 0.0
        %1019 = vmatpush1.msra.mxu0 %v653
        %1020 = vmatprep.subr.mxu0 0.0
        %1021 = vmatpush1.msra.mxu0 %v654
        %1022 = vmatprep.subr.mxu0 0.0
        %1023 = vmatpush1.msra.mxu0 %v655
        %1024 = vmatprep.subr.mxu0 0.0
        %1025 = vmatpush1.msra.mxu0 %v656
        %1026 = vmatprep.subr.mxu0 0.0
        %1027 = vmatpush1.msra.mxu0 %v657
        %1028 = vmatprep.subr.mxu0 0.0
        %1029 = vmatpush1.msra.mxu0 %v658
        %1030 = vmatprep.subr.mxu0 0.0
        %1031 = vmatpush1.msra.mxu0 %v659
        %1032 = vmatprep.subr.mxu0 0.0
        %1033 = vmatpush1.msra.mxu0 %v660
        %1034 = vmatprep.subr.mxu0 0.0
        %1035 = vmatpush1.msra.mxu0 %v661
        %1036 = vmatprep.subr.mxu0 0.0
        %1037 = vmatpush1.msra.mxu0 %v662
        %1038 = vmatprep.subr.mxu0 0.0
        %1039 = vmatpush1.msra.mxu0 %v663
        %1040 = vmatprep.mubr.f32.mxu0 %v241
        %1041 = vmatmul.mubr.f32.gmra.mrb[0].mxu0 %v456
        %v1042 = vpop.f32.mrb[0].mxu0
        %v1043 = vadd.f32 %v818, %v1042
        %v1044 = vpop.f32.mrb[0].mxu0
        %1045 = vmatprep.mubr.f32.mxu0 %v242
        %1046 = vmatmul.mubr.f32.gmra.mrb[0].mxu0 %v458
        %v1047 = vpop.f32.mrb[0].mxu0
        %v1048 = vadd.f32 %v823, %v1047
        %v1049 = vpop.f32.mrb[0].mxu0
        %1050 = vmatprep.mubr.f32.mxu0 %v244
        %1051 = vmatmul.mubr.f32.gmra.mrb[0].mxu0 %v461
        %v1052 = vpop.f32.mrb[0].mxu0
        %v1053 = vadd.f32 %v828, %v1052
        %v1054 = vpop.f32.mrb[0].mxu0
        %1055 = vmatprep.mubr.f32.mxu0 %v245
        %1056 = vmatmul.mubr.f32.gmra.mrb[0].mxu0 %v463
        %v1057 = vpop.f32.mrb[0].mxu0
        %v1058 = vadd.f32 %v833, %v1057
        %v1059 = vpop.f32.mrb[0].mxu0
        %1060 = vmatprep.mubr.f32.mxu0 %v247
        %1061 = vmatmul.mubr.f32.gmra.mrb[0].mxu0 %v466
        %v1062 = vpop.f32.mrb[0].mxu0
        %v1063 = vadd.f32 %v838, %v1062
        %v1064 = vpop.f32.mrb[0].mxu0
        %1065 = vmatprep.mubr.f32.mxu0 %v248
        %1066 = vmatmul.mubr.f32.gmra.mrb[0].mxu0 %v468
        %v1067 = vpop.f32.mrb[0].mxu0
        %v1068 = vadd.f32 %v843, %v1067
        %v1069 = vpop.f32.mrb[0].mxu0
        %1070 = vmatprep.mubr.f32.mxu0 %v250
        %1071 = vmatmul.mubr.f32.gmra.mrb[0].mxu0 %v471
        %v1072 = vpop.f32.mrb[0].mxu0
        %v1073 = vadd.f32 %v848, %v1072
        %v1074 = vpop.f32.mrb[0].mxu0
        %1075 = vmatprep.mubr.f32.mxu0 %v251
        %1076 = vmatmul.mubr.f32.gmra.mrb[0].mxu0 %v473
        %v1077 = vpop.f32.mrb[0].mxu0
        %v1078 = vadd.f32 %v853, %v1077
        %v1079 = vpop.f32.mrb[0].mxu0
        %1080 = vmatprep.mubr.f32.mxu0 %v253
        %1081 = vmatmul.mubr.f32.gmra.mrb[0].mxu0 %v476
        %v1082 = vpop.f32.mrb[0].mxu0
        %v1083 = vadd.f32 %v858, %v1082
        %v1084 = vpop.f32.mrb[0].mxu0
        %1085 = vmatprep.mubr.f32.mxu0 %v254
        %1086 = vmatmul.mubr.f32.gmra.mrb[0].mxu0 %v478
        %v1087 = vpop.f32.mrb[0].mxu0
        %v1088 = vadd.f32 %v863, %v1087
        %v1089 = vpop.f32.mrb[0].mxu0
        %1090 = vmatprep.mubr.f32.mxu0 %v256
        %1091 = vmatmul.mubr.f32.gmra.mrb[0].mxu0 %v481
        %v1092 = vpop.f32.mrb[0].mxu0
        %v1093 = vadd.f32 %v868, %v1092
        %v1094 = vpop.f32.mrb[0].mxu0
        %1095 = vmatprep.mubr.f32.mxu0 %v257
        %1096 = vmatmul.mubr.f32.gmra.mrb[0].mxu0 %v483
        %v1097 = vpop.f32.mrb[0].mxu0
        %v1098 = vadd.f32 %v873, %v1097
        %v1099 = vpop.f32.mrb[0].mxu0
        %1100 = vmatprep.mubr.f32.mxu0 %v259
        %1101 = vmatmul.mubr.f32.gmra.mrb[0].mxu0 %v486
        %v1102 = vpop.f32.mrb[0].mxu0
        %v1103 = vadd.f32 %v878, %v1102
        %v1104 = vpop.f32.mrb[0].mxu0
        %1105 = vmatprep.mubr.f32.mxu0 %v260
        %1106 = vmatmul.mubr.f32.gmra.mrb[0].mxu0 %v488
        %v1107 = vpop.f32.mrb[0].mxu0
        %v1108 = vadd.f32 %v883, %v1107
        %v1109 = vpop.f32.mrb[0].mxu0
        %1110 = vmatprep.mubr.f32.mxu0 %v262
        %1111 = vmatmul.mubr.f32.gmra.mrb[0].mxu0 %v491
        %v1112 = vpop.f32.mrb[0].mxu0
        %v1113 = vadd.f32 %v888, %v1112
        %v1114 = vpop.f32.mrb[0].mxu0
        %1115 = vmatprep.mubr.f32.mxu0 %v263
        %1116 = vmatmul.mubr.f32.gmra.mrb[0].mxu0 %v493
        %v1117 = vpop.f32.mrb[0].mxu0
        %v1118 = vadd.f32 %v893, %v1117
        %v1119 = vpop.f32.mrb[0].mxu0
        %1120 = vmatprep.mubr.f32.mxu0 %v265
        %1121 = vmatmul.mubr.f32.gmra.mrb[0].mxu0 %v496
        %v1122 = vpop.f32.mrb[0].mxu0
        %v1123 = vadd.f32 %v898, %v1122
        %v1124 = vpop.f32.mrb[0].mxu0
        %1125 = vmatprep.mubr.f32.mxu0 %v266
        %1126 = vmatmul.mubr.f32.gmra.mrb[0].mxu0 %v498
        %v1127 = vpop.f32.mrb[0].mxu0
        %v1128 = vadd.f32 %v903, %v1127
        %v1129 = vpop.f32.mrb[0].mxu0
        %1130 = vmatprep.mubr.f32.mxu0 %v268
        %1131 = vmatmul.mubr.f32.gmra.mrb[0].mxu0 %v501
        %v1132 = vpop.f32.mrb[0].mxu0
        %v1133 = vadd.f32 %v908, %v1132
        %v1134 = vpop.f32.mrb[0].mxu0
        %1135 = vmatprep.mubr.f32.mxu0 %v269
        %1136 = vmatmul.mubr.f32.gmra.mrb[0].mxu0 %v503
        %v1137 = vpop.f32.mrb[0].mxu0
        %v1138 = vadd.f32 %v913, %v1137
        %v1139 = vpop.f32.mrb[0].mxu0
        %1140 = vmatprep.mubr.f32.mxu0 %v271
        %1141 = vmatmul.mubr.f32.gmra.mrb[0].mxu0 %v506
        %v1142 = vpop.f32.mrb[0].mxu0
        %v1143 = vadd.f32 %v918, %v1142
        %v1144 = vpop.f32.mrb[0].mxu0
        %1145 = vmatprep.mubr.f32.mxu0 %v272
        %1146 = vmatmul.mubr.f32.gmra.mrb[0].mxu0 %v508
        %v1147 = vpop.f32.mrb[0].mxu0
        %v1148 = vadd.f32 %v923, %v1147
        %v1149 = vpop.f32.mrb[0].mxu0
        %1150 = vmatprep.mubr.f32.mxu0 %v274
        %1151 = vmatmul.mubr.f32.gmra.mrb[0].mxu0 %v511
        %v1152 = vpop.f32.mrb[0].mxu0
        %v1153 = vadd.f32 %v928, %v1152
        %v1154 = vpop.f32.mrb[0].mxu0
        %1155 = vmatprep.mubr.f32.mxu0 %v275
        %1156 = vmatmul.mubr.f32.gmra.mrb[0].mxu0 %v513
        %v1157 = vpop.f32.mrb[0].mxu0
        %v1158 = vadd.f32 %v933, %v1157
        %v1159 = vpop.f32.mrb[0].mxu0
        %1160 = vmatprep.mubr.f32.mxu0 %v277
        %1161 = vmatmul.mubr.f32.gmra.mrb[0].mxu0 %v516
        %v1162 = vpop.f32.mrb[0].mxu0
        %v1163 = vadd.f32 %v938, %v1162
        %v1164 = vpop.f32.mrb[0].mxu0
        %1165 = vmatprep.mubr.f32.mxu0 %v278
        %1166 = vmatmul.mubr.f32.gmra.mrb[0].mxu0 %v518
        %v1167 = vpop.f32.mrb[0].mxu0
        %v1168 = vadd.f32 %v943, %v1167
        %v1169 = vpop.f32.mrb[0].mxu0
        %1170 = vmatprep.mubr.f32.mxu0 %v280
        %1171 = vmatmul.mubr.f32.gmra.mrb[0].mxu0 %v521
        %v1172 = vpop.f32.mrb[0].mxu0
        %v1173 = vadd.f32 %v948, %v1172
        %v1174 = vpop.f32.mrb[0].mxu0
        %1175 = vmatprep.mubr.f32.mxu0 %v281
        %1176 = vmatmul.mubr.f32.gmra.mrb[0].mxu0 %v523
        %v1177 = vpop.f32.mrb[0].mxu0
        %v1178 = vadd.f32 %v953, %v1177
        %v1179 = vpop.f32.mrb[0].mxu0
        %1180 = vmatprep.mubr.f32.mxu0 %v283
        %1181 = vmatmul.mubr.f32.gmra.mrb[0].mxu0 %v526
        %v1182 = vpop.f32.mrb[0].mxu0
        %v1183 = vadd.f32 %v958, %v1182
        %v1184 = vpop.f32.mrb[0].mxu0
        %1185 = vmatprep.mubr.f32.mxu0 %v284
        %1186 = vmatmul.mubr.f32.gmra.mrb[0].mxu0 %v528
        %v1187 = vpop.f32.mrb[0].mxu0
        %v1188 = vadd.f32 %v963, %v1187
        %v1189 = vpop.f32.mrb[0].mxu0
        %1190 = vmatprep.mubr.f32.mxu0 %v286
        %1191 = vmatmul.mubr.f32.gmra.mrb[0].mxu0 %v531
        %v1192 = vpop.f32.mrb[0].mxu0
        %v1193 = vadd.f32 %v968, %v1192
        %v1194 = vpop.f32.mrb[0].mxu0
        %1195 = vmatprep.mubr.f32.mxu0 %v287
        %1196 = vmatmul.mubr.f32.gmra.mrb[0].mxu0 %v533
        %v1197 = vpop.f32.mrb[0].mxu0
        %v1198 = vadd.f32 %v973, %v1197
        %v1199 = vpop.f32.mrb[0].mxu0
        %1200 = vdwg.mxu0
        %1201 = vmatprep.subr.mxu0 0.0
        %1202 = vmatpush1.msra.mxu0 %v664
        %1203 = vmatprep.subr.mxu0 0.0
        %1204 = vmatpush1.msra.mxu0 %v665
        %1205 = vmatprep.subr.mxu0 0.0
        %1206 = vmatpush1.msra.mxu0 %v666
        %1207 = vmatprep.subr.mxu0 0.0
        %1208 = vmatpush1.msra.mxu0 %v667
        %1209 = vmatprep.subr.mxu0 0.0
        %1210 = vmatpush1.msra.mxu0 %v668
        %1211 = vmatprep.subr.mxu0 0.0
        %1212 = vmatpush1.msra.mxu0 %v669
        %1213 = vmatprep.subr.mxu0 0.0
        %1214 = vmatpush1.msra.mxu0 %v670
        %1215 = vmatprep.subr.mxu0 0.0
        %1216 = vmatpush1.msra.mxu0 %v671
        %1217 = vmatprep.subr.mxu0 0.0
        %1218 = vmatpush1.msra.mxu0 %v672
        %1219 = vmatprep.subr.mxu0 0.0
        %1220 = vmatpush1.msra.mxu0 %v673
        %1221 = vmatprep.subr.mxu0 0.0
        %1222 = vmatpush1.msra.mxu0 %v674
        %1223 = vmatprep.subr.mxu0 0.0
        %1224 = vmatpush1.msra.mxu0 %v675
        %1225 = vmatprep.subr.mxu0 0.0
        %1226 = vmatpush1.msra.mxu0 %v676
        %1227 = vmatprep.subr.mxu0 0.0
        %1228 = vmatpush1.msra.mxu0 %v677
        %1229 = vmatprep.subr.mxu0 0.0
        %1230 = vmatpush1.msra.mxu0 %v678
        %1231 = vmatprep.subr.mxu0 0.0
        %1232 = vmatpush1.msra.mxu0 %v679
        %1233 = vmatprep.subr.mxu0 0.0
        %1234 = vmatpush1.msra.mxu0 %v680
        %1235 = vmatprep.subr.mxu0 0.0
        %1236 = vmatpush1.msra.mxu0 %v681
        %1237 = vmatprep.subr.mxu0 0.0
        %1238 = vmatpush1.msra.mxu0 %v682
        %1239 = vmatprep.subr.mxu0 0.0
        %1240 = vmatpush1.msra.mxu0 %v683
        %1241 = vmatprep.subr.mxu0 0.0
        %1242 = vmatpush1.msra.mxu0 %v684
        %1243 = vmatprep.subr.mxu0 0.0
        %1244 = vmatpush1.msra.mxu0 %v685
        %1245 = vmatprep.subr.mxu0 0.0
        %1246 = vmatpush1.msra.mxu0 %v686
        %1247 = vmatprep.subr.mxu0 0.0
        %1248 = vmatpush1.msra.mxu0 %v687
        %1249 = vmatprep.subr.mxu0 0.0
        %1250 = vmatpush1.msra.mxu0 %v688
        %1251 = vmatprep.subr.mxu0 0.0
        %1252 = vmatpush1.msra.mxu0 %v689
        %1253 = vmatprep.subr.mxu0 0.0
        %1254 = vmatpush1.msra.mxu0 %v690
        %1255 = vmatprep.subr.mxu0 0.0
        %1256 = vmatpush1.msra.mxu0 %v691
        %1257 = vmatprep.subr.mxu0 0.0
        %1258 = vmatpush1.msra.mxu0 %v692
        %1259 = vmatprep.subr.mxu0 0.0
        %1260 = vmatpush1.msra.mxu0 %v693
        %1261 = vmatprep.subr.mxu0 0.0
        %1262 = vmatpush1.msra.mxu0 %v694
        %1263 = vmatprep.subr.mxu0 0.0
        %1264 = vmatpush1.msra.mxu0 %v695
        %1265 = vmatprep.mubr.f32.mxu0 %v461
        %1266 = vmatmul.mubr.f32.gmra.mrb[0].mxu0 %v348
        %v1267 = vpop.f32.mrb[0].mxu0
        %v1268 = vadd.f32 %v1043, %v1267
        %v1269 = vpop.f32.mrb[0].mxu0
        %1270 = vmatprep.mubr.f32.mxu0 %v463
        %1271 = vmatmul.mubr.f32.gmra.mrb[0].mxu0 %v350
        %v1272 = vpop.f32.mrb[0].mxu0
        %v1273 = vadd.f32 %v1048, %v1272
        %v1274 = vpop.f32.mrb[0].mxu0
        %1275 = vmatprep.mubr.f32.mxu0 %v466
        %1276 = vmatmul.mubr.f32.gmra.mrb[0].mxu0 %v353
        %v1277 = vpop.f32.mrb[0].mxu0
        %v1278 = vadd.f32 %v1053, %v1277
        %v1279 = vpop.f32.mrb[0].mxu0
        %1280 = vmatprep.mubr.f32.mxu0 %v468
        %1281 = vmatmul.mubr.f32.gmra.mrb[0].mxu0 %v355
        %v1282 = vpop.f32.mrb[0].mxu0
        %v1283 = vadd.f32 %v1058, %v1282
        %v1284 = vpop.f32.mrb[0].mxu0
        %1285 = vmatprep.mubr.f32.mxu0 %v471
        %1286 = vmatmul.mubr.f32.gmra.mrb[0].mxu0 %v358
        %v1287 = vpop.f32.mrb[0].mxu0
        %v1288 = vadd.f32 %v1063, %v1287
        %v1289 = vpop.f32.mrb[0].mxu0
        %1290 = vmatprep.mubr.f32.mxu0 %v473
        %1291 = vmatmul.mubr.f32.gmra.mrb[0].mxu0 %v360
        %v1292 = vpop.f32.mrb[0].mxu0
        %v1293 = vadd.f32 %v1068, %v1292
        %v1294 = vpop.f32.mrb[0].mxu0
        %1295 = vmatprep.mubr.f32.mxu0 %v476
        %1296 = vmatmul.mubr.f32.gmra.mrb[0].mxu0 %v363
        %v1297 = vpop.f32.mrb[0].mxu0
        %v1298 = vadd.f32 %v1073, %v1297
        %v1299 = vpop.f32.mrb[0].mxu0
        %1300 = vmatprep.mubr.f32.mxu0 %v478
        %1301 = vmatmul.mubr.f32.gmra.mrb[0].mxu0 %v365
        %v1302 = vpop.f32.mrb[0].mxu0
        %v1303 = vadd.f32 %v1078, %v1302
        %v1304 = vpop.f32.mrb[0].mxu0
        %1305 = vmatprep.mubr.f32.mxu0 %v481
        %1306 = vmatmul.mubr.f32.gmra.mrb[0].mxu0 %v368
        %v1307 = vpop.f32.mrb[0].mxu0
        %v1308 = vadd.f32 %v1083, %v1307
        %v1309 = vpop.f32.mrb[0].mxu0
        %1310 = vmatprep.mubr.f32.mxu0 %v483
        %1311 = vmatmul.mubr.f32.gmra.mrb[0].mxu0 %v370
        %v1312 = vpop.f32.mrb[0].mxu0
        %v1313 = vadd.f32 %v1088, %v1312
        %v1314 = vpop.f32.mrb[0].mxu0
        %1315 = vmatprep.mubr.f32.mxu0 %v486
        %1316 = vmatmul.mubr.f32.gmra.mrb[0].mxu0 %v373
        %v1317 = vpop.f32.mrb[0].mxu0
        %v1318 = vadd.f32 %v1093, %v1317
        %v1319 = vpop.f32.mrb[0].mxu0
        %1320 = vmatprep.mubr.f32.mxu0 %v488
        %1321 = vmatmul.mubr.f32.gmra.mrb[0].mxu0 %v375
        %v1322 = vpop.f32.mrb[0].mxu0
        %v1323 = vadd.f32 %v1098, %v1322
        %v1324 = vpop.f32.mrb[0].mxu0
        %1325 = vmatprep.mubr.f32.mxu0 %v491
        %1326 = vmatmul.mubr.f32.gmra.mrb[0].mxu0 %v378
        %v1327 = vpop.f32.mrb[0].mxu0
        %v1328 = vadd.f32 %v1103, %v1327
        %v1329 = vpop.f32.mrb[0].mxu0
        %1330 = vmatprep.mubr.f32.mxu0 %v493
        %1331 = vmatmul.mubr.f32.gmra.mrb[0].mxu0 %v380
        %v1332 = vpop.f32.mrb[0].mxu0
        %v1333 = vadd.f32 %v1108, %v1332
        %v1334 = vpop.f32.mrb[0].mxu0
        %1335 = vmatprep.mubr.f32.mxu0 %v496
        %1336 = vmatmul.mubr.f32.gmra.mrb[0].mxu0 %v383
        %v1337 = vpop.f32.mrb[0].mxu0
        %v1338 = vadd.f32 %v1113, %v1337
        %v1339 = vpop.f32.mrb[0].mxu0
        %1340 = vmatprep.mubr.f32.mxu0 %v498
        %1341 = vmatmul.mubr.f32.gmra.mrb[0].mxu0 %v385
        %v1342 = vpop.f32.mrb[0].mxu0
        %v1343 = vadd.f32 %v1118, %v1342
        %v1344 = vpop.f32.mrb[0].mxu0
        %1345 = vmatprep.mubr.f32.mxu0 %v501
        %1346 = vmatmul.mubr.f32.gmra.mrb[0].mxu0 %v388
        %v1347 = vpop.f32.mrb[0].mxu0
        %v1348 = vadd.f32 %v1123, %v1347
        %v1349 = vpop.f32.mrb[0].mxu0
        %1350 = vmatprep.mubr.f32.mxu0 %v503
        %1351 = vmatmul.mubr.f32.gmra.mrb[0].mxu0 %v390
        %v1352 = vpop.f32.mrb[0].mxu0
        %v1353 = vadd.f32 %v1128, %v1352
        %v1354 = vpop.f32.mrb[0].mxu0
        %1355 = vmatprep.mubr.f32.mxu0 %v506
        %1356 = vmatmul.mubr.f32.gmra.mrb[0].mxu0 %v393
        %v1357 = vpop.f32.mrb[0].mxu0
        %v1358 = vadd.f32 %v1133, %v1357
        %v1359 = vpop.f32.mrb[0].mxu0
        %1360 = vmatprep.mubr.f32.mxu0 %v508
        %1361 = vmatmul.mubr.f32.gmra.mrb[0].mxu0 %v395
        %v1362 = vpop.f32.mrb[0].mxu0
        %v1363 = vadd.f32 %v1138, %v1362
        %v1364 = vpop.f32.mrb[0].mxu0
        %1365 = vmatprep.mubr.f32.mxu0 %v511
        %1366 = vmatmul.mubr.f32.gmra.mrb[0].mxu0 %v398
        %v1367 = vpop.f32.mrb[0].mxu0
        %v1368 = vadd.f32 %v1143, %v1367
        %v1369 = vpop.f32.mrb[0].mxu0
        %1370 = vmatprep.mubr.f32.mxu0 %v513
        %1371 = vmatmul.mubr.f32.gmra.mrb[0].mxu0 %v400
        %v1372 = vpop.f32.mrb[0].mxu0
        %v1373 = vadd.f32 %v1148, %v1372
        %v1374 = vpop.f32.mrb[0].mxu0
        %1375 = vmatprep.mubr.f32.mxu0 %v516
        %1376 = vmatmul.mubr.f32.gmra.mrb[0].mxu0 %v403
        %v1377 = vpop.f32.mrb[0].mxu0
        %v1378 = vadd.f32 %v1153, %v1377
        %v1379 = vpop.f32.mrb[0].mxu0
        %1380 = vmatprep.mubr.f32.mxu0 %v518
        %1381 = vmatmul.mubr.f32.gmra.mrb[0].mxu0 %v405
        %v1382 = vpop.f32.mrb[0].mxu0
        %v1383 = vadd.f32 %v1158, %v1382
        %v1384 = vpop.f32.mrb[0].mxu0
        %1385 = vmatprep.mubr.f32.mxu0 %v521
        %1386 = vmatmul.mubr.f32.gmra.mrb[0].mxu0 %v408
        %v1387 = vpop.f32.mrb[0].mxu0
        %v1388 = vadd.f32 %v1163, %v1387
        %v1389 = vpop.f32.mrb[0].mxu0
        %1390 = vmatprep.mubr.f32.mxu0 %v523
        %1391 = vmatmul.mubr.f32.gmra.mrb[0].mxu0 %v410
        %v1392 = vpop.f32.mrb[0].mxu0
        %v1393 = vadd.f32 %v1168, %v1392
        %v1394 = vpop.f32.mrb[0].mxu0
        %1395 = vmatprep.mubr.f32.mxu0 %v526
        %1396 = vmatmul.mubr.f32.gmra.mrb[0].mxu0 %v413
        %v1397 = vpop.f32.mrb[0].mxu0
        %v1398 = vadd.f32 %v1173, %v1397
        %v1399 = vpop.f32.mrb[0].mxu0
        %1400 = vmatprep.mubr.f32.mxu0 %v528
        %1401 = vmatmul.mubr.f32.gmra.mrb[0].mxu0 %v415
        %v1402 = vpop.f32.mrb[0].mxu0
        %v1403 = vadd.f32 %v1178, %v1402
        %v1404 = vpop.f32.mrb[0].mxu0
        %1405 = vmatprep.mubr.f32.mxu0 %v531
        %1406 = vmatmul.mubr.f32.gmra.mrb[0].mxu0 %v418
        %v1407 = vpop.f32.mrb[0].mxu0
        %v1408 = vadd.f32 %v1183, %v1407
        %v1409 = vpop.f32.mrb[0].mxu0
        %1410 = vmatprep.mubr.f32.mxu0 %v533
        %1411 = vmatmul.mubr.f32.gmra.mrb[0].mxu0 %v420
        %v1412 = vpop.f32.mrb[0].mxu0
        %v1413 = vadd.f32 %v1188, %v1412
        %v1414 = vpop.f32.mrb[0].mxu0
        %1415 = vmatprep.mubr.f32.mxu0 %v578
        %1416 = vmatmul.mubr.f32.gmra.mrb[0].mxu0 %v571
        %v1417 = vpop.f32.mrb[0].mxu0
        %v1418 = vadd.f32 %v1193, %v1417
        %v1419 = vpop.f32.mrb[0].mxu0
        %1420 = vmatprep.mubr.f32.mxu0 %v580
        %1421 = vmatmul.mubr.f32.gmra.mrb[0].mxu0 %v573
        %v1422 = vpop.f32.mrb[0].mxu0
        %v1423 = vadd.f32 %v1198, %v1422
        %v1424 = vpop.f32.mrb[0].mxu0
        %1425 = vdwg.mxu0
        %1426 = vmatprep.subr.mxu0 0.0
        %1427 = vmatpush1.msra.mxu0 %v696
        %1428 = vmatprep.subr.mxu0 0.0
        %1429 = vmatpush1.msra.mxu0 %v697
        %1430 = vmatprep.subr.mxu0 0.0
        %1431 = vmatpush1.msra.mxu0 %v698
        %1432 = vmatprep.subr.mxu0 0.0
        %1433 = vmatpush1.msra.mxu0 %v699
        %1434 = vmatprep.subr.mxu0 0.0
        %1435 = vmatpush1.msra.mxu0 %v700
        %1436 = vmatprep.subr.mxu0 0.0
        %1437 = vmatpush1.msra.mxu0 %v701
        %1438 = vmatprep.subr.mxu0 0.0
        %1439 = vmatpush1.msra.mxu0 %v702
        %1440 = vmatprep.subr.mxu0 0.0
        %1441 = vmatpush1.msra.mxu0 %v703
        %1442 = vmatprep.subr.mxu0 0.0
        %1443 = vmatpush1.msra.mxu0 %v704
        %1444 = vmatprep.subr.mxu0 0.0
        %1445 = vmatpush1.msra.mxu0 %v705
        %1446 = vmatprep.subr.mxu0 0.0
        %1447 = vmatpush1.msra.mxu0 %v706
        %1448 = vmatprep.subr.mxu0 0.0
        %1449 = vmatpush1.msra.mxu0 %v707
        %1450 = vmatprep.subr.mxu0 0.0
        %1451 = vmatpush1.msra.mxu0 %v708
        %1452 = vmatprep.subr.mxu0 0.0
        %1453 = vmatpush1.msra.mxu0 %v709
        %1454 = vmatprep.subr.mxu0 0.0
        %1455 = vmatpush1.msra.mxu0 %v710
        %1456 = vmatprep.subr.mxu0 0.0
        %1457 = vmatpush1.msra.mxu0 %v711
        %1458 = vmatprep.subr.mxu0 0.0
        %1459 = vmatpush1.msra.mxu0 %v712
        %1460 = vmatprep.subr.mxu0 0.0
        %1461 = vmatpush1.msra.mxu0 %v713
        %1462 = vmatprep.subr.mxu0 0.0
        %1463 = vmatpush1.msra.mxu0 %v714
        %1464 = vmatprep.subr.mxu0 0.0
        %1465 = vmatpush1.msra.mxu0 %v715
        %1466 = vmatprep.subr.mxu0 0.0
        %1467 = vmatpush1.msra.mxu0 %v716
        %1468 = vmatprep.subr.mxu0 0.0
        %1469 = vmatpush1.msra.mxu0 %v717
        %1470 = vmatprep.subr.mxu0 0.0
        %1471 = vmatpush1.msra.mxu0 %v718
        %1472 = vmatprep.subr.mxu0 0.0
        %1473 = vmatpush1.msra.mxu0 %v719
        %1474 = vmatprep.subr.mxu0 0.0
        %1475 = vmatpush1.msra.mxu0 %v720
        %1476 = vmatprep.subr.mxu0 0.0
        %1477 = vmatpush1.msra.mxu0 %v721
        %1478 = vmatprep.subr.mxu0 0.0
        %1479 = vmatpush1.msra.mxu0 %v722
        %1480 = vmatprep.subr.mxu0 0.0
        %1481 = vmatpush1.msra.mxu0 %v723
        %1482 = vmatprep.subr.mxu0 0.0
        %1483 = vmatpush1.msra.mxu0 %v724
        %1484 = vmatprep.subr.mxu0 0.0
        %1485 = vmatpush1.msra.mxu0 %v725
        %1486 = vmatprep.subr.mxu0 0.0
        %1487 = vmatpush1.msra.mxu0 %v726
        %1488 = vmatprep.subr.mxu0 0.0
        %1489 = vmatpush1.msra.mxu0 %v727
        %1490 = vmatprep.mubr.f32.mxu0 %v353
        %1491 = vmatmul.mubr.f32.gmra.mrb[0].mxu0 %v244
        %v1492 = vpop.f32.mrb[0].mxu0
        %v1493 = vadd.f32 %v1268, %v1492
        %v1494 = vpop.f32.mrb[0].mxu0
        %1495 = vmatprep.mubr.f32.mxu0 %v355
        %1496 = vmatmul.mubr.f32.gmra.mrb[0].mxu0 %v245
        %v1497 = vpop.f32.mrb[0].mxu0
        %v1498 = vadd.f32 %v1273, %v1497
        %v1499 = vpop.f32.mrb[0].mxu0
        %1500 = vmatprep.mubr.f32.mxu0 %v358
        %1501 = vmatmul.mubr.f32.gmra.mrb[0].mxu0 %v247
        %v1502 = vpop.f32.mrb[0].mxu0
        %v1503 = vadd.f32 %v1278, %v1502
        %v1504 = vpop.f32.mrb[0].mxu0
        %1505 = vmatprep.mubr.f32.mxu0 %v360
        %1506 = vmatmul.mubr.f32.gmra.mrb[0].mxu0 %v248
        %v1507 = vpop.f32.mrb[0].mxu0
        %v1508 = vadd.f32 %v1283, %v1507
        %v1509 = vpop.f32.mrb[0].mxu0
        %1510 = vmatprep.mubr.f32.mxu0 %v363
        %1511 = vmatmul.mubr.f32.gmra.mrb[0].mxu0 %v250
        %v1512 = vpop.f32.mrb[0].mxu0
        %v1513 = vadd.f32 %v1288, %v1512
        %v1514 = vpop.f32.mrb[0].mxu0
        %1515 = vmatprep.mubr.f32.mxu0 %v365
        %1516 = vmatmul.mubr.f32.gmra.mrb[0].mxu0 %v251
        %v1517 = vpop.f32.mrb[0].mxu0
        %v1518 = vadd.f32 %v1293, %v1517
        %v1519 = vpop.f32.mrb[0].mxu0
        %1520 = vmatprep.mubr.f32.mxu0 %v368
        %1521 = vmatmul.mubr.f32.gmra.mrb[0].mxu0 %v253
        %v1522 = vpop.f32.mrb[0].mxu0
        %v1523 = vadd.f32 %v1298, %v1522
        %v1524 = vpop.f32.mrb[0].mxu0
        %1525 = vmatprep.mubr.f32.mxu0 %v370
        %1526 = vmatmul.mubr.f32.gmra.mrb[0].mxu0 %v254
        %v1527 = vpop.f32.mrb[0].mxu0
        %v1528 = vadd.f32 %v1303, %v1527
        %v1529 = vpop.f32.mrb[0].mxu0
        %1530 = vmatprep.mubr.f32.mxu0 %v373
        %1531 = vmatmul.mubr.f32.gmra.mrb[0].mxu0 %v256
        %v1532 = vpop.f32.mrb[0].mxu0
        %v1533 = vadd.f32 %v1308, %v1532
        %v1534 = vpop.f32.mrb[0].mxu0
        %1535 = vmatprep.mubr.f32.mxu0 %v375
        %1536 = vmatmul.mubr.f32.gmra.mrb[0].mxu0 %v257
        %v1537 = vpop.f32.mrb[0].mxu0
        %v1538 = vadd.f32 %v1313, %v1537
        %v1539 = vpop.f32.mrb[0].mxu0
        %1540 = vmatprep.mubr.f32.mxu0 %v378
        %1541 = vmatmul.mubr.f32.gmra.mrb[0].mxu0 %v259
        %v1542 = vpop.f32.mrb[0].mxu0
        %v1543 = vadd.f32 %v1318, %v1542
        %v1544 = vpop.f32.mrb[0].mxu0
        %1545 = vmatprep.mubr.f32.mxu0 %v380
        %1546 = vmatmul.mubr.f32.gmra.mrb[0].mxu0 %v260
        %v1547 = vpop.f32.mrb[0].mxu0
        %v1548 = vadd.f32 %v1323, %v1547
        %v1549 = vpop.f32.mrb[0].mxu0
        %1550 = vmatprep.mubr.f32.mxu0 %v383
        %1551 = vmatmul.mubr.f32.gmra.mrb[0].mxu0 %v262
        %v1552 = vpop.f32.mrb[0].mxu0
        %v1553 = vadd.f32 %v1328, %v1552
        %v1554 = vpop.f32.mrb[0].mxu0
        %1555 = vmatprep.mubr.f32.mxu0 %v385
        %1556 = vmatmul.mubr.f32.gmra.mrb[0].mxu0 %v263
        %v1557 = vpop.f32.mrb[0].mxu0
        %v1558 = vadd.f32 %v1333, %v1557
        %v1559 = vpop.f32.mrb[0].mxu0
        %1560 = vmatprep.mubr.f32.mxu0 %v388
        %1561 = vmatmul.mubr.f32.gmra.mrb[0].mxu0 %v265
        %v1562 = vpop.f32.mrb[0].mxu0
        %v1563 = vadd.f32 %v1338, %v1562
        %v1564 = vpop.f32.mrb[0].mxu0
        %1565 = vmatprep.mubr.f32.mxu0 %v390
        %1566 = vmatmul.mubr.f32.gmra.mrb[0].mxu0 %v266
        %v1567 = vpop.f32.mrb[0].mxu0
        %v1568 = vadd.f32 %v1343, %v1567
        %v1569 = vpop.f32.mrb[0].mxu0
        %1570 = vmatprep.mubr.f32.mxu0 %v393
        %1571 = vmatmul.mubr.f32.gmra.mrb[0].mxu0 %v268
        %v1572 = vpop.f32.mrb[0].mxu0
        %v1573 = vadd.f32 %v1348, %v1572
        %v1574 = vpop.f32.mrb[0].mxu0
        %1575 = vmatprep.mubr.f32.mxu0 %v395
        %1576 = vmatmul.mubr.f32.gmra.mrb[0].mxu0 %v269
        %v1577 = vpop.f32.mrb[0].mxu0
        %v1578 = vadd.f32 %v1353, %v1577
        %v1579 = vpop.f32.mrb[0].mxu0
        %1580 = vmatprep.mubr.f32.mxu0 %v398
        %1581 = vmatmul.mubr.f32.gmra.mrb[0].mxu0 %v271
        %v1582 = vpop.f32.mrb[0].mxu0
        %v1583 = vadd.f32 %v1358, %v1582
        %v1584 = vpop.f32.mrb[0].mxu0
        %1585 = vmatprep.mubr.f32.mxu0 %v400
        %1586 = vmatmul.mubr.f32.gmra.mrb[0].mxu0 %v272
        %v1587 = vpop.f32.mrb[0].mxu0
        %v1588 = vadd.f32 %v1363, %v1587
        %v1589 = vpop.f32.mrb[0].mxu0
        %1590 = vmatprep.mubr.f32.mxu0 %v403
        %1591 = vmatmul.mubr.f32.gmra.mrb[0].mxu0 %v274
        %v1592 = vpop.f32.mrb[0].mxu0
        %v1593 = vadd.f32 %v1368, %v1592
        %v1594 = vpop.f32.mrb[0].mxu0
        %1595 = vmatprep.mubr.f32.mxu0 %v405
        %1596 = vmatmul.mubr.f32.gmra.mrb[0].mxu0 %v275
        %v1597 = vpop.f32.mrb[0].mxu0
        %v1598 = vadd.f32 %v1373, %v1597
        %v1599 = vpop.f32.mrb[0].mxu0
        %1600 = vmatprep.mubr.f32.mxu0 %v408
        %1601 = vmatmul.mubr.f32.gmra.mrb[0].mxu0 %v277
        %v1602 = vpop.f32.mrb[0].mxu0
        %v1603 = vadd.f32 %v1378, %v1602
        %v1604 = vpop.f32.mrb[0].mxu0
        %1605 = vmatprep.mubr.f32.mxu0 %v410
        %1606 = vmatmul.mubr.f32.gmra.mrb[0].mxu0 %v278
        %v1607 = vpop.f32.mrb[0].mxu0
        %v1608 = vadd.f32 %v1383, %v1607
        %v1609 = vpop.f32.mrb[0].mxu0
        %1610 = vmatprep.mubr.f32.mxu0 %v413
        %1611 = vmatmul.mubr.f32.gmra.mrb[0].mxu0 %v280
        %v1612 = vpop.f32.mrb[0].mxu0
        %v1613 = vadd.f32 %v1388, %v1612
        %v1614 = vpop.f32.mrb[0].mxu0
        %1615 = vmatprep.mubr.f32.mxu0 %v415
        %1616 = vmatmul.mubr.f32.gmra.mrb[0].mxu0 %v281
        %v1617 = vpop.f32.mrb[0].mxu0
        %v1618 = vadd.f32 %v1393, %v1617
        %v1619 = vpop.f32.mrb[0].mxu0
        %1620 = vmatprep.mubr.f32.mxu0 %v418
        %1621 = vmatmul.mubr.f32.gmra.mrb[0].mxu0 %v283
        %v1622 = vpop.f32.mrb[0].mxu0
        %v1623 = vadd.f32 %v1398, %v1622
        %v1624 = vpop.f32.mrb[0].mxu0
        %1625 = vmatprep.mubr.f32.mxu0 %v420
        %1626 = vmatmul.mubr.f32.gmra.mrb[0].mxu0 %v284
        %v1627 = vpop.f32.mrb[0].mxu0
        %v1628 = vadd.f32 %v1403, %v1627
        %v1629 = vpop.f32.mrb[0].mxu0
        %1630 = vmatprep.mubr.f32.mxu0 %v571
        %1631 = vmatmul.mubr.f32.gmra.mrb[0].mxu0 %v286
        %v1632 = vpop.f32.mrb[0].mxu0
        %v1633 = vadd.f32 %v1408, %v1632
        %v1634 = vpop.f32.mrb[0].mxu0
        %1635 = vmatprep.mubr.f32.mxu0 %v573
        %1636 = vmatmul.mubr.f32.gmra.mrb[0].mxu0 %v287
        %v1637 = vpop.f32.mrb[0].mxu0
        %v1638 = vadd.f32 %v1413, %v1637
        %v1639 = vpop.f32.mrb[0].mxu0
        %1640 = vmatprep.mubr.f32.mxu0 %v588
        %1641 = vmatmul.mubr.f32.gmra.mrb[0].mxu0 %v289
        %v1642 = vpop.f32.mrb[0].mxu0
        %v1643 = vadd.f32 %v1418, %v1642
        %v1644 = vpop.f32.mrb[0].mxu0
        %1645 = vmatprep.mubr.f32.mxu0 %v590
        %1646 = vmatmul.mubr.f32.gmra.mrb[0].mxu0 %v290
        %v1647 = vpop.f32.mrb[0].mxu0
        %v1648 = vadd.f32 %v1423, %v1647
        %v1649 = vpop.f32.mrb[0].mxu0
        %1650 = vdwg.mxu0
        %1651 = vmatprep.subr.mxu0 0.0
        %1652 = vmatpush1.msra.mxu0 %v728
        %1653 = vmatprep.subr.mxu0 0.0
        %1654 = vmatpush1.msra.mxu0 %v729
        %1655 = vmatprep.subr.mxu0 0.0
        %1656 = vmatpush1.msra.mxu0 %v730
        %1657 = vmatprep.subr.mxu0 0.0
        %1658 = vmatpush1.msra.mxu0 %v731
        %1659 = vmatprep.subr.mxu0 0.0
        %1660 = vmatpush1.msra.mxu0 %v732
        %1661 = vmatprep.subr.mxu0 0.0
        %1662 = vmatpush1.msra.mxu0 %v733
        %1663 = vmatprep.subr.mxu0 0.0
        %1664 = vmatpush1.msra.mxu0 %v734
        %1665 = vmatprep.subr.mxu0 0.0
        %1666 = vmatpush1.msra.mxu0 %v735
        %1667 = vmatprep.subr.mxu0 0.0
        %1668 = vmatpush1.msra.mxu0 %v736
        %1669 = vmatprep.subr.mxu0 0.0
        %1670 = vmatpush1.msra.mxu0 %v737
        %1671 = vmatprep.subr.mxu0 0.0
        %1672 = vmatpush1.msra.mxu0 %v738
        %1673 = vmatprep.subr.mxu0 0.0
        %1674 = vmatpush1.msra.mxu0 %v739
        %1675 = vmatprep.subr.mxu0 0.0
        %1676 = vmatpush1.msra.mxu0 %v740
        %1677 = vmatprep.subr.mxu0 0.0
        %1678 = vmatpush1.msra.mxu0 %v741
        %1679 = vmatprep.subr.mxu0 0.0
        %1680 = vmatpush1.msra.mxu0 %v742
        %1681 = vmatprep.subr.mxu0 0.0
        %1682 = vmatpush1.msra.mxu0 %v743
        %1683 = vmatprep.subr.mxu0 0.0
        %1684 = vmatpush1.msra.mxu0 0.0
        %1685 = vmatprep.subr.mxu0 0.0
        %1686 = vmatpush1.msra.mxu0 0.0
        %1687 = vmatprep.subr.mxu0 0.0
        %1688 = vmatpush1.msra.mxu0 0.0
        %1689 = vmatprep.subr.mxu0 0.0
        %1690 = vmatpush1.msra.mxu0 0.0
        %1691 = vmatprep.subr.mxu0 0.0
        %1692 = vmatpush1.msra.mxu0 0.0
        %1693 = vmatprep.subr.mxu0 0.0
        %1694 = vmatpush1.msra.mxu0 0.0
        %1695 = vmatprep.subr.mxu0 0.0
        %1696 = vmatpush1.msra.mxu0 0.0
        %1697 = vmatprep.subr.mxu0 0.0
        %1698 = vmatpush1.msra.mxu0 0.0
        %1699 = vmatprep.subr.mxu0 0.0
        %1700 = vmatpush1.msra.mxu0 0.0
        %1701 = vmatprep.subr.mxu0 0.0
        %1702 = vmatpush1.msra.mxu0 0.0
        %1703 = vmatprep.subr.mxu0 0.0
        %1704 = vmatpush1.msra.mxu0 0.0
        %1705 = vmatprep.subr.mxu0 0.0
        %1706 = vmatpush1.msra.mxu0 0.0
        %1707 = vmatprep.subr.mxu0 0.0
        %1708 = vmatpush1.msra.mxu0 0.0
        %1709 = vmatprep.subr.mxu0 0.0
        %1710 = vmatpush1.msra.mxu0 0.0
        %1711 = vmatprep.subr.mxu0 0.0
        %1712 = vmatpush1.msra.mxu0 0.0
        %1713 = vmatprep.subr.mxu0 0.0
        %1714 = vmatpush1.msra.mxu0 0.0
        %1715 = vmatprep.mubr.f32.mxu0 0.0
        %1716 = vmatmul.mubr.f32.gmra.mrb[0].mxu0 %v466
        %v1717 = vpop.f32.mrb[0].mxu0
        %v1718 = vadd.f32 %v1493, %v1717
        %v1719 = vpop.f32.mrb[0].mxu0
        %1720 = vmatprep.mubr.f32.mxu0 0.0
        %1721 = vmatmul.mubr.f32.gmra.mrb[0].mxu0 %v468
        %v1722 = vpop.f32.mrb[0].mxu0
        %v1723 = vadd.f32 %v1498, %v1722
        %v1724 = vpop.f32.mrb[0].mxu0
        %1725 = vmatprep.mubr.f32.mxu0 0.0
        %1726 = vmatmul.mubr.f32.gmra.mrb[0].mxu0 %v471
        %v1727 = vpop.f32.mrb[0].mxu0
        %v1728 = vadd.f32 %v1503, %v1727
        %v1729 = vpop.f32.mrb[0].mxu0
        %1730 = vmatprep.mubr.f32.mxu0 0.0
        %1731 = vmatmul.mubr.f32.gmra.mrb[0].mxu0 %v473
        %v1732 = vpop.f32.mrb[0].mxu0
        %v1733 = vadd.f32 %v1508, %v1732
        %v1734 = vpop.f32.mrb[0].mxu0
        %1735 = vmatprep.mubr.f32.mxu0 0.0
        %1736 = vmatmul.mubr.f32.gmra.mrb[0].mxu0 %v476
        %v1737 = vpop.f32.mrb[0].mxu0
        %v1738 = vadd.f32 %v1513, %v1737
        %v1739 = vpop.f32.mrb[0].mxu0
        %1740 = vmatprep.mubr.f32.mxu0 0.0
        %1741 = vmatmul.mubr.f32.gmra.mrb[0].mxu0 %v478
        %v1742 = vpop.f32.mrb[0].mxu0
        %v1743 = vadd.f32 %v1518, %v1742
        %v1744 = vpop.f32.mrb[0].mxu0
        %1745 = vmatprep.mubr.f32.mxu0 0.0
        %1746 = vmatmul.mubr.f32.gmra.mrb[0].mxu0 %v481
        %v1747 = vpop.f32.mrb[0].mxu0
        %v1748 = vadd.f32 %v1523, %v1747
        %v1749 = vpop.f32.mrb[0].mxu0
        %1750 = vmatprep.mubr.f32.mxu0 0.0
        %1751 = vmatmul.mubr.f32.gmra.mrb[0].mxu0 %v483
        %v1752 = vpop.f32.mrb[0].mxu0
        %v1753 = vadd.f32 %v1528, %v1752
        %v1754 = vpop.f32.mrb[0].mxu0
        %1755 = vmatprep.mubr.f32.mxu0 0.0
        %1756 = vmatmul.mubr.f32.gmra.mrb[0].mxu0 %v486
        %v1757 = vpop.f32.mrb[0].mxu0
        %v1758 = vadd.f32 %v1533, %v1757
        %v1759 = vpop.f32.mrb[0].mxu0
        %1760 = vmatprep.mubr.f32.mxu0 0.0
        %1761 = vmatmul.mubr.f32.gmra.mrb[0].mxu0 %v488
        %v1762 = vpop.f32.mrb[0].mxu0
        %v1763 = vadd.f32 %v1538, %v1762
        %v1764 = vpop.f32.mrb[0].mxu0
        %1765 = vmatprep.mubr.f32.mxu0 0.0
        %1766 = vmatmul.mubr.f32.gmra.mrb[0].mxu0 %v491
        %v1767 = vpop.f32.mrb[0].mxu0
        %v1768 = vadd.f32 %v1543, %v1767
        %v1769 = vpop.f32.mrb[0].mxu0
        %1770 = vmatprep.mubr.f32.mxu0 0.0
        %1771 = vmatmul.mubr.f32.gmra.mrb[0].mxu0 %v493
        %v1772 = vpop.f32.mrb[0].mxu0
        %v1773 = vadd.f32 %v1548, %v1772
        %v1774 = vpop.f32.mrb[0].mxu0
        %1775 = vmatprep.mubr.f32.mxu0 0.0
        %1776 = vmatmul.mubr.f32.gmra.mrb[0].mxu0 %v496
        %v1777 = vpop.f32.mrb[0].mxu0
        %v1778 = vadd.f32 %v1553, %v1777
        %v1779 = vpop.f32.mrb[0].mxu0
        %1780 = vmatprep.mubr.f32.mxu0 0.0
        %1781 = vmatmul.mubr.f32.gmra.mrb[0].mxu0 %v498
        %v1782 = vpop.f32.mrb[0].mxu0
        %v1783 = vadd.f32 %v1558, %v1782
        %v1784 = vpop.f32.mrb[0].mxu0
        %1785 = vmatprep.mubr.f32.mxu0 0.0
        %1786 = vmatmul.mubr.f32.gmra.mrb[0].mxu0 %v501
        %v1787 = vpop.f32.mrb[0].mxu0
        %v1788 = vadd.f32 %v1563, %v1787
        %v1789 = vpop.f32.mrb[0].mxu0
        %1790 = vmatprep.mubr.f32.mxu0 0.0
        %1791 = vmatmul.mubr.f32.gmra.mrb[0].mxu0 %v503
        %v1792 = vpop.f32.mrb[0].mxu0
        %v1793 = vadd.f32 %v1568, %v1792
        %v1794 = vpop.f32.mrb[0].mxu0
        %1795 = vmatprep.mubr.f32.mxu0 0.0
        %1796 = vmatmul.mubr.f32.gmra.mrb[0].mxu0 %v506
        %v1797 = vpop.f32.mrb[0].mxu0
        %v1798 = vadd.f32 %v1573, %v1797
        %v1799 = vpop.f32.mrb[0].mxu0
        %1800 = vmatprep.mubr.f32.mxu0 0.0
        %1801 = vmatmul.mubr.f32.gmra.mrb[0].mxu0 %v508
        %v1802 = vpop.f32.mrb[0].mxu0
        %v1803 = vadd.f32 %v1578, %v1802
        %v1804 = vpop.f32.mrb[0].mxu0
        %1805 = vmatprep.mubr.f32.mxu0 0.0
        %1806 = vmatmul.mubr.f32.gmra.mrb[0].mxu0 %v511
        %v1807 = vpop.f32.mrb[0].mxu0
        %v1808 = vadd.f32 %v1583, %v1807
        %v1809 = vpop.f32.mrb[0].mxu0
        %1810 = vmatprep.mubr.f32.mxu0 0.0
        %1811 = vmatmul.mubr.f32.gmra.mrb[0].mxu0 %v513
        %v1812 = vpop.f32.mrb[0].mxu0
        %v1813 = vadd.f32 %v1588, %v1812
        %v1814 = vpop.f32.mrb[0].mxu0
        %1815 = vmatprep.mubr.f32.mxu0 0.0
        %1816 = vmatmul.mubr.f32.gmra.mrb[0].mxu0 %v516
        %v1817 = vpop.f32.mrb[0].mxu0
        %v1818 = vadd.f32 %v1593, %v1817
        %v1819 = vpop.f32.mrb[0].mxu0
        %1820 = vmatprep.mubr.f32.mxu0 0.0
        %1821 = vmatmul.mubr.f32.gmra.mrb[0].mxu0 %v518
        %v1822 = vpop.f32.mrb[0].mxu0
        %v1823 = vadd.f32 %v1598, %v1822
        %v1824 = vpop.f32.mrb[0].mxu0
        %1825 = vmatprep.mubr.f32.mxu0 0.0
        %1826 = vmatmul.mubr.f32.gmra.mrb[0].mxu0 %v521
        %v1827 = vpop.f32.mrb[0].mxu0
        %v1828 = vadd.f32 %v1603, %v1827
        %v1829 = vpop.f32.mrb[0].mxu0
        %1830 = vmatprep.mubr.f32.mxu0 0.0
        %1831 = vmatmul.mubr.f32.gmra.mrb[0].mxu0 %v523
        %v1832 = vpop.f32.mrb[0].mxu0
        %v1833 = vadd.f32 %v1608, %v1832
        %v1834 = vpop.f32.mrb[0].mxu0
        %1835 = vmatprep.mubr.f32.mxu0 0.0
        %1836 = vmatmul.mubr.f32.gmra.mrb[0].mxu0 %v526
        %v1837 = vpop.f32.mrb[0].mxu0
        %v1838 = vadd.f32 %v1613, %v1837
        %v1839 = vpop.f32.mrb[0].mxu0
        %1840 = vmatprep.mubr.f32.mxu0 0.0
        %1841 = vmatmul.mubr.f32.gmra.mrb[0].mxu0 %v528
        %v1842 = vpop.f32.mrb[0].mxu0
        %v1843 = vadd.f32 %v1618, %v1842
        %v1844 = vpop.f32.mrb[0].mxu0
        %1845 = vmatprep.mubr.f32.mxu0 0.0
        %1846 = vmatmul.mubr.f32.gmra.mrb[0].mxu0 %v531
        %v1847 = vpop.f32.mrb[0].mxu0
        %v1848 = vadd.f32 %v1623, %v1847
        %v1849 = vpop.f32.mrb[0].mxu0
        %1850 = vmatprep.mubr.f32.mxu0 0.0
        %1851 = vmatmul.mubr.f32.gmra.mrb[0].mxu0 %v533
        %v1852 = vpop.f32.mrb[0].mxu0
        %v1853 = vadd.f32 %v1628, %v1852
        %v1854 = vpop.f32.mrb[0].mxu0
        %1855 = vmatprep.mubr.f32.mxu0 0.0
        %1856 = vmatmul.mubr.f32.gmra.mrb[0].mxu0 %v578
        %v1857 = vpop.f32.mrb[0].mxu0
        %v1858 = vadd.f32 %v1633, %v1857
        %v1859 = vpop.f32.mrb[0].mxu0
        %1860 = vmatprep.mubr.f32.mxu0 0.0
        %1861 = vmatmul.mubr.f32.gmra.mrb[0].mxu0 %v580
        %v1862 = vpop.f32.mrb[0].mxu0
        %v1863 = vadd.f32 %v1638, %v1862
        %v1864 = vpop.f32.mrb[0].mxu0
        %1865 = vmatprep.mubr.f32.mxu0 0.0
        %1866 = vmatmul.mubr.f32.gmra.mrb[0].mxu0 %v595
        %v1867 = vpop.f32.mrb[0].mxu0
        %v1868 = vadd.f32 %v1643, %v1867
        %v1869 = vpop.f32.mrb[0].mxu0
        %1870 = vmatprep.mubr.f32.mxu0 0.0
        %1871 = vmatmul.mubr.f32.gmra.mrb[0].mxu0 %v597
        %v1872 = vpop.f32.mrb[0].mxu0
        %v1873 = vadd.f32 %v1648, %v1872
        %v1874 = vpop.f32.mrb[0].mxu0
        %1875 = vdwg.mxu0
        %v1876 = vmax.f32 %v1718, 0.0
        %v1877 = vmax.f32 %v1723, 0.0
        %v1878 = vmax.f32 %v1728, 0.0
        %v1879 = vmax.f32 %v1733, 0.0
        %v1880 = vmax.f32 %v1738, 0.0
        %v1881 = vmax.f32 %v1743, 0.0
        %v1882 = vmax.f32 %v1748, 0.0
        %v1883 = vmax.f32 %v1753, 0.0
        %v1884 = vmax.f32 %v1758, 0.0
        %v1885 = vmax.f32 %v1763, 0.0
        %v1886 = vmax.f32 %v1768, 0.0
        %v1887 = vmax.f32 %v1773, 0.0
        %v1888 = vmax.f32 %v1778, 0.0
        %v1889 = vmax.f32 %v1783, 0.0
        %v1890 = vmax.f32 %v1788, 0.0
        %v1891 = vmax.f32 %v1793, 0.0
        %v1892 = vmax.f32 %v1798, 0.0
        %v1893 = vmax.f32 %v1803, 0.0
        %v1894 = vmax.f32 %v1808, 0.0
        %v1895 = vmax.f32 %v1813, 0.0
        %v1896 = vmax.f32 %v1818, 0.0
        %v1897 = vmax.f32 %v1823, 0.0
        %v1898 = vmax.f32 %v1828, 0.0
        %v1899 = vmax.f32 %v1833, 0.0
        %v1900 = vmax.f32 %v1838, 0.0
        %v1901 = vmax.f32 %v1843, 0.0
        %v1902 = vmax.f32 %v1848, 0.0
        %v1903 = vmax.f32 %v1853, 0.0
        %v1904 = vmax.f32 %v1858, 0.0
        %v1905 = vmax.f32 %v1863, 0.0
        %v1906 = vmax.f32 %v1868, 0.0
        %v1907 = vmax.f32 %v1873, 0.0
        %1908 = vst [vmem:[#allocation2] sm:$0xff] 0.0
        %1909 = vst [vmem:[#allocation2 + $0x8] sm:$0xff] 0.0
        %1910 = vst [vmem:[#allocation2 + $0x10] sm:$0x3] 0.0
        %s1911 = scalar_lea.vmem [#allocation2], 408
        %1912 = vst [vmem:[%s1911] sm:$0xff] 0.0
        %1913 = vst [vmem:[%s1911 + $0x8] sm:$0xff] 0.0
        %1914 = vst [vmem:[%s1911 + $0x10] sm:$0x3] 0.0
        %1915 = vst [vmem:[#allocation2] sm:$0x1] 0.0
        %1916 = vst [vmem:[#allocation2 + $0x18] sm:$0x1] 0.0
        %1917 = vst [vmem:[#allocation2 + $0x30] sm:$0x1] 0.0
        %1918 = vst [vmem:[#allocation2 + $0x48] sm:$0x1] 0.0
        %1919 = vst [vmem:[#allocation2 + $0x60] sm:$0x1] 0.0
        %1920 = vst [vmem:[#allocation2 + $0x78] sm:$0x1] 0.0
        %1921 = vst [vmem:[#allocation2 + $0x90] sm:$0x1] 0.0
        %1922 = vst [vmem:[#allocation2 + $0xa8] sm:$0x1] 0.0
        %1923 = vst [vmem:[#allocation2 + $0xc0] sm:$0x1] 0.0
        %1924 = vst [vmem:[#allocation2 + $0xd8] sm:$0x1] 0.0
        %1925 = vst [vmem:[#allocation2 + $0xf0] sm:$0x1] 0.0
        %1926 = vst [vmem:[#allocation2 + $0x108] sm:$0x1] 0.0
        %1927 = vst [vmem:[#allocation2 + $0x120] sm:$0x1] 0.0
        %1928 = vst [vmem:[#allocation2 + $0x138] sm:$0x1] 0.0
        %1929 = vst [vmem:[#allocation2 + $0x150] sm:$0x1] 0.0
        %1930 = vst [vmem:[#allocation2 + $0x168] sm:$0x1] 0.0
        %1931 = vst [vmem:[#allocation2 + $0x180] sm:$0x1] 0.0
        %1932 = vst [vmem:[#allocation2 + $0x198] sm:$0x1] 0.0
        %1933 = vst [vmem:[#allocation2 + $0x11] sm:$0x1] 0.0
        %1934 = vst [vmem:[#allocation2 + $0x29] sm:$0x1] 0.0
        %1935 = vst [vmem:[#allocation2 + $0x41] sm:$0x1] 0.0
        %1936 = vst [vmem:[#allocation2 + $0x59] sm:$0x1] 0.0
        %1937 = vst [vmem:[#allocation2 + $0x71] sm:$0x1] 0.0
        %1938 = vst [vmem:[#allocation2 + $0x89] sm:$0x1] 0.0
        %1939 = vst [vmem:[#allocation2 + $0xa1] sm:$0x1] 0.0
        %1940 = vst [vmem:[#allocation2 + $0xb9] sm:$0x1] 0.0
        %1941 = vst [vmem:[#allocation2 + $0xd1] sm:$0x1] 0.0
        %1942 = vst [vmem:[#allocation2 + $0xe9] sm:$0x1] 0.0
        %1943 = vst [vmem:[#allocation2 + $0x101] sm:$0x1] 0.0
        %1944 = vst [vmem:[#allocation2 + $0x119] sm:$0x1] 0.0
        %1945 = vst [vmem:[#allocation2 + $0x131] sm:$0x1] 0.0
        %1946 = vst [vmem:[#allocation2 + $0x149] sm:$0x1] 0.0
        %1947 = vst [vmem:[#allocation2 + $0x161] sm:$0x1] 0.0
        %1948 = vst [vmem:[#allocation2 + $0x179] sm:$0x1] 0.0
        %1949 = vst [vmem:[#allocation2 + $0x191] sm:$0x1] 0.0
        %1950 = vst [vmem:[#allocation2 + $0x1a9] sm:$0x1] 0.0
        %s1951 = scalar_lea.vmem [#allocation2], 24
        %1952 = vst [vmem:[%s1951 + $0x1] sm:$0xff] %v1876
        %1953 = vst [vmem:[%s1951 + $0x9] sm:$0xff] %v1877
        %1954 = vst [vmem:[%s1951 + $0x19] sm:$0xff] %v1878
        %1955 = vst [vmem:[%s1951 + $0x21] sm:$0xff] %v1879
        %1956 = vst [vmem:[%s1951 + $0x31] sm:$0xff] %v1880
        %1957 = vst [vmem:[%s1951 + $0x39] sm:$0xff] %v1881
        %1958 = vst [vmem:[%s1951 + $0x49] sm:$0xff] %v1882
        %1959 = vst [vmem:[%s1951 + $0x51] sm:$0xff] %v1883
        %1960 = vst [vmem:[%s1951 + $0x61] sm:$0xff] %v1884
        %1961 = vst [vmem:[%s1951 + $0x69] sm:$0xff] %v1885
        %1962 = vst [vmem:[%s1951 + $0x79] sm:$0xff] %v1886
        %1963 = vst [vmem:[%s1951 + $0x81] sm:$0xff] %v1887
        %1964 = vst [vmem:[%s1951 + $0x91] sm:$0xff] %v1888
        %1965 = vst [vmem:[%s1951 + $0x99] sm:$0xff] %v1889
        %1966 = vst [vmem:[%s1951 + $0xa9] sm:$0xff] %v1890
        %1967 = vst [vmem:[%s1951 + $0xb1] sm:$0xff] %v1891
        %1968 = vst [vmem:[%s1951 + $0xc1] sm:$0xff] %v1892
        %1969 = vst [vmem:[%s1951 + $0xc9] sm:$0xff] %v1893
        %1970 = vst [vmem:[%s1951 + $0xd9] sm:$0xff] %v1894
        %1971 = vst [vmem:[%s1951 + $0xe1] sm:$0xff] %v1895
        %1972 = vst [vmem:[%s1951 + $0xf1] sm:$0xff] %v1896
        %1973 = vst [vmem:[%s1951 + $0xf9] sm:$0xff] %v1897
        %1974 = vst [vmem:[%s1951 + $0x109] sm:$0xff] %v1898
        %1975 = vst [vmem:[%s1951 + $0x111] sm:$0xff] %v1899
        %1976 = vst [vmem:[%s1951 + $0x121] sm:$0xff] %v1900
        %1977 = vst [vmem:[%s1951 + $0x129] sm:$0xff] %v1901
        %1978 = vst [vmem:[%s1951 + $0x139] sm:$0xff] %v1902
        %1979 = vst [vmem:[%s1951 + $0x141] sm:$0xff] %v1903
        %1980 = vst [vmem:[%s1951 + $0x151] sm:$0xff] %v1904
        %1981 = vst [vmem:[%s1951 + $0x159] sm:$0xff] %v1905
        %1982 = vst [vmem:[%s1951 + $0x169] sm:$0xff] %v1906
        %1983 = vst [vmem:[%s1951 + $0x171] sm:$0xff] %v1907
        %v1984 = vld [vmem:[#allocation2] sm:$0xff]
        %v1985 = vld [vmem:[#allocation2 + $0x8] sm:$0xff]
        %v1986 = vld [vmem:[#allocation2 + $0x10] sm:$0x3]
        %v1987 = vld [vmem:[#allocation2 + $0x18] sm:$0xff]
        %v1988 = vld [vmem:[#allocation2 + $0x20] sm:$0xff]
        %v1989 = vld [vmem:[#allocation2 + $0x28] sm:$0x3]
        %v1990 = vld [vmem:[#allocation2 + $0x30] sm:$0xff]
        %v1991 = vld [vmem:[#allocation2 + $0x38] sm:$0xff]
        %v1992 = vld [vmem:[#allocation2 + $0x40] sm:$0x3]
        %v1993 = vld [vmem:[#allocation2 + $0x48] sm:$0xff]
        %v1994 = vld [vmem:[#allocation2 + $0x50] sm:$0xff]
        %v1995 = vld [vmem:[#allocation2 + $0x58] sm:$0x3]
        %v1996 = vld [vmem:[#allocation2 + $0x60] sm:$0xff]
        %v1997 = vld [vmem:[#allocation2 + $0x68] sm:$0xff]
        %v1998 = vld [vmem:[#allocation2 + $0x70] sm:$0x3]
        %v1999 = vld [vmem:[#allocation2 + $0x78] sm:$0xff]
        %v2000 = vld [vmem:[#allocation2 + $0x80] sm:$0xff]
        %v2001 = vld [vmem:[#allocation2 + $0x88] sm:$0x3]
        %v2002 = vld [vmem:[#allocation2 + $0x90] sm:$0xff]
        %v2003 = vld [vmem:[#allocation2 + $0x98] sm:$0xff]
        %v2004 = vld [vmem:[#allocation2 + $0xa0] sm:$0x3]
        %v2005 = vld [vmem:[#allocation2 + $0xa8] sm:$0xff]
        %v2006 = vld [vmem:[#allocation2 + $0xb0] sm:$0xff]
        %v2007 = vld [vmem:[#allocation2 + $0xb8] sm:$0x3]
        %v2008 = vld [vmem:[#allocation2 + $0xc0] sm:$0xff]
        %v2009 = vld [vmem:[#allocation2 + $0xc8] sm:$0xff]
        %v2010 = vld [vmem:[#allocation2 + $0xd0] sm:$0x3]
        %v2011 = vld [vmem:[#allocation2 + $0xd8] sm:$0xff]
        %v2012 = vld [vmem:[#allocation2 + $0xe0] sm:$0xff]
        %v2013 = vld [vmem:[#allocation2 + $0xe8] sm:$0x3]
        %v2014 = vld [vmem:[#allocation2 + $0xf0] sm:$0xff]
        %v2015 = vld [vmem:[#allocation2 + $0xf8] sm:$0xff]
        %v2016 = vld [vmem:[#allocation2 + $0x100] sm:$0x3]
        %v2017 = vld [vmem:[#allocation2 + $0x108] sm:$0xff]
        %v2018 = vld [vmem:[#allocation2 + $0x110] sm:$0xff]
        %v2019 = vld [vmem:[#allocation2 + $0x118] sm:$0x3]
        %v2020 = vld [vmem:[#allocation2 + $0x120] sm:$0xff]
        %v2021 = vld [vmem:[#allocation2 + $0x128] sm:$0xff]
        %v2022 = vld [vmem:[#allocation2 + $0x130] sm:$0x3]
        %v2023 = vld [vmem:[#allocation2 + $0x138] sm:$0xff]
        %v2024 = vld [vmem:[#allocation2 + $0x140] sm:$0xff]
        %v2025 = vld [vmem:[#allocation2 + $0x148] sm:$0x3]
        %v2026 = vld [vmem:[#allocation2 + $0x150] sm:$0xff]
        %v2027 = vld [vmem:[#allocation2 + $0x158] sm:$0xff]
        %v2028 = vld [vmem:[#allocation2 + $0x160] sm:$0x3]
        %v2029 = vld [vmem:[#allocation2 + $0x168] sm:$0xff]
        %v2030 = vld [vmem:[#allocation2 + $0x170] sm:$0xff]
        %v2031 = vld [vmem:[#allocation2 + $0x178] sm:$0x3]
        %v2032 = vld [vmem:[#allocation2 + $0x180] sm:$0xff]
        %v2033 = vld [vmem:[#allocation2 + $0x188] sm:$0xff]
        %v2034 = vld [vmem:[#allocation2 + $0x190] sm:$0x3]
        %v2035 = vld [vmem:[#allocation2 + $0x198] sm:$0xff]
        %v2036 = vld [vmem:[#allocation2 + $0x1a0] sm:$0xff]
        %v2037 = vld [vmem:[#allocation2 + $0x1a8] sm:$0x3]
        %v2086 = vrot.slane %v1984, 1
        %v2087 = vrot.slane %v1985, 1
        %v2088 = vsel %vm340, %v2086, %v2087
        %v2089 = vrot.slane %v1986, 1
        %v2090 = vsel %vm340, %v2087, %v2089
        %v2091 = vrot.slane %v1987, 1
        %v2092 = vrot.slane %v1988, 1
        %v2093 = vsel %vm340, %v2091, %v2092
        %v2094 = vrot.slane %v1989, 1
        %v2095 = vsel %vm340, %v2092, %v2094
        %v2096 = vrot.slane %v1990, 1
        %v2097 = vrot.slane %v1991, 1
        %v2098 = vsel %vm340, %v2096, %v2097
        %v2099 = vrot.slane %v1992, 1
        %v2100 = vsel %vm340, %v2097, %v2099
        %v2101 = vrot.slane %v1993, 1
        %v2102 = vrot.slane %v1994, 1
        %v2103 = vsel %vm340, %v2101, %v2102
        %v2104 = vrot.slane %v1995, 1
        %v2105 = vsel %vm340, %v2102, %v2104
        %v2106 = vrot.slane %v1996, 1
        %v2107 = vrot.slane %v1997, 1
        %v2108 = vsel %vm340, %v2106, %v2107
        %v2109 = vrot.slane %v1998, 1
        %v2110 = vsel %vm340, %v2107, %v2109
        %v2111 = vrot.slane %v1999, 1
        %v2112 = vrot.slane %v2000, 1
        %v2113 = vsel %vm340, %v2111, %v2112
        %v2114 = vrot.slane %v2001, 1
        %v2115 = vsel %vm340, %v2112, %v2114
        %v2116 = vrot.slane %v2002, 1
        %v2117 = vrot.slane %v2003, 1
        %v2118 = vsel %vm340, %v2116, %v2117
        %v2119 = vrot.slane %v2004, 1
        %v2120 = vsel %vm340, %v2117, %v2119
        %v2121 = vrot.slane %v2005, 1
        %v2122 = vrot.slane %v2006, 1
        %v2123 = vsel %vm340, %v2121, %v2122
        %v2124 = vrot.slane %v2007, 1
        %v2125 = vsel %vm340, %v2122, %v2124
        %v2126 = vrot.slane %v2008, 1
        %v2127 = vrot.slane %v2009, 1
        %v2128 = vsel %vm340, %v2126, %v2127
        %v2129 = vrot.slane %v2010, 1
        %v2130 = vsel %vm340, %v2127, %v2129
        %v2131 = vrot.slane %v2011, 1
        %v2132 = vrot.slane %v2012, 1
        %v2133 = vsel %vm340, %v2131, %v2132
        %v2134 = vrot.slane %v2013, 1
        %v2135 = vsel %vm340, %v2132, %v2134
        %v2136 = vrot.slane %v2014, 1
        %v2137 = vrot.slane %v2015, 1
        %v2138 = vsel %vm340, %v2136, %v2137
        %v2139 = vrot.slane %v2016, 1
        %v2140 = vsel %vm340, %v2137, %v2139
        %v2141 = vrot.slane %v2017, 1
        %v2142 = vrot.slane %v2018, 1
        %v2143 = vsel %vm340, %v2141, %v2142
        %v2144 = vrot.slane %v2019, 1
        %v2145 = vsel %vm340, %v2142, %v2144
        %v2146 = vrot.slane %v2020, 1
        %v2147 = vrot.slane %v2021, 1
        %v2148 = vsel %vm340, %v2146, %v2147
        %v2149 = vrot.slane %v2022, 1
        %v2150 = vsel %vm340, %v2147, %v2149
        %v2151 = vrot.slane %v2023, 1
        %v2152 = vrot.slane %v2024, 1
        %v2153 = vsel %vm340, %v2151, %v2152
        %v2154 = vrot.slane %v2025, 1
        %v2155 = vsel %vm340, %v2152, %v2154
        %v2156 = vrot.slane %v2026, 1
        %v2157 = vrot.slane %v2027, 1
        %v2158 = vsel %vm340, %v2156, %v2157
        %v2159 = vrot.slane %v2028, 1
        %v2160 = vsel %vm340, %v2157, %v2159
        %v2161 = vrot.slane %v2029, 1
        %v2162 = vrot.slane %v2030, 1
        %v2163 = vsel %vm340, %v2161, %v2162
        %v2164 = vrot.slane %v2031, 1
        %v2165 = vsel %vm340, %v2162, %v2164
        %v2198 = vrot.slane %v1984, 2
        %v2199 = vrot.slane %v1985, 2
        %v2200 = vsel %vm453, %v2198, %v2199
        %v2201 = vrot.slane %v1986, 2
        %v2202 = vsel %vm453, %v2199, %v2201
        %v2203 = vrot.slane %v1987, 2
        %v2204 = vrot.slane %v1988, 2
        %v2205 = vsel %vm453, %v2203, %v2204
        %v2206 = vrot.slane %v1989, 2
        %v2207 = vsel %vm453, %v2204, %v2206
        %v2208 = vrot.slane %v1990, 2
        %v2209 = vrot.slane %v1991, 2
        %v2210 = vsel %vm453, %v2208, %v2209
        %v2211 = vrot.slane %v1992, 2
        %v2212 = vsel %vm453, %v2209, %v2211
        %v2213 = vrot.slane %v1993, 2
        %v2214 = vrot.slane %v1994, 2
        %v2215 = vsel %vm453, %v2213, %v2214
        %v2216 = vrot.slane %v1995, 2
        %v2217 = vsel %vm453, %v2214, %v2216
        %v2218 = vrot.slane %v1996, 2
        %v2219 = vrot.slane %v1997, 2
        %v2220 = vsel %vm453, %v2218, %v2219
        %v2221 = vrot.slane %v1998, 2
        %v2222 = vsel %vm453, %v2219, %v2221
        %v2223 = vrot.slane %v1999, 2
        %v2224 = vrot.slane %v2000, 2
        %v2225 = vsel %vm453, %v2223, %v2224
        %v2226 = vrot.slane %v2001, 2
        %v2227 = vsel %vm453, %v2224, %v2226
        %v2228 = vrot.slane %v2002, 2
        %v2229 = vrot.slane %v2003, 2
        %v2230 = vsel %vm453, %v2228, %v2229
        %v2231 = vrot.slane %v2004, 2
        %v2232 = vsel %vm453, %v2229, %v2231
        %v2233 = vrot.slane %v2005, 2
        %v2234 = vrot.slane %v2006, 2
        %v2235 = vsel %vm453, %v2233, %v2234
        %v2236 = vrot.slane %v2007, 2
        %v2237 = vsel %vm453, %v2234, %v2236
        %v2238 = vrot.slane %v2008, 2
        %v2239 = vrot.slane %v2009, 2
        %v2240 = vsel %vm453, %v2238, %v2239
        %v2241 = vrot.slane %v2010, 2
        %v2242 = vsel %vm453, %v2239, %v2241
        %v2243 = vrot.slane %v2011, 2
        %v2244 = vrot.slane %v2012, 2
        %v2245 = vsel %vm453, %v2243, %v2244
        %v2246 = vrot.slane %v2013, 2
        %v2247 = vsel %vm453, %v2244, %v2246
        %v2248 = vrot.slane %v2014, 2
        %v2249 = vrot.slane %v2015, 2
        %v2250 = vsel %vm453, %v2248, %v2249
        %v2251 = vrot.slane %v2016, 2
        %v2252 = vsel %vm453, %v2249, %v2251
        %v2253 = vrot.slane %v2017, 2
        %v2254 = vrot.slane %v2018, 2
        %v2255 = vsel %vm453, %v2253, %v2254
        %v2256 = vrot.slane %v2019, 2
        %v2257 = vsel %vm453, %v2254, %v2256
        %v2258 = vrot.slane %v2020, 2
        %v2259 = vrot.slane %v2021, 2
        %v2260 = vsel %vm453, %v2258, %v2259
        %v2261 = vrot.slane %v2022, 2
        %v2262 = vsel %vm453, %v2259, %v2261
        %v2263 = vrot.slane %v2023, 2
        %v2264 = vrot.slane %v2024, 2
        %v2265 = vsel %vm453, %v2263, %v2264
        %v2266 = vrot.slane %v2025, 2
        %v2267 = vsel %vm453, %v2264, %v2266
        %v2268 = vrot.slane %v2026, 2
        %v2269 = vrot.slane %v2027, 2
        %v2270 = vsel %vm453, %v2268, %v2269
        %v2271 = vrot.slane %v2028, 2
        %v2272 = vsel %vm453, %v2269, %v2271
        %v2273 = vrot.slane %v2029, 2
        %v2274 = vrot.slane %v2030, 2
        %v2275 = vsel %vm453, %v2273, %v2274
        %v2276 = vrot.slane %v2031, 2
        %v2277 = vsel %vm453, %v2274, %v2276
        %v2313 = vrot.slane %v2032, 1
        %v2314 = vrot.slane %v2033, 1
        %v2315 = vsel %vm340, %v2313, %v2314
        %v2316 = vrot.slane %v2034, 1
        %v2317 = vsel %vm340, %v2314, %v2316
        %v2320 = vrot.slane %v2032, 2
        %v2321 = vrot.slane %v2033, 2
        %v2322 = vsel %vm453, %v2320, %v2321
        %v2323 = vrot.slane %v2034, 2
        %v2324 = vsel %vm453, %v2321, %v2323
        %v2330 = vrot.slane %v2035, 1
        %v2331 = vrot.slane %v2036, 1
        %v2332 = vsel %vm340, %v2330, %v2331
        %v2333 = vrot.slane %v2037, 1
        %v2334 = vsel %vm340, %v2331, %v2333
        %v2337 = vrot.slane %v2035, 2
        %v2338 = vrot.slane %v2036, 2
        %v2339 = vsel %vm453, %v2337, %v2338
        %v2340 = vrot.slane %v2037, 2
        %v2341 = vsel %vm453, %v2338, %v2340
        %v2344 = vld [vmem:[#allocation3] sm:$0xff]
        %v2345 = vld [vmem:[#allocation3 + $0x8] sm:$0xff]
        %v2346 = vld [vmem:[#allocation3 + $0x10] sm:$0xff]
        %v2347 = vld [vmem:[#allocation3 + $0x18] sm:$0xff]
        %v2348 = vld [vmem:[#allocation3 + $0x20] sm:$0xff]
        %v2349 = vld [vmem:[#allocation3 + $0x28] sm:$0xff]
        %v2350 = vld [vmem:[#allocation3 + $0x30] sm:$0xff]
        %v2351 = vld [vmem:[#allocation3 + $0x38] sm:$0xff]
        %v2352 = vld [vmem:[#allocation3 + $0x40] sm:$0xff]
        %v2353 = vld [vmem:[#allocation3 + $0x48] sm:$0xff]
        %v2354 = vld [vmem:[#allocation3 + $0x50] sm:$0xff]
        %v2355 = vld [vmem:[#allocation3 + $0x58] sm:$0xff]
        %v2356 = vld [vmem:[#allocation3 + $0x60] sm:$0xff]
        %v2357 = vld [vmem:[#allocation3 + $0x68] sm:$0xff]
        %v2358 = vld [vmem:[#allocation3 + $0x70] sm:$0xff]
        %v2359 = vld [vmem:[#allocation3 + $0x78] sm:$0xff]
        %v2360 = vld [vmem:[#allocation3 + $0x80] sm:$0xff]
        %v2361 = vld [vmem:[#allocation3 + $0x88] sm:$0xff]
        %v2362 = vld [vmem:[#allocation3 + $0x90] sm:$0xff]
        %v2363 = vld [vmem:[#allocation3 + $0x98] sm:$0xff]
        %v2364 = vld [vmem:[#allocation3 + $0xa0] sm:$0xff]
        %v2365 = vld [vmem:[#allocation3 + $0xa8] sm:$0xff]
        %v2366 = vld [vmem:[#allocation3 + $0xb0] sm:$0xff]
        %v2367 = vld [vmem:[#allocation3 + $0xb8] sm:$0xff]
        %v2368 = vld [vmem:[#allocation3 + $0xc0] sm:$0xff]
        %v2369 = vld [vmem:[#allocation3 + $0xc8] sm:$0xff]
        %v2370 = vld [vmem:[#allocation3 + $0xd0] sm:$0xff]
        %v2371 = vld [vmem:[#allocation3 + $0xd8] sm:$0xff]
        %v2372 = vld [vmem:[#allocation3 + $0xe0] sm:$0xff]
        %v2373 = vld [vmem:[#allocation3 + $0xe8] sm:$0xff]
        %v2374 = vld [vmem:[#allocation3 + $0xf0] sm:$0xff]
        %v2375 = vld [vmem:[#allocation3 + $0xf8] sm:$0xff]
        %v2376 = vld [vmem:[#allocation3 + $0x100] sm:$0xff]
        %v2377 = vld [vmem:[#allocation3 + $0x108] sm:$0xff]
        %v2378 = vld [vmem:[#allocation3 + $0x110] sm:$0xff]
        %v2379 = vld [vmem:[#allocation3 + $0x118] sm:$0xff]
        %v2380 = vld [vmem:[#allocation3 + $0x120] sm:$0xff]
        %v2381 = vld [vmem:[#allocation3 + $0x128] sm:$0xff]
        %v2382 = vld [vmem:[#allocation3 + $0x130] sm:$0xff]
        %v2383 = vld [vmem:[#allocation3 + $0x138] sm:$0xff]
        %v2384 = vld [vmem:[#allocation3 + $0x140] sm:$0xff]
        %v2385 = vld [vmem:[#allocation3 + $0x148] sm:$0xff]
        %v2386 = vld [vmem:[#allocation3 + $0x150] sm:$0xff]
        %v2387 = vld [vmem:[#allocation3 + $0x158] sm:$0xff]
        %v2388 = vld [vmem:[#allocation3 + $0x160] sm:$0xff]
        %v2389 = vld [vmem:[#allocation3 + $0x168] sm:$0xff]
        %v2390 = vld [vmem:[#allocation3 + $0x170] sm:$0xff]
        %v2391 = vld [vmem:[#allocation3 + $0x178] sm:$0xff]
        %v2392 = vld [vmem:[#allocation3 + $0x180] sm:$0xff]
        %v2393 = vld [vmem:[#allocation3 + $0x188] sm:$0xff]
        %v2394 = vld [vmem:[#allocation3 + $0x190] sm:$0xff]
        %v2395 = vld [vmem:[#allocation3 + $0x198] sm:$0xff]
        %v2396 = vld [vmem:[#allocation3 + $0x1a0] sm:$0xff]
        %v2397 = vld [vmem:[#allocation3 + $0x1a8] sm:$0xff]
        %v2398 = vld [vmem:[#allocation3 + $0x1b0] sm:$0xff]
        %v2399 = vld [vmem:[#allocation3 + $0x1b8] sm:$0xff]
        %v2400 = vld [vmem:[#allocation3 + $0x1c0] sm:$0xff]
        %v2401 = vld [vmem:[#allocation3 + $0x1c8] sm:$0xff]
        %v2402 = vld [vmem:[#allocation3 + $0x1d0] sm:$0xff]
        %v2403 = vld [vmem:[#allocation3 + $0x1d8] sm:$0xff]
        %v2404 = vld [vmem:[#allocation3 + $0x1e0] sm:$0xff]
        %v2405 = vld [vmem:[#allocation3 + $0x1e8] sm:$0xff]
        %v2406 = vld [vmem:[#allocation3 + $0x1f0] sm:$0xff]
        %v2407 = vld [vmem:[#allocation3 + $0x1f8] sm:$0xff]
        %v2408 = vld [vmem:[#allocation3 + $0x200] sm:$0xff]
        %v2409 = vld [vmem:[#allocation3 + $0x208] sm:$0xff]
        %v2410 = vld [vmem:[#allocation3 + $0x210] sm:$0xff]
        %v2411 = vld [vmem:[#allocation3 + $0x218] sm:$0xff]
        %v2412 = vld [vmem:[#allocation3 + $0x220] sm:$0xff]
        %v2413 = vld [vmem:[#allocation3 + $0x228] sm:$0xff]
        %v2414 = vld [vmem:[#allocation3 + $0x230] sm:$0xff]
        %v2415 = vld [vmem:[#allocation3 + $0x238] sm:$0xff]
        %v2416 = vld [vmem:[#allocation3 + $0x240] sm:$0xff]
        %v2417 = vld [vmem:[#allocation3 + $0x248] sm:$0xff]
        %v2418 = vld [vmem:[#allocation3 + $0x250] sm:$0xff]
        %v2419 = vld [vmem:[#allocation3 + $0x258] sm:$0xff]
        %v2420 = vld [vmem:[#allocation3 + $0x260] sm:$0xff]
        %v2421 = vld [vmem:[#allocation3 + $0x268] sm:$0xff]
        %v2422 = vld [vmem:[#allocation3 + $0x270] sm:$0xff]
        %v2423 = vld [vmem:[#allocation3 + $0x278] sm:$0xff]
        %v2424 = vld [vmem:[#allocation3 + $0x280] sm:$0xff]
        %v2425 = vld [vmem:[#allocation3 + $0x288] sm:$0xff]
        %v2426 = vld [vmem:[#allocation3 + $0x290] sm:$0xff]
        %v2427 = vld [vmem:[#allocation3 + $0x298] sm:$0xff]
        %v2428 = vld [vmem:[#allocation3 + $0x2a0] sm:$0xff]
        %v2429 = vld [vmem:[#allocation3 + $0x2a8] sm:$0xff]
        %v2430 = vld [vmem:[#allocation3 + $0x2b0] sm:$0xff]
        %v2431 = vld [vmem:[#allocation3 + $0x2b8] sm:$0xff]
        %v2432 = vld [vmem:[#allocation3 + $0x2c0] sm:$0xff]
        %v2433 = vld [vmem:[#allocation3 + $0x2c8] sm:$0xff]
        %v2434 = vld [vmem:[#allocation3 + $0x2d0] sm:$0xff]
        %v2435 = vld [vmem:[#allocation3 + $0x2d8] sm:$0xff]
        %v2436 = vld [vmem:[#allocation3 + $0x2e0] sm:$0xff]
        %v2437 = vld [vmem:[#allocation3 + $0x2e8] sm:$0xff]
        %v2438 = vld [vmem:[#allocation3 + $0x2f0] sm:$0xff]
        %v2439 = vld [vmem:[#allocation3 + $0x2f8] sm:$0xff]
        %v2440 = vld [vmem:[#allocation3 + $0x300] sm:$0xff]
        %v2441 = vld [vmem:[#allocation3 + $0x308] sm:$0xff]
        %v2442 = vld [vmem:[#allocation3 + $0x310] sm:$0xff]
        %v2443 = vld [vmem:[#allocation3 + $0x318] sm:$0xff]
        %v2444 = vld [vmem:[#allocation3 + $0x320] sm:$0xff]
        %v2445 = vld [vmem:[#allocation3 + $0x328] sm:$0xff]
        %v2446 = vld [vmem:[#allocation3 + $0x330] sm:$0xff]
        %v2447 = vld [vmem:[#allocation3 + $0x338] sm:$0xff]
        %v2448 = vld [vmem:[#allocation3 + $0x340] sm:$0xff]
        %v2449 = vld [vmem:[#allocation3 + $0x348] sm:$0xff]
        %v2450 = vld [vmem:[#allocation3 + $0x350] sm:$0xff]
        %v2451 = vld [vmem:[#allocation3 + $0x358] sm:$0xff]
        %v2452 = vld [vmem:[#allocation3 + $0x360] sm:$0xff]
        %v2453 = vld [vmem:[#allocation3 + $0x368] sm:$0xff]
        %v2454 = vld [vmem:[#allocation3 + $0x370] sm:$0xff]
        %v2455 = vld [vmem:[#allocation3 + $0x378] sm:$0xff]
        %v2456 = vld [vmem:[#allocation3 + $0x380] sm:$0xff]
        %v2457 = vld [vmem:[#allocation3 + $0x388] sm:$0xff]
        %v2458 = vld [vmem:[#allocation3 + $0x390] sm:$0xff]
        %v2459 = vld [vmem:[#allocation3 + $0x398] sm:$0xff]
        %v2460 = vld [vmem:[#allocation3 + $0x3a0] sm:$0xff]
        %v2461 = vld [vmem:[#allocation3 + $0x3a8] sm:$0xff]
        %v2462 = vld [vmem:[#allocation3 + $0x3b0] sm:$0xff]
        %v2463 = vld [vmem:[#allocation3 + $0x3b8] sm:$0xff]
        %v2464 = vld [vmem:[#allocation3 + $0x3c0] sm:$0xff]
        %v2465 = vld [vmem:[#allocation3 + $0x3c8] sm:$0xff]
        %v2466 = vld [vmem:[#allocation3 + $0x3d0] sm:$0xff]
        %v2467 = vld [vmem:[#allocation3 + $0x3d8] sm:$0xff]
        %v2468 = vld [vmem:[#allocation3 + $0x3e0] sm:$0xff]
        %v2469 = vld [vmem:[#allocation3 + $0x3e8] sm:$0xff]
        %v2470 = vld [vmem:[#allocation3 + $0x3f0] sm:$0xff]
        %v2471 = vld [vmem:[#allocation3 + $0x3f8] sm:$0xff]
        %v2472 = vld [vmem:[#allocation3 + $0x400] sm:$0xff]
        %v2473 = vld [vmem:[#allocation3 + $0x408] sm:$0xff]
        %v2474 = vld [vmem:[#allocation3 + $0x410] sm:$0xff]
        %v2475 = vld [vmem:[#allocation3 + $0x418] sm:$0xff]
        %v2476 = vld [vmem:[#allocation3 + $0x420] sm:$0xff]
        %v2477 = vld [vmem:[#allocation3 + $0x428] sm:$0xff]
        %v2478 = vld [vmem:[#allocation3 + $0x430] sm:$0xff]
        %v2479 = vld [vmem:[#allocation3 + $0x438] sm:$0xff]
        %v2480 = vld [vmem:[#allocation3 + $0x440] sm:$0xff]
        %v2481 = vld [vmem:[#allocation3 + $0x448] sm:$0xff]
        %v2482 = vld [vmem:[#allocation3 + $0x450] sm:$0xff]
        %v2483 = vld [vmem:[#allocation3 + $0x458] sm:$0xff]
        %v2484 = vld [vmem:[#allocation3 + $0x460] sm:$0xff]
        %v2485 = vld [vmem:[#allocation3 + $0x468] sm:$0xff]
        %v2486 = vld [vmem:[#allocation3 + $0x470] sm:$0xff]
        %v2487 = vld [vmem:[#allocation3 + $0x478] sm:$0xff]
        %v2488 = vld [vmem:[%s4] sm:$0x1]
        %v2490 = vlaneseq
        %v2491 = vshrl.u32 %v2490, 7
        %v2492 = vsub.s32 0, %v2491
        %v2493 = vrot.slane %v2488, %v2492
        %2495 = vmatprep.subr.mxu0 0.0
        %2496 = vmatpush1.msra.mxu0 %v2344
        %2497 = vmatprep.subr.mxu0 0.0
        %2498 = vmatpush1.msra.mxu0 %v2345
        %2499 = vmatprep.subr.mxu0 0.0
        %2500 = vmatpush1.msra.mxu0 %v2346
        %2501 = vmatprep.subr.mxu0 0.0
        %2502 = vmatpush1.msra.mxu0 %v2347
        %2503 = vmatprep.subr.mxu0 0.0
        %2504 = vmatpush1.msra.mxu0 %v2348
        %2505 = vmatprep.subr.mxu0 0.0
        %2506 = vmatpush1.msra.mxu0 %v2349
        %2507 = vmatprep.subr.mxu0 0.0
        %2508 = vmatpush1.msra.mxu0 %v2350
        %2509 = vmatprep.subr.mxu0 0.0
        %2510 = vmatpush1.msra.mxu0 %v2351
        %2511 = vmatprep.subr.mxu0 0.0
        %2512 = vmatpush1.msra.mxu0 %v2352
        %2513 = vmatprep.subr.mxu0 0.0
        %2514 = vmatpush1.msra.mxu0 %v2353
        %2515 = vmatprep.subr.mxu0 0.0
        %2516 = vmatpush1.msra.mxu0 %v2354
        %2517 = vmatprep.subr.mxu0 0.0
        %2518 = vmatpush1.msra.mxu0 %v2355
        %2519 = vmatprep.subr.mxu0 0.0
        %2520 = vmatpush1.msra.mxu0 %v2356
        %2521 = vmatprep.subr.mxu0 0.0
        %2522 = vmatpush1.msra.mxu0 %v2357
        %2523 = vmatprep.subr.mxu0 0.0
        %2524 = vmatpush1.msra.mxu0 %v2358
        %2525 = vmatprep.subr.mxu0 0.0
        %2526 = vmatpush1.msra.mxu0 %v2359
        %2527 = vmatprep.subr.mxu0 0.0
        %2528 = vmatpush1.msra.mxu0 %v2360
        %2529 = vmatprep.subr.mxu0 0.0
        %2530 = vmatpush1.msra.mxu0 %v2361
        %2531 = vmatprep.subr.mxu0 0.0
        %2532 = vmatpush1.msra.mxu0 %v2362
        %2533 = vmatprep.subr.mxu0 0.0
        %2534 = vmatpush1.msra.mxu0 %v2363
        %2535 = vmatprep.subr.mxu0 0.0
        %2536 = vmatpush1.msra.mxu0 %v2364
        %2537 = vmatprep.subr.mxu0 0.0
        %2538 = vmatpush1.msra.mxu0 %v2365
        %2539 = vmatprep.subr.mxu0 0.0
        %2540 = vmatpush1.msra.mxu0 %v2366
        %2541 = vmatprep.subr.mxu0 0.0
        %2542 = vmatpush1.msra.mxu0 %v2367
        %2543 = vmatprep.subr.mxu0 0.0
        %2544 = vmatpush1.msra.mxu0 %v2368
        %2545 = vmatprep.subr.mxu0 0.0
        %2546 = vmatpush1.msra.mxu0 %v2369
        %2547 = vmatprep.subr.mxu0 0.0
        %2548 = vmatpush1.msra.mxu0 %v2370
        %2549 = vmatprep.subr.mxu0 0.0
        %2550 = vmatpush1.msra.mxu0 %v2371
        %2551 = vmatprep.subr.mxu0 0.0
        %2552 = vmatpush1.msra.mxu0 %v2372
        %2553 = vmatprep.subr.mxu0 0.0
        %2554 = vmatpush1.msra.mxu0 %v2373
        %2555 = vmatprep.subr.mxu0 0.0
        %2556 = vmatpush1.msra.mxu0 %v2374
        %2557 = vmatprep.subr.mxu0 0.0
        %2558 = vmatpush1.msra.mxu0 %v2375
        %2559 = vmatprep.mubr.f32.mxu0 %v2088
        %2560 = vmatmul.mubr.f32.gmra.mrb[0].mxu0 %v1984
        %v2561 = vpop.f32.mrb[0].mxu0
        %v2562 = vadd.f32 %v2493, %v2561
        %v2563 = vpop.f32.mrb[0].mxu0
        %2564 = vmatprep.mubr.f32.mxu0 %v2090
        %2565 = vmatmul.mubr.f32.gmra.mrb[0].mxu0 %v1985
        %v2566 = vpop.f32.mrb[0].mxu0
        %v2567 = vadd.f32 %v2493, %v2566
        %v2568 = vpop.f32.mrb[0].mxu0
        %2569 = vmatprep.mubr.f32.mxu0 %v2093
        %2570 = vmatmul.mubr.f32.gmra.mrb[0].mxu0 %v1987
        %v2571 = vpop.f32.mrb[0].mxu0
        %v2572 = vadd.f32 %v2493, %v2571
        %v2573 = vpop.f32.mrb[0].mxu0
        %2574 = vmatprep.mubr.f32.mxu0 %v2095
        %2575 = vmatmul.mubr.f32.gmra.mrb[0].mxu0 %v1988
        %v2576 = vpop.f32.mrb[0].mxu0
        %v2577 = vadd.f32 %v2493, %v2576
        %v2578 = vpop.f32.mrb[0].mxu0
        %2579 = vmatprep.mubr.f32.mxu0 %v2098
        %2580 = vmatmul.mubr.f32.gmra.mrb[0].mxu0 %v1990
        %v2581 = vpop.f32.mrb[0].mxu0
        %v2582 = vadd.f32 %v2493, %v2581
        %v2583 = vpop.f32.mrb[0].mxu0
        %2584 = vmatprep.mubr.f32.mxu0 %v2100
        %2585 = vmatmul.mubr.f32.gmra.mrb[0].mxu0 %v1991
        %v2586 = vpop.f32.mrb[0].mxu0
        %v2587 = vadd.f32 %v2493, %v2586
        %v2588 = vpop.f32.mrb[0].mxu0
        %2589 = vmatprep.mubr.f32.mxu0 %v2103
        %2590 = vmatmul.mubr.f32.gmra.mrb[0].mxu0 %v1993
        %v2591 = vpop.f32.mrb[0].mxu0
        %v2592 = vadd.f32 %v2493, %v2591
        %v2593 = vpop.f32.mrb[0].mxu0
        %2594 = vmatprep.mubr.f32.mxu0 %v2105
        %2595 = vmatmul.mubr.f32.gmra.mrb[0].mxu0 %v1994
        %v2596 = vpop.f32.mrb[0].mxu0
        %v2597 = vadd.f32 %v2493, %v2596
        %v2598 = vpop.f32.mrb[0].mxu0
        %2599 = vmatprep.mubr.f32.mxu0 %v2108
        %2600 = vmatmul.mubr.f32.gmra.mrb[0].mxu0 %v1996
        %v2601 = vpop.f32.mrb[0].mxu0
        %v2602 = vadd.f32 %v2493, %v2601
        %v2603 = vpop.f32.mrb[0].mxu0
        %2604 = vmatprep.mubr.f32.mxu0 %v2110
        %2605 = vmatmul.mubr.f32.gmra.mrb[0].mxu0 %v1997
        %v2606 = vpop.f32.mrb[0].mxu0
        %v2607 = vadd.f32 %v2493, %v2606
        %v2608 = vpop.f32.mrb[0].mxu0
        %2609 = vmatprep.mubr.f32.mxu0 %v2113
        %2610 = vmatmul.mubr.f32.gmra.mrb[0].mxu0 %v1999
        %v2611 = vpop.f32.mrb[0].mxu0
        %v2612 = vadd.f32 %v2493, %v2611
        %v2613 = vpop.f32.mrb[0].mxu0
        %2614 = vmatprep.mubr.f32.mxu0 %v2115
        %2615 = vmatmul.mubr.f32.gmra.mrb[0].mxu0 %v2000
        %v2616 = vpop.f32.mrb[0].mxu0
        %v2617 = vadd.f32 %v2493, %v2616
        %v2618 = vpop.f32.mrb[0].mxu0
        %2619 = vmatprep.mubr.f32.mxu0 %v2118
        %2620 = vmatmul.mubr.f32.gmra.mrb[0].mxu0 %v2002
        %v2621 = vpop.f32.mrb[0].mxu0
        %v2622 = vadd.f32 %v2493, %v2621
        %v2623 = vpop.f32.mrb[0].mxu0
        %2624 = vmatprep.mubr.f32.mxu0 %v2120
        %2625 = vmatmul.mubr.f32.gmra.mrb[0].mxu0 %v2003
        %v2626 = vpop.f32.mrb[0].mxu0
        %v2627 = vadd.f32 %v2493, %v2626
        %v2628 = vpop.f32.mrb[0].mxu0
        %2629 = vmatprep.mubr.f32.mxu0 %v2123
        %2630 = vmatmul.mubr.f32.gmra.mrb[0].mxu0 %v2005
        %v2631 = vpop.f32.mrb[0].mxu0
        %v2632 = vadd.f32 %v2493, %v2631
        %v2633 = vpop.f32.mrb[0].mxu0
        %2634 = vmatprep.mubr.f32.mxu0 %v2125
        %2635 = vmatmul.mubr.f32.gmra.mrb[0].mxu0 %v2006
        %v2636 = vpop.f32.mrb[0].mxu0
        %v2637 = vadd.f32 %v2493, %v2636
        %v2638 = vpop.f32.mrb[0].mxu0
        %2639 = vmatprep.mubr.f32.mxu0 %v2128
        %2640 = vmatmul.mubr.f32.gmra.mrb[0].mxu0 %v2008
        %v2641 = vpop.f32.mrb[0].mxu0
        %v2642 = vadd.f32 %v2493, %v2641
        %v2643 = vpop.f32.mrb[0].mxu0
        %2644 = vmatprep.mubr.f32.mxu0 %v2130
        %2645 = vmatmul.mubr.f32.gmra.mrb[0].mxu0 %v2009
        %v2646 = vpop.f32.mrb[0].mxu0
        %v2647 = vadd.f32 %v2493, %v2646
        %v2648 = vpop.f32.mrb[0].mxu0
        %2649 = vmatprep.mubr.f32.mxu0 %v2133
        %2650 = vmatmul.mubr.f32.gmra.mrb[0].mxu0 %v2011
        %v2651 = vpop.f32.mrb[0].mxu0
        %v2652 = vadd.f32 %v2493, %v2651
        %v2653 = vpop.f32.mrb[0].mxu0
        %2654 = vmatprep.mubr.f32.mxu0 %v2135
        %2655 = vmatmul.mubr.f32.gmra.mrb[0].mxu0 %v2012
        %v2656 = vpop.f32.mrb[0].mxu0
        %v2657 = vadd.f32 %v2493, %v2656
        %v2658 = vpop.f32.mrb[0].mxu0
        %2659 = vmatprep.mubr.f32.mxu0 %v2138
        %2660 = vmatmul.mubr.f32.gmra.mrb[0].mxu0 %v2014
        %v2661 = vpop.f32.mrb[0].mxu0
        %v2662 = vadd.f32 %v2493, %v2661
        %v2663 = vpop.f32.mrb[0].mxu0
        %2664 = vmatprep.mubr.f32.mxu0 %v2140
        %2665 = vmatmul.mubr.f32.gmra.mrb[0].mxu0 %v2015
        %v2666 = vpop.f32.mrb[0].mxu0
        %v2667 = vadd.f32 %v2493, %v2666
        %v2668 = vpop.f32.mrb[0].mxu0
        %2669 = vmatprep.mubr.f32.mxu0 %v2143
        %2670 = vmatmul.mubr.f32.gmra.mrb[0].mxu0 %v2017
        %v2671 = vpop.f32.mrb[0].mxu0
        %v2672 = vadd.f32 %v2493, %v2671
        %v2673 = vpop.f32.mrb[0].mxu0
        %2674 = vmatprep.mubr.f32.mxu0 %v2145
        %2675 = vmatmul.mubr.f32.gmra.mrb[0].mxu0 %v2018
        %v2676 = vpop.f32.mrb[0].mxu0
        %v2677 = vadd.f32 %v2493, %v2676
        %v2678 = vpop.f32.mrb[0].mxu0
        %2679 = vmatprep.mubr.f32.mxu0 %v2148
        %2680 = vmatmul.mubr.f32.gmra.mrb[0].mxu0 %v2020
        %v2681 = vpop.f32.mrb[0].mxu0
        %v2682 = vadd.f32 %v2493, %v2681
        %v2683 = vpop.f32.mrb[0].mxu0
        %2684 = vmatprep.mubr.f32.mxu0 %v2150
        %2685 = vmatmul.mubr.f32.gmra.mrb[0].mxu0 %v2021
        %v2686 = vpop.f32.mrb[0].mxu0
        %v2687 = vadd.f32 %v2493, %v2686
        %v2688 = vpop.f32.mrb[0].mxu0
        %2689 = vmatprep.mubr.f32.mxu0 %v2153
        %2690 = vmatmul.mubr.f32.gmra.mrb[0].mxu0 %v2023
        %v2691 = vpop.f32.mrb[0].mxu0
        %v2692 = vadd.f32 %v2493, %v2691
        %v2693 = vpop.f32.mrb[0].mxu0
        %2694 = vmatprep.mubr.f32.mxu0 %v2155
        %2695 = vmatmul.mubr.f32.gmra.mrb[0].mxu0 %v2024
        %v2696 = vpop.f32.mrb[0].mxu0
        %v2697 = vadd.f32 %v2493, %v2696
        %v2698 = vpop.f32.mrb[0].mxu0
        %2699 = vmatprep.mubr.f32.mxu0 %v2158
        %2700 = vmatmul.mubr.f32.gmra.mrb[0].mxu0 %v2026
        %v2701 = vpop.f32.mrb[0].mxu0
        %v2702 = vadd.f32 %v2493, %v2701
        %v2703 = vpop.f32.mrb[0].mxu0
        %2704 = vmatprep.mubr.f32.mxu0 %v2160
        %2705 = vmatmul.mubr.f32.gmra.mrb[0].mxu0 %v2027
        %v2706 = vpop.f32.mrb[0].mxu0
        %v2707 = vadd.f32 %v2493, %v2706
        %v2708 = vpop.f32.mrb[0].mxu0
        %2709 = vmatprep.mubr.f32.mxu0 %v2163
        %2710 = vmatmul.mubr.f32.gmra.mrb[0].mxu0 %v2029
        %v2711 = vpop.f32.mrb[0].mxu0
        %v2712 = vadd.f32 %v2493, %v2711
        %v2713 = vpop.f32.mrb[0].mxu0
        %2714 = vmatprep.mubr.f32.mxu0 %v2165
        %2715 = vmatmul.mubr.f32.gmra.mrb[0].mxu0 %v2030
        %v2716 = vpop.f32.mrb[0].mxu0
        %v2717 = vadd.f32 %v2493, %v2716
        %v2718 = vpop.f32.mrb[0].mxu0
        %2719 = vdwg.mxu0
        %2720 = vmatprep.subr.mxu0 0.0
        %2721 = vmatpush1.msra.mxu0 %v2376
        %2722 = vmatprep.subr.mxu0 0.0
        %2723 = vmatpush1.msra.mxu0 %v2377
        %2724 = vmatprep.subr.mxu0 0.0
        %2725 = vmatpush1.msra.mxu0 %v2378
        %2726 = vmatprep.subr.mxu0 0.0
        %2727 = vmatpush1.msra.mxu0 %v2379
        %2728 = vmatprep.subr.mxu0 0.0
        %2729 = vmatpush1.msra.mxu0 %v2380
        %2730 = vmatprep.subr.mxu0 0.0
        %2731 = vmatpush1.msra.mxu0 %v2381
        %2732 = vmatprep.subr.mxu0 0.0
        %2733 = vmatpush1.msra.mxu0 %v2382
        %2734 = vmatprep.subr.mxu0 0.0
        %2735 = vmatpush1.msra.mxu0 %v2383
        %2736 = vmatprep.subr.mxu0 0.0
        %2737 = vmatpush1.msra.mxu0 %v2384
        %2738 = vmatprep.subr.mxu0 0.0
        %2739 = vmatpush1.msra.mxu0 %v2385
        %2740 = vmatprep.subr.mxu0 0.0
        %2741 = vmatpush1.msra.mxu0 %v2386
        %2742 = vmatprep.subr.mxu0 0.0
        %2743 = vmatpush1.msra.mxu0 %v2387
        %2744 = vmatprep.subr.mxu0 0.0
        %2745 = vmatpush1.msra.mxu0 %v2388
        %2746 = vmatprep.subr.mxu0 0.0
        %2747 = vmatpush1.msra.mxu0 %v2389
        %2748 = vmatprep.subr.mxu0 0.0
        %2749 = vmatpush1.msra.mxu0 %v2390
        %2750 = vmatprep.subr.mxu0 0.0
        %2751 = vmatpush1.msra.mxu0 %v2391
        %2752 = vmatprep.subr.mxu0 0.0
        %2753 = vmatpush1.msra.mxu0 %v2392
        %2754 = vmatprep.subr.mxu0 0.0
        %2755 = vmatpush1.msra.mxu0 %v2393
        %2756 = vmatprep.subr.mxu0 0.0
        %2757 = vmatpush1.msra.mxu0 %v2394
        %2758 = vmatprep.subr.mxu0 0.0
        %2759 = vmatpush1.msra.mxu0 %v2395
        %2760 = vmatprep.subr.mxu0 0.0
        %2761 = vmatpush1.msra.mxu0 %v2396
        %2762 = vmatprep.subr.mxu0 0.0
        %2763 = vmatpush1.msra.mxu0 %v2397
        %2764 = vmatprep.subr.mxu0 0.0
        %2765 = vmatpush1.msra.mxu0 %v2398
        %2766 = vmatprep.subr.mxu0 0.0
        %2767 = vmatpush1.msra.mxu0 %v2399
        %2768 = vmatprep.subr.mxu0 0.0
        %2769 = vmatpush1.msra.mxu0 %v2400
        %2770 = vmatprep.subr.mxu0 0.0
        %2771 = vmatpush1.msra.mxu0 %v2401
        %2772 = vmatprep.subr.mxu0 0.0
        %2773 = vmatpush1.msra.mxu0 %v2402
        %2774 = vmatprep.subr.mxu0 0.0
        %2775 = vmatpush1.msra.mxu0 %v2403
        %2776 = vmatprep.subr.mxu0 0.0
        %2777 = vmatpush1.msra.mxu0 %v2404
        %2778 = vmatprep.subr.mxu0 0.0
        %2779 = vmatpush1.msra.mxu0 %v2405
        %2780 = vmatprep.subr.mxu0 0.0
        %2781 = vmatpush1.msra.mxu0 %v2406
        %2782 = vmatprep.subr.mxu0 0.0
        %2783 = vmatpush1.msra.mxu0 %v2407
        %2784 = vmatprep.mubr.f32.mxu0 %v1987
        %2785 = vmatmul.mubr.f32.gmra.mrb[0].mxu0 %v2200
        %v2786 = vpop.f32.mrb[0].mxu0
        %v2787 = vadd.f32 %v2562, %v2786
        %v2788 = vpop.f32.mrb[0].mxu0
        %2789 = vmatprep.mubr.f32.mxu0 %v1988
        %2790 = vmatmul.mubr.f32.gmra.mrb[0].mxu0 %v2202
        %v2791 = vpop.f32.mrb[0].mxu0
        %v2792 = vadd.f32 %v2567, %v2791
        %v2793 = vpop.f32.mrb[0].mxu0
        %2794 = vmatprep.mubr.f32.mxu0 %v1990
        %2795 = vmatmul.mubr.f32.gmra.mrb[0].mxu0 %v2205
        %v2796 = vpop.f32.mrb[0].mxu0
        %v2797 = vadd.f32 %v2572, %v2796
        %v2798 = vpop.f32.mrb[0].mxu0
        %2799 = vmatprep.mubr.f32.mxu0 %v1991
        %2800 = vmatmul.mubr.f32.gmra.mrb[0].mxu0 %v2207
        %v2801 = vpop.f32.mrb[0].mxu0
        %v2802 = vadd.f32 %v2577, %v2801
        %v2803 = vpop.f32.mrb[0].mxu0
        %2804 = vmatprep.mubr.f32.mxu0 %v1993
        %2805 = vmatmul.mubr.f32.gmra.mrb[0].mxu0 %v2210
        %v2806 = vpop.f32.mrb[0].mxu0
        %v2807 = vadd.f32 %v2582, %v2806
        %v2808 = vpop.f32.mrb[0].mxu0
        %2809 = vmatprep.mubr.f32.mxu0 %v1994
        %2810 = vmatmul.mubr.f32.gmra.mrb[0].mxu0 %v2212
        %v2811 = vpop.f32.mrb[0].mxu0
        %v2812 = vadd.f32 %v2587, %v2811
        %v2813 = vpop.f32.mrb[0].mxu0
        %2814 = vmatprep.mubr.f32.mxu0 %v1996
        %2815 = vmatmul.mubr.f32.gmra.mrb[0].mxu0 %v2215
        %v2816 = vpop.f32.mrb[0].mxu0
        %v2817 = vadd.f32 %v2592, %v2816
        %v2818 = vpop.f32.mrb[0].mxu0
        %2819 = vmatprep.mubr.f32.mxu0 %v1997
        %2820 = vmatmul.mubr.f32.gmra.mrb[0].mxu0 %v2217
        %v2821 = vpop.f32.mrb[0].mxu0
        %v2822 = vadd.f32 %v2597, %v2821
        %v2823 = vpop.f32.mrb[0].mxu0
        %2824 = vmatprep.mubr.f32.mxu0 %v1999
        %2825 = vmatmul.mubr.f32.gmra.mrb[0].mxu0 %v2220
        %v2826 = vpop.f32.mrb[0].mxu0
        %v2827 = vadd.f32 %v2602, %v2826
        %v2828 = vpop.f32.mrb[0].mxu0
        %2829 = vmatprep.mubr.f32.mxu0 %v2000
        %2830 = vmatmul.mubr.f32.gmra.mrb[0].mxu0 %v2222
        %v2831 = vpop.f32.mrb[0].mxu0
        %v2832 = vadd.f32 %v2607, %v2831
        %v2833 = vpop.f32.mrb[0].mxu0
        %2834 = vmatprep.mubr.f32.mxu0 %v2002
        %2835 = vmatmul.mubr.f32.gmra.mrb[0].mxu0 %v2225
        %v2836 = vpop.f32.mrb[0].mxu0
        %v2837 = vadd.f32 %v2612, %v2836
        %v2838 = vpop.f32.mrb[0].mxu0
        %2839 = vmatprep.mubr.f32.mxu0 %v2003
        %2840 = vmatmul.mubr.f32.gmra.mrb[0].mxu0 %v2227
        %v2841 = vpop.f32.mrb[0].mxu0
        %v2842 = vadd.f32 %v2617, %v2841
        %v2843 = vpop.f32.mrb[0].mxu0
        %2844 = vmatprep.mubr.f32.mxu0 %v2005
        %2845 = vmatmul.mubr.f32.gmra.mrb[0].mxu0 %v2230
        %v2846 = vpop.f32.mrb[0].mxu0
        %v2847 = vadd.f32 %v2622, %v2846
        %v2848 = vpop.f32.mrb[0].mxu0
        %2849 = vmatprep.mubr.f32.mxu0 %v2006
        %2850 = vmatmul.mubr.f32.gmra.mrb[0].mxu0 %v2232
        %v2851 = vpop.f32.mrb[0].mxu0
        %v2852 = vadd.f32 %v2627, %v2851
        %v2853 = vpop.f32.mrb[0].mxu0
        %2854 = vmatprep.mubr.f32.mxu0 %v2008
        %2855 = vmatmul.mubr.f32.gmra.mrb[0].mxu0 %v2235
        %v2856 = vpop.f32.mrb[0].mxu0
        %v2857 = vadd.f32 %v2632, %v2856
        %v2858 = vpop.f32.mrb[0].mxu0
        %2859 = vmatprep.mubr.f32.mxu0 %v2009
        %2860 = vmatmul.mubr.f32.gmra.mrb[0].mxu0 %v2237
        %v2861 = vpop.f32.mrb[0].mxu0
        %v2862 = vadd.f32 %v2637, %v2861
        %v2863 = vpop.f32.mrb[0].mxu0
        %2864 = vmatprep.mubr.f32.mxu0 %v2011
        %2865 = vmatmul.mubr.f32.gmra.mrb[0].mxu0 %v2240
        %v2866 = vpop.f32.mrb[0].mxu0
        %v2867 = vadd.f32 %v2642, %v2866
        %v2868 = vpop.f32.mrb[0].mxu0
        %2869 = vmatprep.mubr.f32.mxu0 %v2012
        %2870 = vmatmul.mubr.f32.gmra.mrb[0].mxu0 %v2242
        %v2871 = vpop.f32.mrb[0].mxu0
        %v2872 = vadd.f32 %v2647, %v2871
        %v2873 = vpop.f32.mrb[0].mxu0
        %2874 = vmatprep.mubr.f32.mxu0 %v2014
        %2875 = vmatmul.mubr.f32.gmra.mrb[0].mxu0 %v2245
        %v2876 = vpop.f32.mrb[0].mxu0
        %v2877 = vadd.f32 %v2652, %v2876
        %v2878 = vpop.f32.mrb[0].mxu0
        %2879 = vmatprep.mubr.f32.mxu0 %v2015
        %2880 = vmatmul.mubr.f32.gmra.mrb[0].mxu0 %v2247
        %v2881 = vpop.f32.mrb[0].mxu0
        %v2882 = vadd.f32 %v2657, %v2881
        %v2883 = vpop.f32.mrb[0].mxu0
        %2884 = vmatprep.mubr.f32.mxu0 %v2017
        %2885 = vmatmul.mubr.f32.gmra.mrb[0].mxu0 %v2250
        %v2886 = vpop.f32.mrb[0].mxu0
        %v2887 = vadd.f32 %v2662, %v2886
        %v2888 = vpop.f32.mrb[0].mxu0
        %2889 = vmatprep.mubr.f32.mxu0 %v2018
        %2890 = vmatmul.mubr.f32.gmra.mrb[0].mxu0 %v2252
        %v2891 = vpop.f32.mrb[0].mxu0
        %v2892 = vadd.f32 %v2667, %v2891
        %v2893 = vpop.f32.mrb[0].mxu0
        %2894 = vmatprep.mubr.f32.mxu0 %v2020
        %2895 = vmatmul.mubr.f32.gmra.mrb[0].mxu0 %v2255
        %v2896 = vpop.f32.mrb[0].mxu0
        %v2897 = vadd.f32 %v2672, %v2896
        %v2898 = vpop.f32.mrb[0].mxu0
        %2899 = vmatprep.mubr.f32.mxu0 %v2021
        %2900 = vmatmul.mubr.f32.gmra.mrb[0].mxu0 %v2257
        %v2901 = vpop.f32.mrb[0].mxu0
        %v2902 = vadd.f32 %v2677, %v2901
        %v2903 = vpop.f32.mrb[0].mxu0
        %2904 = vmatprep.mubr.f32.mxu0 %v2023
        %2905 = vmatmul.mubr.f32.gmra.mrb[0].mxu0 %v2260
        %v2906 = vpop.f32.mrb[0].mxu0
        %v2907 = vadd.f32 %v2682, %v2906
        %v2908 = vpop.f32.mrb[0].mxu0
        %2909 = vmatprep.mubr.f32.mxu0 %v2024
        %2910 = vmatmul.mubr.f32.gmra.mrb[0].mxu0 %v2262
        %v2911 = vpop.f32.mrb[0].mxu0
        %v2912 = vadd.f32 %v2687, %v2911
        %v2913 = vpop.f32.mrb[0].mxu0
        %2914 = vmatprep.mubr.f32.mxu0 %v2026
        %2915 = vmatmul.mubr.f32.gmra.mrb[0].mxu0 %v2265
        %v2916 = vpop.f32.mrb[0].mxu0
        %v2917 = vadd.f32 %v2692, %v2916
        %v2918 = vpop.f32.mrb[0].mxu0
        %2919 = vmatprep.mubr.f32.mxu0 %v2027
        %2920 = vmatmul.mubr.f32.gmra.mrb[0].mxu0 %v2267
        %v2921 = vpop.f32.mrb[0].mxu0
        %v2922 = vadd.f32 %v2697, %v2921
        %v2923 = vpop.f32.mrb[0].mxu0
        %2924 = vmatprep.mubr.f32.mxu0 %v2029
        %2925 = vmatmul.mubr.f32.gmra.mrb[0].mxu0 %v2270
        %v2926 = vpop.f32.mrb[0].mxu0
        %v2927 = vadd.f32 %v2702, %v2926
        %v2928 = vpop.f32.mrb[0].mxu0
        %2929 = vmatprep.mubr.f32.mxu0 %v2030
        %2930 = vmatmul.mubr.f32.gmra.mrb[0].mxu0 %v2272
        %v2931 = vpop.f32.mrb[0].mxu0
        %v2932 = vadd.f32 %v2707, %v2931
        %v2933 = vpop.f32.mrb[0].mxu0
        %2934 = vmatprep.mubr.f32.mxu0 %v2032
        %2935 = vmatmul.mubr.f32.gmra.mrb[0].mxu0 %v2275
        %v2936 = vpop.f32.mrb[0].mxu0
        %v2937 = vadd.f32 %v2712, %v2936
        %v2938 = vpop.f32.mrb[0].mxu0
        %2939 = vmatprep.mubr.f32.mxu0 %v2033
        %2940 = vmatmul.mubr.f32.gmra.mrb[0].mxu0 %v2277
        %v2941 = vpop.f32.mrb[0].mxu0
        %v2942 = vadd.f32 %v2717, %v2941
        %v2943 = vpop.f32.mrb[0].mxu0
        %2944 = vdwg.mxu0
        %2945 = vmatprep.subr.mxu0 0.0
        %2946 = vmatpush1.msra.mxu0 %v2408
        %2947 = vmatprep.subr.mxu0 0.0
        %2948 = vmatpush1.msra.mxu0 %v2409
        %2949 = vmatprep.subr.mxu0 0.0
        %2950 = vmatpush1.msra.mxu0 %v2410
        %2951 = vmatprep.subr.mxu0 0.0
        %2952 = vmatpush1.msra.mxu0 %v2411
        %2953 = vmatprep.subr.mxu0 0.0
        %2954 = vmatpush1.msra.mxu0 %v2412
        %2955 = vmatprep.subr.mxu0 0.0
        %2956 = vmatpush1.msra.mxu0 %v2413
        %2957 = vmatprep.subr.mxu0 0.0
        %2958 = vmatpush1.msra.mxu0 %v2414
        %2959 = vmatprep.subr.mxu0 0.0
        %2960 = vmatpush1.msra.mxu0 %v2415
        %2961 = vmatprep.subr.mxu0 0.0
        %2962 = vmatpush1.msra.mxu0 %v2416
        %2963 = vmatprep.subr.mxu0 0.0
        %2964 = vmatpush1.msra.mxu0 %v2417
        %2965 = vmatprep.subr.mxu0 0.0
        %2966 = vmatpush1.msra.mxu0 %v2418
        %2967 = vmatprep.subr.mxu0 0.0
        %2968 = vmatpush1.msra.mxu0 %v2419
        %2969 = vmatprep.subr.mxu0 0.0
        %2970 = vmatpush1.msra.mxu0 %v2420
        %2971 = vmatprep.subr.mxu0 0.0
        %2972 = vmatpush1.msra.mxu0 %v2421
        %2973 = vmatprep.subr.mxu0 0.0
        %2974 = vmatpush1.msra.mxu0 %v2422
        %2975 = vmatprep.subr.mxu0 0.0
        %2976 = vmatpush1.msra.mxu0 %v2423
        %2977 = vmatprep.subr.mxu0 0.0
        %2978 = vmatpush1.msra.mxu0 %v2424
        %2979 = vmatprep.subr.mxu0 0.0
        %2980 = vmatpush1.msra.mxu0 %v2425
        %2981 = vmatprep.subr.mxu0 0.0
        %2982 = vmatpush1.msra.mxu0 %v2426
        %2983 = vmatprep.subr.mxu0 0.0
        %2984 = vmatpush1.msra.mxu0 %v2427
        %2985 = vmatprep.subr.mxu0 0.0
        %2986 = vmatpush1.msra.mxu0 %v2428
        %2987 = vmatprep.subr.mxu0 0.0
        %2988 = vmatpush1.msra.mxu0 %v2429
        %2989 = vmatprep.subr.mxu0 0.0
        %2990 = vmatpush1.msra.mxu0 %v2430
        %2991 = vmatprep.subr.mxu0 0.0
        %2992 = vmatpush1.msra.mxu0 %v2431
        %2993 = vmatprep.subr.mxu0 0.0
        %2994 = vmatpush1.msra.mxu0 %v2432
        %2995 = vmatprep.subr.mxu0 0.0
        %2996 = vmatpush1.msra.mxu0 %v2433
        %2997 = vmatprep.subr.mxu0 0.0
        %2998 = vmatpush1.msra.mxu0 %v2434
        %2999 = vmatprep.subr.mxu0 0.0
        %3000 = vmatpush1.msra.mxu0 %v2435
        %3001 = vmatprep.subr.mxu0 0.0
        %3002 = vmatpush1.msra.mxu0 %v2436
        %3003 = vmatprep.subr.mxu0 0.0
        %3004 = vmatpush1.msra.mxu0 %v2437
        %3005 = vmatprep.subr.mxu0 0.0
        %3006 = vmatpush1.msra.mxu0 %v2438
        %3007 = vmatprep.subr.mxu0 0.0
        %3008 = vmatpush1.msra.mxu0 %v2439
        %3009 = vmatprep.mubr.f32.mxu0 %v2205
        %3010 = vmatmul.mubr.f32.gmra.mrb[0].mxu0 %v2093
        %v3011 = vpop.f32.mrb[0].mxu0
        %v3012 = vadd.f32 %v2787, %v3011
        %v3013 = vpop.f32.mrb[0].mxu0
        %3014 = vmatprep.mubr.f32.mxu0 %v2207
        %3015 = vmatmul.mubr.f32.gmra.mrb[0].mxu0 %v2095
        %v3016 = vpop.f32.mrb[0].mxu0
        %v3017 = vadd.f32 %v2792, %v3016
        %v3018 = vpop.f32.mrb[0].mxu0
        %3019 = vmatprep.mubr.f32.mxu0 %v2210
        %3020 = vmatmul.mubr.f32.gmra.mrb[0].mxu0 %v2098
        %v3021 = vpop.f32.mrb[0].mxu0
        %v3022 = vadd.f32 %v2797, %v3021
        %v3023 = vpop.f32.mrb[0].mxu0
        %3024 = vmatprep.mubr.f32.mxu0 %v2212
        %3025 = vmatmul.mubr.f32.gmra.mrb[0].mxu0 %v2100
        %v3026 = vpop.f32.mrb[0].mxu0
        %v3027 = vadd.f32 %v2802, %v3026
        %v3028 = vpop.f32.mrb[0].mxu0
        %3029 = vmatprep.mubr.f32.mxu0 %v2215
        %3030 = vmatmul.mubr.f32.gmra.mrb[0].mxu0 %v2103
        %v3031 = vpop.f32.mrb[0].mxu0
        %v3032 = vadd.f32 %v2807, %v3031
        %v3033 = vpop.f32.mrb[0].mxu0
        %3034 = vmatprep.mubr.f32.mxu0 %v2217
        %3035 = vmatmul.mubr.f32.gmra.mrb[0].mxu0 %v2105
        %v3036 = vpop.f32.mrb[0].mxu0
        %v3037 = vadd.f32 %v2812, %v3036
        %v3038 = vpop.f32.mrb[0].mxu0
        %3039 = vmatprep.mubr.f32.mxu0 %v2220
        %3040 = vmatmul.mubr.f32.gmra.mrb[0].mxu0 %v2108
        %v3041 = vpop.f32.mrb[0].mxu0
        %v3042 = vadd.f32 %v2817, %v3041
        %v3043 = vpop.f32.mrb[0].mxu0
        %3044 = vmatprep.mubr.f32.mxu0 %v2222
        %3045 = vmatmul.mubr.f32.gmra.mrb[0].mxu0 %v2110
        %v3046 = vpop.f32.mrb[0].mxu0
        %v3047 = vadd.f32 %v2822, %v3046
        %v3048 = vpop.f32.mrb[0].mxu0
        %3049 = vmatprep.mubr.f32.mxu0 %v2225
        %3050 = vmatmul.mubr.f32.gmra.mrb[0].mxu0 %v2113
        %v3051 = vpop.f32.mrb[0].mxu0
        %v3052 = vadd.f32 %v2827, %v3051
        %v3053 = vpop.f32.mrb[0].mxu0
        %3054 = vmatprep.mubr.f32.mxu0 %v2227
        %3055 = vmatmul.mubr.f32.gmra.mrb[0].mxu0 %v2115
        %v3056 = vpop.f32.mrb[0].mxu0
        %v3057 = vadd.f32 %v2832, %v3056
        %v3058 = vpop.f32.mrb[0].mxu0
        %3059 = vmatprep.mubr.f32.mxu0 %v2230
        %3060 = vmatmul.mubr.f32.gmra.mrb[0].mxu0 %v2118
        %v3061 = vpop.f32.mrb[0].mxu0
        %v3062 = vadd.f32 %v2837, %v3061
        %v3063 = vpop.f32.mrb[0].mxu0
        %3064 = vmatprep.mubr.f32.mxu0 %v2232
        %3065 = vmatmul.mubr.f32.gmra.mrb[0].mxu0 %v2120
        %v3066 = vpop.f32.mrb[0].mxu0
        %v3067 = vadd.f32 %v2842, %v3066
        %v3068 = vpop.f32.mrb[0].mxu0
        %3069 = vmatprep.mubr.f32.mxu0 %v2235
        %3070 = vmatmul.mubr.f32.gmra.mrb[0].mxu0 %v2123
        %v3071 = vpop.f32.mrb[0].mxu0
        %v3072 = vadd.f32 %v2847, %v3071
        %v3073 = vpop.f32.mrb[0].mxu0
        %3074 = vmatprep.mubr.f32.mxu0 %v2237
        %3075 = vmatmul.mubr.f32.gmra.mrb[0].mxu0 %v2125
        %v3076 = vpop.f32.mrb[0].mxu0
        %v3077 = vadd.f32 %v2852, %v3076
        %v3078 = vpop.f32.mrb[0].mxu0
        %3079 = vmatprep.mubr.f32.mxu0 %v2240
        %3080 = vmatmul.mubr.f32.gmra.mrb[0].mxu0 %v2128
        %v3081 = vpop.f32.mrb[0].mxu0
        %v3082 = vadd.f32 %v2857, %v3081
        %v3083 = vpop.f32.mrb[0].mxu0
        %3084 = vmatprep.mubr.f32.mxu0 %v2242
        %3085 = vmatmul.mubr.f32.gmra.mrb[0].mxu0 %v2130
        %v3086 = vpop.f32.mrb[0].mxu0
        %v3087 = vadd.f32 %v2862, %v3086
        %v3088 = vpop.f32.mrb[0].mxu0
        %3089 = vmatprep.mubr.f32.mxu0 %v2245
        %3090 = vmatmul.mubr.f32.gmra.mrb[0].mxu0 %v2133
        %v3091 = vpop.f32.mrb[0].mxu0
        %v3092 = vadd.f32 %v2867, %v3091
        %v3093 = vpop.f32.mrb[0].mxu0
        %3094 = vmatprep.mubr.f32.mxu0 %v2247
        %3095 = vmatmul.mubr.f32.gmra.mrb[0].mxu0 %v2135
        %v3096 = vpop.f32.mrb[0].mxu0
        %v3097 = vadd.f32 %v2872, %v3096
        %v3098 = vpop.f32.mrb[0].mxu0
        %3099 = vmatprep.mubr.f32.mxu0 %v2250
        %3100 = vmatmul.mubr.f32.gmra.mrb[0].mxu0 %v2138
        %v3101 = vpop.f32.mrb[0].mxu0
        %v3102 = vadd.f32 %v2877, %v3101
        %v3103 = vpop.f32.mrb[0].mxu0
        %3104 = vmatprep.mubr.f32.mxu0 %v2252
        %3105 = vmatmul.mubr.f32.gmra.mrb[0].mxu0 %v2140
        %v3106 = vpop.f32.mrb[0].mxu0
        %v3107 = vadd.f32 %v2882, %v3106
        %v3108 = vpop.f32.mrb[0].mxu0
        %3109 = vmatprep.mubr.f32.mxu0 %v2255
        %3110 = vmatmul.mubr.f32.gmra.mrb[0].mxu0 %v2143
        %v3111 = vpop.f32.mrb[0].mxu0
        %v3112 = vadd.f32 %v2887, %v3111
        %v3113 = vpop.f32.mrb[0].mxu0
        %3114 = vmatprep.mubr.f32.mxu0 %v2257
        %3115 = vmatmul.mubr.f32.gmra.mrb[0].mxu0 %v2145
        %v3116 = vpop.f32.mrb[0].mxu0
        %v3117 = vadd.f32 %v2892, %v3116
        %v3118 = vpop.f32.mrb[0].mxu0
        %3119 = vmatprep.mubr.f32.mxu0 %v2260
        %3120 = vmatmul.mubr.f32.gmra.mrb[0].mxu0 %v2148
        %v3121 = vpop.f32.mrb[0].mxu0
        %v3122 = vadd.f32 %v2897, %v3121
        %v3123 = vpop.f32.mrb[0].mxu0
        %3124 = vmatprep.mubr.f32.mxu0 %v2262
        %3125 = vmatmul.mubr.f32.gmra.mrb[0].mxu0 %v2150
        %v3126 = vpop.f32.mrb[0].mxu0
        %v3127 = vadd.f32 %v2902, %v3126
        %v3128 = vpop.f32.mrb[0].mxu0
        %3129 = vmatprep.mubr.f32.mxu0 %v2265
        %3130 = vmatmul.mubr.f32.gmra.mrb[0].mxu0 %v2153
        %v3131 = vpop.f32.mrb[0].mxu0
        %v3132 = vadd.f32 %v2907, %v3131
        %v3133 = vpop.f32.mrb[0].mxu0
        %3134 = vmatprep.mubr.f32.mxu0 %v2267
        %3135 = vmatmul.mubr.f32.gmra.mrb[0].mxu0 %v2155
        %v3136 = vpop.f32.mrb[0].mxu0
        %v3137 = vadd.f32 %v2912, %v3136
        %v3138 = vpop.f32.mrb[0].mxu0
        %3139 = vmatprep.mubr.f32.mxu0 %v2270
        %3140 = vmatmul.mubr.f32.gmra.mrb[0].mxu0 %v2158
        %v3141 = vpop.f32.mrb[0].mxu0
        %v3142 = vadd.f32 %v2917, %v3141
        %v3143 = vpop.f32.mrb[0].mxu0
        %3144 = vmatprep.mubr.f32.mxu0 %v2272
        %3145 = vmatmul.mubr.f32.gmra.mrb[0].mxu0 %v2160
        %v3146 = vpop.f32.mrb[0].mxu0
        %v3147 = vadd.f32 %v2922, %v3146
        %v3148 = vpop.f32.mrb[0].mxu0
        %3149 = vmatprep.mubr.f32.mxu0 %v2275
        %3150 = vmatmul.mubr.f32.gmra.mrb[0].mxu0 %v2163
        %v3151 = vpop.f32.mrb[0].mxu0
        %v3152 = vadd.f32 %v2927, %v3151
        %v3153 = vpop.f32.mrb[0].mxu0
        %3154 = vmatprep.mubr.f32.mxu0 %v2277
        %3155 = vmatmul.mubr.f32.gmra.mrb[0].mxu0 %v2165
        %v3156 = vpop.f32.mrb[0].mxu0
        %v3157 = vadd.f32 %v2932, %v3156
        %v3158 = vpop.f32.mrb[0].mxu0
        %3159 = vmatprep.mubr.f32.mxu0 %v2322
        %3160 = vmatmul.mubr.f32.gmra.mrb[0].mxu0 %v2315
        %v3161 = vpop.f32.mrb[0].mxu0
        %v3162 = vadd.f32 %v2937, %v3161
        %v3163 = vpop.f32.mrb[0].mxu0
        %3164 = vmatprep.mubr.f32.mxu0 %v2324
        %3165 = vmatmul.mubr.f32.gmra.mrb[0].mxu0 %v2317
        %v3166 = vpop.f32.mrb[0].mxu0
        %v3167 = vadd.f32 %v2942, %v3166
        %v3168 = vpop.f32.mrb[0].mxu0
        %3169 = vdwg.mxu0
        %3170 = vmatprep.subr.mxu0 0.0
        %3171 = vmatpush1.msra.mxu0 %v2440
        %3172 = vmatprep.subr.mxu0 0.0
        %3173 = vmatpush1.msra.mxu0 %v2441
        %3174 = vmatprep.subr.mxu0 0.0
        %3175 = vmatpush1.msra.mxu0 %v2442
        %3176 = vmatprep.subr.mxu0 0.0
        %3177 = vmatpush1.msra.mxu0 %v2443
        %3178 = vmatprep.subr.mxu0 0.0
        %3179 = vmatpush1.msra.mxu0 %v2444
        %3180 = vmatprep.subr.mxu0 0.0
        %3181 = vmatpush1.msra.mxu0 %v2445
        %3182 = vmatprep.subr.mxu0 0.0
        %3183 = vmatpush1.msra.mxu0 %v2446
        %3184 = vmatprep.subr.mxu0 0.0
        %3185 = vmatpush1.msra.mxu0 %v2447
        %3186 = vmatprep.subr.mxu0 0.0
        %3187 = vmatpush1.msra.mxu0 %v2448
        %3188 = vmatprep.subr.mxu0 0.0
        %3189 = vmatpush1.msra.mxu0 %v2449
        %3190 = vmatprep.subr.mxu0 0.0
        %3191 = vmatpush1.msra.mxu0 %v2450
        %3192 = vmatprep.subr.mxu0 0.0
        %3193 = vmatpush1.msra.mxu0 %v2451
        %3194 = vmatprep.subr.mxu0 0.0
        %3195 = vmatpush1.msra.mxu0 %v2452
        %3196 = vmatprep.subr.mxu0 0.0
        %3197 = vmatpush1.msra.mxu0 %v2453
        %3198 = vmatprep.subr.mxu0 0.0
        %3199 = vmatpush1.msra.mxu0 %v2454
        %3200 = vmatprep.subr.mxu0 0.0
        %3201 = vmatpush1.msra.mxu0 %v2455
        %3202 = vmatprep.subr.mxu0 0.0
        %3203 = vmatpush1.msra.mxu0 %v2456
        %3204 = vmatprep.subr.mxu0 0.0
        %3205 = vmatpush1.msra.mxu0 %v2457
        %3206 = vmatprep.subr.mxu0 0.0
        %3207 = vmatpush1.msra.mxu0 %v2458
        %3208 = vmatprep.subr.mxu0 0.0
        %3209 = vmatpush1.msra.mxu0 %v2459
        %3210 = vmatprep.subr.mxu0 0.0
        %3211 = vmatpush1.msra.mxu0 %v2460
        %3212 = vmatprep.subr.mxu0 0.0
        %3213 = vmatpush1.msra.mxu0 %v2461
        %3214 = vmatprep.subr.mxu0 0.0
        %3215 = vmatpush1.msra.mxu0 %v2462
        %3216 = vmatprep.subr.mxu0 0.0
        %3217 = vmatpush1.msra.mxu0 %v2463
        %3218 = vmatprep.subr.mxu0 0.0
        %3219 = vmatpush1.msra.mxu0 %v2464
        %3220 = vmatprep.subr.mxu0 0.0
        %3221 = vmatpush1.msra.mxu0 %v2465
        %3222 = vmatprep.subr.mxu0 0.0
        %3223 = vmatpush1.msra.mxu0 %v2466
        %3224 = vmatprep.subr.mxu0 0.0
        %3225 = vmatpush1.msra.mxu0 %v2467
        %3226 = vmatprep.subr.mxu0 0.0
        %3227 = vmatpush1.msra.mxu0 %v2468
        %3228 = vmatprep.subr.mxu0 0.0
        %3229 = vmatpush1.msra.mxu0 %v2469
        %3230 = vmatprep.subr.mxu0 0.0
        %3231 = vmatpush1.msra.mxu0 %v2470
        %3232 = vmatprep.subr.mxu0 0.0
        %3233 = vmatpush1.msra.mxu0 %v2471
        %3234 = vmatprep.mubr.f32.mxu0 %v2098
        %3235 = vmatmul.mubr.f32.gmra.mrb[0].mxu0 %v1990
        %v3236 = vpop.f32.mrb[0].mxu0
        %v3237 = vadd.f32 %v3012, %v3236
        %v3238 = vpop.f32.mrb[0].mxu0
        %3239 = vmatprep.mubr.f32.mxu0 %v2100
        %3240 = vmatmul.mubr.f32.gmra.mrb[0].mxu0 %v1991
        %v3241 = vpop.f32.mrb[0].mxu0
        %v3242 = vadd.f32 %v3017, %v3241
        %v3243 = vpop.f32.mrb[0].mxu0
        %3244 = vmatprep.mubr.f32.mxu0 %v2103
        %3245 = vmatmul.mubr.f32.gmra.mrb[0].mxu0 %v1993
        %v3246 = vpop.f32.mrb[0].mxu0
        %v3247 = vadd.f32 %v3022, %v3246
        %v3248 = vpop.f32.mrb[0].mxu0
        %3249 = vmatprep.mubr.f32.mxu0 %v2105
        %3250 = vmatmul.mubr.f32.gmra.mrb[0].mxu0 %v1994
        %v3251 = vpop.f32.mrb[0].mxu0
        %v3252 = vadd.f32 %v3027, %v3251
        %v3253 = vpop.f32.mrb[0].mxu0
        %3254 = vmatprep.mubr.f32.mxu0 %v2108
        %3255 = vmatmul.mubr.f32.gmra.mrb[0].mxu0 %v1996
        %v3256 = vpop.f32.mrb[0].mxu0
        %v3257 = vadd.f32 %v3032, %v3256
        %v3258 = vpop.f32.mrb[0].mxu0
        %3259 = vmatprep.mubr.f32.mxu0 %v2110
        %3260 = vmatmul.mubr.f32.gmra.mrb[0].mxu0 %v1997
        %v3261 = vpop.f32.mrb[0].mxu0
        %v3262 = vadd.f32 %v3037, %v3261
        %v3263 = vpop.f32.mrb[0].mxu0
        %3264 = vmatprep.mubr.f32.mxu0 %v2113
        %3265 = vmatmul.mubr.f32.gmra.mrb[0].mxu0 %v1999
        %v3266 = vpop.f32.mrb[0].mxu0
        %v3267 = vadd.f32 %v3042, %v3266
        %v3268 = vpop.f32.mrb[0].mxu0
        %3269 = vmatprep.mubr.f32.mxu0 %v2115
        %3270 = vmatmul.mubr.f32.gmra.mrb[0].mxu0 %v2000
        %v3271 = vpop.f32.mrb[0].mxu0
        %v3272 = vadd.f32 %v3047, %v3271
        %v3273 = vpop.f32.mrb[0].mxu0
        %3274 = vmatprep.mubr.f32.mxu0 %v2118
        %3275 = vmatmul.mubr.f32.gmra.mrb[0].mxu0 %v2002
        %v3276 = vpop.f32.mrb[0].mxu0
        %v3277 = vadd.f32 %v3052, %v3276
        %v3278 = vpop.f32.mrb[0].mxu0
        %3279 = vmatprep.mubr.f32.mxu0 %v2120
        %3280 = vmatmul.mubr.f32.gmra.mrb[0].mxu0 %v2003
        %v3281 = vpop.f32.mrb[0].mxu0
        %v3282 = vadd.f32 %v3057, %v3281
        %v3283 = vpop.f32.mrb[0].mxu0
        %3284 = vmatprep.mubr.f32.mxu0 %v2123
        %3285 = vmatmul.mubr.f32.gmra.mrb[0].mxu0 %v2005
        %v3286 = vpop.f32.mrb[0].mxu0
        %v3287 = vadd.f32 %v3062, %v3286
        %v3288 = vpop.f32.mrb[0].mxu0
        %3289 = vmatprep.mubr.f32.mxu0 %v2125
        %3290 = vmatmul.mubr.f32.gmra.mrb[0].mxu0 %v2006
        %v3291 = vpop.f32.mrb[0].mxu0
        %v3292 = vadd.f32 %v3067, %v3291
        %v3293 = vpop.f32.mrb[0].mxu0
        %3294 = vmatprep.mubr.f32.mxu0 %v2128
        %3295 = vmatmul.mubr.f32.gmra.mrb[0].mxu0 %v2008
        %v3296 = vpop.f32.mrb[0].mxu0
        %v3297 = vadd.f32 %v3072, %v3296
        %v3298 = vpop.f32.mrb[0].mxu0
        %3299 = vmatprep.mubr.f32.mxu0 %v2130
        %3300 = vmatmul.mubr.f32.gmra.mrb[0].mxu0 %v2009
        %v3301 = vpop.f32.mrb[0].mxu0
        %v3302 = vadd.f32 %v3077, %v3301
        %v3303 = vpop.f32.mrb[0].mxu0
        %3304 = vmatprep.mubr.f32.mxu0 %v2133
        %3305 = vmatmul.mubr.f32.gmra.mrb[0].mxu0 %v2011
        %v3306 = vpop.f32.mrb[0].mxu0
        %v3307 = vadd.f32 %v3082, %v3306
        %v3308 = vpop.f32.mrb[0].mxu0
        %3309 = vmatprep.mubr.f32.mxu0 %v2135
        %3310 = vmatmul.mubr.f32.gmra.mrb[0].mxu0 %v2012
        %v3311 = vpop.f32.mrb[0].mxu0
        %v3312 = vadd.f32 %v3087, %v3311
        %v3313 = vpop.f32.mrb[0].mxu0
        %3314 = vmatprep.mubr.f32.mxu0 %v2138
        %3315 = vmatmul.mubr.f32.gmra.mrb[0].mxu0 %v2014
        %v3316 = vpop.f32.mrb[0].mxu0
        %v3317 = vadd.f32 %v3092, %v3316
        %v3318 = vpop.f32.mrb[0].mxu0
        %3319 = vmatprep.mubr.f32.mxu0 %v2140
        %3320 = vmatmul.mubr.f32.gmra.mrb[0].mxu0 %v2015
        %v3321 = vpop.f32.mrb[0].mxu0
        %v3322 = vadd.f32 %v3097, %v3321
        %v3323 = vpop.f32.mrb[0].mxu0
        %3324 = vmatprep.mubr.f32.mxu0 %v2143
        %3325 = vmatmul.mubr.f32.gmra.mrb[0].mxu0 %v2017
        %v3326 = vpop.f32.mrb[0].mxu0
        %v3327 = vadd.f32 %v3102, %v3326
        %v3328 = vpop.f32.mrb[0].mxu0
        %3329 = vmatprep.mubr.f32.mxu0 %v2145
        %3330 = vmatmul.mubr.f32.gmra.mrb[0].mxu0 %v2018
        %v3331 = vpop.f32.mrb[0].mxu0
        %v3332 = vadd.f32 %v3107, %v3331
        %v3333 = vpop.f32.mrb[0].mxu0
        %3334 = vmatprep.mubr.f32.mxu0 %v2148
        %3335 = vmatmul.mubr.f32.gmra.mrb[0].mxu0 %v2020
        %v3336 = vpop.f32.mrb[0].mxu0
        %v3337 = vadd.f32 %v3112, %v3336
        %v3338 = vpop.f32.mrb[0].mxu0
        %3339 = vmatprep.mubr.f32.mxu0 %v2150
        %3340 = vmatmul.mubr.f32.gmra.mrb[0].mxu0 %v2021
        %v3341 = vpop.f32.mrb[0].mxu0
        %v3342 = vadd.f32 %v3117, %v3341
        %v3343 = vpop.f32.mrb[0].mxu0
        %3344 = vmatprep.mubr.f32.mxu0 %v2153
        %3345 = vmatmul.mubr.f32.gmra.mrb[0].mxu0 %v2023
        %v3346 = vpop.f32.mrb[0].mxu0
        %v3347 = vadd.f32 %v3122, %v3346
        %v3348 = vpop.f32.mrb[0].mxu0
        %3349 = vmatprep.mubr.f32.mxu0 %v2155
        %3350 = vmatmul.mubr.f32.gmra.mrb[0].mxu0 %v2024
        %v3351 = vpop.f32.mrb[0].mxu0
        %v3352 = vadd.f32 %v3127, %v3351
        %v3353 = vpop.f32.mrb[0].mxu0
        %3354 = vmatprep.mubr.f32.mxu0 %v2158
        %3355 = vmatmul.mubr.f32.gmra.mrb[0].mxu0 %v2026
        %v3356 = vpop.f32.mrb[0].mxu0
        %v3357 = vadd.f32 %v3132, %v3356
        %v3358 = vpop.f32.mrb[0].mxu0
        %3359 = vmatprep.mubr.f32.mxu0 %v2160
        %3360 = vmatmul.mubr.f32.gmra.mrb[0].mxu0 %v2027
        %v3361 = vpop.f32.mrb[0].mxu0
        %v3362 = vadd.f32 %v3137, %v3361
        %v3363 = vpop.f32.mrb[0].mxu0
        %3364 = vmatprep.mubr.f32.mxu0 %v2163
        %3365 = vmatmul.mubr.f32.gmra.mrb[0].mxu0 %v2029
        %v3366 = vpop.f32.mrb[0].mxu0
        %v3367 = vadd.f32 %v3142, %v3366
        %v3368 = vpop.f32.mrb[0].mxu0
        %3369 = vmatprep.mubr.f32.mxu0 %v2165
        %3370 = vmatmul.mubr.f32.gmra.mrb[0].mxu0 %v2030
        %v3371 = vpop.f32.mrb[0].mxu0
        %v3372 = vadd.f32 %v3147, %v3371
        %v3373 = vpop.f32.mrb[0].mxu0
        %3374 = vmatprep.mubr.f32.mxu0 %v2315
        %3375 = vmatmul.mubr.f32.gmra.mrb[0].mxu0 %v2032
        %v3376 = vpop.f32.mrb[0].mxu0
        %v3377 = vadd.f32 %v3152, %v3376
        %v3378 = vpop.f32.mrb[0].mxu0
        %3379 = vmatprep.mubr.f32.mxu0 %v2317
        %3380 = vmatmul.mubr.f32.gmra.mrb[0].mxu0 %v2033
        %v3381 = vpop.f32.mrb[0].mxu0
        %v3382 = vadd.f32 %v3157, %v3381
        %v3383 = vpop.f32.mrb[0].mxu0
        %3384 = vmatprep.mubr.f32.mxu0 %v2332
        %3385 = vmatmul.mubr.f32.gmra.mrb[0].mxu0 %v2035
        %v3386 = vpop.f32.mrb[0].mxu0
        %v3387 = vadd.f32 %v3162, %v3386
        %v3388 = vpop.f32.mrb[0].mxu0
        %3389 = vmatprep.mubr.f32.mxu0 %v2334
        %3390 = vmatmul.mubr.f32.gmra.mrb[0].mxu0 %v2036
        %v3391 = vpop.f32.mrb[0].mxu0
        %v3392 = vadd.f32 %v3167, %v3391
        %v3393 = vpop.f32.mrb[0].mxu0
        %3394 = vdwg.mxu0
        %3395 = vmatprep.subr.mxu0 0.0
        %3396 = vmatpush1.msra.mxu0 %v2472
        %3397 = vmatprep.subr.mxu0 0.0
        %3398 = vmatpush1.msra.mxu0 %v2473
        %3399 = vmatprep.subr.mxu0 0.0
        %3400 = vmatpush1.msra.mxu0 %v2474
        %3401 = vmatprep.subr.mxu0 0.0
        %3402 = vmatpush1.msra.mxu0 %v2475
        %3403 = vmatprep.subr.mxu0 0.0
        %3404 = vmatpush1.msra.mxu0 %v2476
        %3405 = vmatprep.subr.mxu0 0.0
        %3406 = vmatpush1.msra.mxu0 %v2477
        %3407 = vmatprep.subr.mxu0 0.0
        %3408 = vmatpush1.msra.mxu0 %v2478
        %3409 = vmatprep.subr.mxu0 0.0
        %3410 = vmatpush1.msra.mxu0 %v2479
        %3411 = vmatprep.subr.mxu0 0.0
        %3412 = vmatpush1.msra.mxu0 %v2480
        %3413 = vmatprep.subr.mxu0 0.0
        %3414 = vmatpush1.msra.mxu0 %v2481
        %3415 = vmatprep.subr.mxu0 0.0
        %3416 = vmatpush1.msra.mxu0 %v2482
        %3417 = vmatprep.subr.mxu0 0.0
        %3418 = vmatpush1.msra.mxu0 %v2483
        %3419 = vmatprep.subr.mxu0 0.0
        %3420 = vmatpush1.msra.mxu0 %v2484
        %3421 = vmatprep.subr.mxu0 0.0
        %3422 = vmatpush1.msra.mxu0 %v2485
        %3423 = vmatprep.subr.mxu0 0.0
        %3424 = vmatpush1.msra.mxu0 %v2486
        %3425 = vmatprep.subr.mxu0 0.0
        %3426 = vmatpush1.msra.mxu0 %v2487
        %3427 = vmatprep.subr.mxu0 0.0
        %3428 = vmatpush1.msra.mxu0 0.0
        %3429 = vmatprep.subr.mxu0 0.0
        %3430 = vmatpush1.msra.mxu0 0.0
        %3431 = vmatprep.subr.mxu0 0.0
        %3432 = vmatpush1.msra.mxu0 0.0
        %3433 = vmatprep.subr.mxu0 0.0
        %3434 = vmatpush1.msra.mxu0 0.0
        %3435 = vmatprep.subr.mxu0 0.0
        %3436 = vmatpush1.msra.mxu0 0.0
        %3437 = vmatprep.subr.mxu0 0.0
        %3438 = vmatpush1.msra.mxu0 0.0
        %3439 = vmatprep.subr.mxu0 0.0
        %3440 = vmatpush1.msra.mxu0 0.0
        %3441 = vmatprep.subr.mxu0 0.0
        %3442 = vmatpush1.msra.mxu0 0.0
        %3443 = vmatprep.subr.mxu0 0.0
        %3444 = vmatpush1.msra.mxu0 0.0
        %3445 = vmatprep.subr.mxu0 0.0
        %3446 = vmatpush1.msra.mxu0 0.0
        %3447 = vmatprep.subr.mxu0 0.0
        %3448 = vmatpush1.msra.mxu0 0.0
        %3449 = vmatprep.subr.mxu0 0.0
        %3450 = vmatpush1.msra.mxu0 0.0
        %3451 = vmatprep.subr.mxu0 0.0
        %3452 = vmatpush1.msra.mxu0 0.0
        %3453 = vmatprep.subr.mxu0 0.0
        %3454 = vmatpush1.msra.mxu0 0.0
        %3455 = vmatprep.subr.mxu0 0.0
        %3456 = vmatpush1.msra.mxu0 0.0
        %3457 = vmatprep.subr.mxu0 0.0
        %3458 = vmatpush1.msra.mxu0 0.0
        %3459 = vmatprep.mubr.f32.mxu0 0.0
        %3460 = vmatmul.mubr.f32.gmra.mrb[0].mxu0 %v2210
        %v3461 = vpop.f32.mrb[0].mxu0
        %v3462 = vadd.f32 %v3237, %v3461
        %v3463 = vpop.f32.mrb[0].mxu0
        %3464 = vmatprep.mubr.f32.mxu0 0.0
        %3465 = vmatmul.mubr.f32.gmra.mrb[0].mxu0 %v2212
        %v3466 = vpop.f32.mrb[0].mxu0
        %v3467 = vadd.f32 %v3242, %v3466
        %v3468 = vpop.f32.mrb[0].mxu0
        %3469 = vmatprep.mubr.f32.mxu0 0.0
        %3470 = vmatmul.mubr.f32.gmra.mrb[0].mxu0 %v2215
        %v3471 = vpop.f32.mrb[0].mxu0
        %v3472 = vadd.f32 %v3247, %v3471
        %v3473 = vpop.f32.mrb[0].mxu0
        %3474 = vmatprep.mubr.f32.mxu0 0.0
        %3475 = vmatmul.mubr.f32.gmra.mrb[0].mxu0 %v2217
        %v3476 = vpop.f32.mrb[0].mxu0
        %v3477 = vadd.f32 %v3252, %v3476
        %v3478 = vpop.f32.mrb[0].mxu0
        %3479 = vmatprep.mubr.f32.mxu0 0.0
        %3480 = vmatmul.mubr.f32.gmra.mrb[0].mxu0 %v2220
        %v3481 = vpop.f32.mrb[0].mxu0
        %v3482 = vadd.f32 %v3257, %v3481
        %v3483 = vpop.f32.mrb[0].mxu0
        %3484 = vmatprep.mubr.f32.mxu0 0.0
        %3485 = vmatmul.mubr.f32.gmra.mrb[0].mxu0 %v2222
        %v3486 = vpop.f32.mrb[0].mxu0
        %v3487 = vadd.f32 %v3262, %v3486
        %v3488 = vpop.f32.mrb[0].mxu0
        %3489 = vmatprep.mubr.f32.mxu0 0.0
        %3490 = vmatmul.mubr.f32.gmra.mrb[0].mxu0 %v2225
        %v3491 = vpop.f32.mrb[0].mxu0
        %v3492 = vadd.f32 %v3267, %v3491
        %v3493 = vpop.f32.mrb[0].mxu0
        %3494 = vmatprep.mubr.f32.mxu0 0.0
        %3495 = vmatmul.mubr.f32.gmra.mrb[0].mxu0 %v2227
        %v3496 = vpop.f32.mrb[0].mxu0
        %v3497 = vadd.f32 %v3272, %v3496
        %v3498 = vpop.f32.mrb[0].mxu0
        %3499 = vmatprep.mubr.f32.mxu0 0.0
        %3500 = vmatmul.mubr.f32.gmra.mrb[0].mxu0 %v2230
        %v3501 = vpop.f32.mrb[0].mxu0
        %v3502 = vadd.f32 %v3277, %v3501
        %v3503 = vpop.f32.mrb[0].mxu0
        %3504 = vmatprep.mubr.f32.mxu0 0.0
        %3505 = vmatmul.mubr.f32.gmra.mrb[0].mxu0 %v2232
        %v3506 = vpop.f32.mrb[0].mxu0
        %v3507 = vadd.f32 %v3282, %v3506
        %v3508 = vpop.f32.mrb[0].mxu0
        %3509 = vmatprep.mubr.f32.mxu0 0.0
        %3510 = vmatmul.mubr.f32.gmra.mrb[0].mxu0 %v2235
        %v3511 = vpop.f32.mrb[0].mxu0
        %v3512 = vadd.f32 %v3287, %v3511
        %v3513 = vpop.f32.mrb[0].mxu0
        %3514 = vmatprep.mubr.f32.mxu0 0.0
        %3515 = vmatmul.mubr.f32.gmra.mrb[0].mxu0 %v2237
        %v3516 = vpop.f32.mrb[0].mxu0
        %v3517 = vadd.f32 %v3292, %v3516
        %v3518 = vpop.f32.mrb[0].mxu0
        %3519 = vmatprep.mubr.f32.mxu0 0.0
        %3520 = vmatmul.mubr.f32.gmra.mrb[0].mxu0 %v2240
        %v3521 = vpop.f32.mrb[0].mxu0
        %v3522 = vadd.f32 %v3297, %v3521
        %v3523 = vpop.f32.mrb[0].mxu0
        %3524 = vmatprep.mubr.f32.mxu0 0.0
        %3525 = vmatmul.mubr.f32.gmra.mrb[0].mxu0 %v2242
        %v3526 = vpop.f32.mrb[0].mxu0
        %v3527 = vadd.f32 %v3302, %v3526
        %v3528 = vpop.f32.mrb[0].mxu0
        %3529 = vmatprep.mubr.f32.mxu0 0.0
        %3530 = vmatmul.mubr.f32.gmra.mrb[0].mxu0 %v2245
        %v3531 = vpop.f32.mrb[0].mxu0
        %v3532 = vadd.f32 %v3307, %v3531
        %v3533 = vpop.f32.mrb[0].mxu0
        %3534 = vmatprep.mubr.f32.mxu0 0.0
        %3535 = vmatmul.mubr.f32.gmra.mrb[0].mxu0 %v2247
        %v3536 = vpop.f32.mrb[0].mxu0
        %v3537 = vadd.f32 %v3312, %v3536
        %v3538 = vpop.f32.mrb[0].mxu0
        %3539 = vmatprep.mubr.f32.mxu0 0.0
        %3540 = vmatmul.mubr.f32.gmra.mrb[0].mxu0 %v2250
        %v3541 = vpop.f32.mrb[0].mxu0
        %v3542 = vadd.f32 %v3317, %v3541
        %v3543 = vpop.f32.mrb[0].mxu0
        %3544 = vmatprep.mubr.f32.mxu0 0.0
        %3545 = vmatmul.mubr.f32.gmra.mrb[0].mxu0 %v2252
        %v3546 = vpop.f32.mrb[0].mxu0
        %v3547 = vadd.f32 %v3322, %v3546
        %v3548 = vpop.f32.mrb[0].mxu0
        %3549 = vmatprep.mubr.f32.mxu0 0.0
        %3550 = vmatmul.mubr.f32.gmra.mrb[0].mxu0 %v2255
        %v3551 = vpop.f32.mrb[0].mxu0
        %v3552 = vadd.f32 %v3327, %v3551
        %v3553 = vpop.f32.mrb[0].mxu0
        %3554 = vmatprep.mubr.f32.mxu0 0.0
        %3555 = vmatmul.mubr.f32.gmra.mrb[0].mxu0 %v2257
        %v3556 = vpop.f32.mrb[0].mxu0
        %v3557 = vadd.f32 %v3332, %v3556
        %v3558 = vpop.f32.mrb[0].mxu0
        %3559 = vmatprep.mubr.f32.mxu0 0.0
        %3560 = vmatmul.mubr.f32.gmra.mrb[0].mxu0 %v2260
        %v3561 = vpop.f32.mrb[0].mxu0
        %v3562 = vadd.f32 %v3337, %v3561
        %v3563 = vpop.f32.mrb[0].mxu0
        %3564 = vmatprep.mubr.f32.mxu0 0.0
        %3565 = vmatmul.mubr.f32.gmra.mrb[0].mxu0 %v2262
        %v3566 = vpop.f32.mrb[0].mxu0
        %v3567 = vadd.f32 %v3342, %v3566
        %v3568 = vpop.f32.mrb[0].mxu0
        %3569 = vmatprep.mubr.f32.mxu0 0.0
        %3570 = vmatmul.mubr.f32.gmra.mrb[0].mxu0 %v2265
        %v3571 = vpop.f32.mrb[0].mxu0
        %v3572 = vadd.f32 %v3347, %v3571
        %v3573 = vpop.f32.mrb[0].mxu0
        %3574 = vmatprep.mubr.f32.mxu0 0.0
        %3575 = vmatmul.mubr.f32.gmra.mrb[0].mxu0 %v2267
        %v3576 = vpop.f32.mrb[0].mxu0
        %v3577 = vadd.f32 %v3352, %v3576
        %v3578 = vpop.f32.mrb[0].mxu0
        %3579 = vmatprep.mubr.f32.mxu0 0.0
        %3580 = vmatmul.mubr.f32.gmra.mrb[0].mxu0 %v2270
        %v3581 = vpop.f32.mrb[0].mxu0
        %v3582 = vadd.f32 %v3357, %v3581
        %v3583 = vpop.f32.mrb[0].mxu0
        %3584 = vmatprep.mubr.f32.mxu0 0.0
        %3585 = vmatmul.mubr.f32.gmra.mrb[0].mxu0 %v2272
        %v3586 = vpop.f32.mrb[0].mxu0
        %v3587 = vadd.f32 %v3362, %v3586
        %v3588 = vpop.f32.mrb[0].mxu0
        %3589 = vmatprep.mubr.f32.mxu0 0.0
        %3590 = vmatmul.mubr.f32.gmra.mrb[0].mxu0 %v2275
        %v3591 = vpop.f32.mrb[0].mxu0
        %v3592 = vadd.f32 %v3367, %v3591
        %v3593 = vpop.f32.mrb[0].mxu0
        %3594 = vmatprep.mubr.f32.mxu0 0.0
        %3595 = vmatmul.mubr.f32.gmra.mrb[0].mxu0 %v2277
        %v3596 = vpop.f32.mrb[0].mxu0
        %v3597 = vadd.f32 %v3372, %v3596
        %v3598 = vpop.f32.mrb[0].mxu0
        %3599 = vmatprep.mubr.f32.mxu0 0.0
        %3600 = vmatmul.mubr.f32.gmra.mrb[0].mxu0 %v2322
        %v3601 = vpop.f32.mrb[0].mxu0
        %v3602 = vadd.f32 %v3377, %v3601
        %v3603 = vpop.f32.mrb[0].mxu0
        %3604 = vmatprep.mubr.f32.mxu0 0.0
        %3605 = vmatmul.mubr.f32.gmra.mrb[0].mxu0 %v2324
        %v3606 = vpop.f32.mrb[0].mxu0
        %v3607 = vadd.f32 %v3382, %v3606
        %v3608 = vpop.f32.mrb[0].mxu0
        %3609 = vmatprep.mubr.f32.mxu0 0.0
        %3610 = vmatmul.mubr.f32.gmra.mrb[0].mxu0 %v2339
        %v3611 = vpop.f32.mrb[0].mxu0
        %v3612 = vadd.f32 %v3387, %v3611
        %v3613 = vpop.f32.mrb[0].mxu0
        %3614 = vmatprep.mubr.f32.mxu0 0.0
        %3615 = vmatmul.mubr.f32.gmra.mrb[0].mxu0 %v2341
        %v3616 = vpop.f32.mrb[0].mxu0
        %v3617 = vadd.f32 %v3392, %v3616
        %v3618 = vpop.f32.mrb[0].mxu0
        %3619 = vdwg.mxu0
        %v3620 = vadd.f32 %v1876, %v3462
        %v3621 = vadd.f32 %v1877, %v3467
        %v3622 = vadd.f32 %v1878, %v3472
        %v3623 = vadd.f32 %v1879, %v3477
        %v3624 = vadd.f32 %v1880, %v3482
        %v3625 = vadd.f32 %v1881, %v3487
        %v3626 = vadd.f32 %v1882, %v3492
        %v3627 = vadd.f32 %v1883, %v3497
        %v3628 = vadd.f32 %v1884, %v3502
        %v3629 = vadd.f32 %v1885, %v3507
        %v3630 = vadd.f32 %v1886, %v3512
        %v3631 = vadd.f32 %v1887, %v3517
        %v3632 = vadd.f32 %v1888, %v3522
        %v3633 = vadd.f32 %v1889, %v3527
        %v3634 = vadd.f32 %v1890, %v3532
        %v3635 = vadd.f32 %v1891, %v3537
        %v3636 = vadd.f32 %v1892, %v3542
        %v3637 = vadd.f32 %v1893, %v3547
        %v3638 = vadd.f32 %v1894, %v3552
        %v3639 = vadd.f32 %v1895, %v3557
        %v3640 = vadd.f32 %v1896, %v3562
        %v3641 = vadd.f32 %v1897, %v3567
        %v3642 = vadd.f32 %v1898, %v3572
        %v3643 = vadd.f32 %v1899, %v3577
        %v3644 = vadd.f32 %v1900, %v3582
        %v3645 = vadd.f32 %v1901, %v3587
        %v3646 = vadd.f32 %v1902, %v3592
        %v3647 = vadd.f32 %v1903, %v3597
        %v3648 = vadd.f32 %v1904, %v3602
        %v3649 = vadd.f32 %v1905, %v3607
        %v3650 = vadd.f32 %v1906, %v3612
        %v3651 = vadd.f32 %v1907, %v3617
        %v3652 = vmax.f32 %v3620, 0.0
        %v3653 = vmax.f32 %v3621, 0.0
        %v3654 = vmax.f32 %v3622, 0.0
        %v3655 = vmax.f32 %v3623, 0.0
        %v3656 = vmax.f32 %v3624, 0.0
        %v3657 = vmax.f32 %v3625, 0.0
        %v3658 = vmax.f32 %v3626, 0.0
        %v3659 = vmax.f32 %v3627, 0.0
        %v3660 = vmax.f32 %v3628, 0.0
        %v3661 = vmax.f32 %v3629, 0.0
        %v3662 = vmax.f32 %v3630, 0.0
        %v3663 = vmax.f32 %v3631, 0.0
        %v3664 = vmax.f32 %v3632, 0.0
        %v3665 = vmax.f32 %v3633, 0.0
        %v3666 = vmax.f32 %v3634, 0.0
        %v3667 = vmax.f32 %v3635, 0.0
        %v3668 = vmax.f32 %v3636, 0.0
        %v3669 = vmax.f32 %v3637, 0.0
        %v3670 = vmax.f32 %v3638, 0.0
        %v3671 = vmax.f32 %v3639, 0.0
        %v3672 = vmax.f32 %v3640, 0.0
        %v3673 = vmax.f32 %v3641, 0.0
        %v3674 = vmax.f32 %v3642, 0.0
        %v3675 = vmax.f32 %v3643, 0.0
        %v3676 = vmax.f32 %v3644, 0.0
        %v3677 = vmax.f32 %v3645, 0.0
        %v3678 = vmax.f32 %v3646, 0.0
        %v3679 = vmax.f32 %v3647, 0.0
        %v3680 = vmax.f32 %v3648, 0.0
        %v3681 = vmax.f32 %v3649, 0.0
        %v3682 = vmax.f32 %v3650, 0.0
        %v3683 = vmax.f32 %v3651, 0.0
        %3684 = vst [vmem:[%s232] sm:$0xff] %v3652
        %3685 = vst [vmem:[%s232 + $0x8] sm:$0xff] %v3653
        %3686 = vst [vmem:[%s232 + $0x10] sm:$0xff] %v3654
        %3687 = vst [vmem:[%s232 + $0x18] sm:$0xff] %v3655
        %3688 = vst [vmem:[%s232 + $0x20] sm:$0xff] %v3656
        %3689 = vst [vmem:[%s232 + $0x28] sm:$0xff] %v3657
        %3690 = vst [vmem:[%s232 + $0x30] sm:$0xff] %v3658
        %3691 = vst [vmem:[%s232 + $0x38] sm:$0xff] %v3659
        %3692 = vst [vmem:[%s232 + $0x40] sm:$0xff] %v3660
        %3693 = vst [vmem:[%s232 + $0x48] sm:$0xff] %v3661
        %3694 = vst [vmem:[%s232 + $0x50] sm:$0xff] %v3662
        %3695 = vst [vmem:[%s232 + $0x58] sm:$0xff] %v3663
        %3696 = vst [vmem:[%s232 + $0x60] sm:$0xff] %v3664
        %3697 = vst [vmem:[%s232 + $0x68] sm:$0xff] %v3665
        %3698 = vst [vmem:[%s232 + $0x70] sm:$0xff] %v3666
        %3699 = vst [vmem:[%s232 + $0x78] sm:$0xff] %v3667
        %3700 = vst [vmem:[%s232 + $0x80] sm:$0xff] %v3668
        %3701 = vst [vmem:[%s232 + $0x88] sm:$0xff] %v3669
        %3702 = vst [vmem:[%s232 + $0x90] sm:$0xff] %v3670
        %3703 = vst [vmem:[%s232 + $0x98] sm:$0xff] %v3671
        %3704 = vst [vmem:[%s232 + $0xa0] sm:$0xff] %v3672
        %3705 = vst [vmem:[%s232 + $0xa8] sm:$0xff] %v3673
        %3706 = vst [vmem:[%s232 + $0xb0] sm:$0xff] %v3674
        %3707 = vst [vmem:[%s232 + $0xb8] sm:$0xff] %v3675
        %3708 = vst [vmem:[%s232 + $0xc0] sm:$0xff] %v3676
        %3709 = vst [vmem:[%s232 + $0xc8] sm:$0xff] %v3677
        %3710 = vst [vmem:[%s232 + $0xd0] sm:$0xff] %v3678
        %3711 = vst [vmem:[%s232 + $0xd8] sm:$0xff] %v3679
        %3712 = vst [vmem:[%s232 + $0xe0] sm:$0xff] %v3680
        %3713 = vst [vmem:[%s232 + $0xe8] sm:$0xff] %v3681
        %3714 = vst [vmem:[%s232 + $0xf0] sm:$0xff] %v3682
        %3715 = vst [vmem:[%s232 + $0xf8] sm:$0xff] %v3683
        %s3716 = sand.u32 %s138, 1
        %s3717 = scalar_lea.sflag [#allocation5], %s3716
        %s3718 = sand.u32 %s138, 1
        %s3719 = smul.addr %s3718, 256
        %s3720 = scalar_lea.vmem [#allocation6], %s3719
        // Predicated region
        $region45: #{tpu_custom_call.1} parent=39 // pred_check
          %p3721 = pneg %p148
        $region46: #{tpu_custom_call.1} parent=39 // pred_check_branch
          %3723 = sbr.rel (%p3721) target = $region48
        $region47: #{tpu_custom_call.1} parent=39 // pred_region
          %s3725 = ssub.s32 4096, 4096
          %3726 = vsyncadd %s3717, %s3725
          %s3727 = smul.addr %s20, 32
          %s3728 = smul.addr %s3727, 128
          %s3729 = scalar_lea.hbm %s5, %s3728
          %s3730 = sshll.u32 %s3720, 4
          %s3731 = int_to_ptr.vmem [resolvable:$true] %s3730
          %3736 = dma.vmem_to_hbm [thread:$0]  %s3731, 4096, %s3729, %s3717, 128, 128, 8
        $region48: #{tpu_custom_call.1} parent=39 // pred_fallthru
          _
      $region40: #{tpu_custom_call.1} parent=5 // pred_fallthru
        _
      %p3737 = scmp.le.s32.totalorder 2, %s15
      // Predicated region
      $region49: #{tpu_custom_call.1} parent=5 // pred_check
        %p3738 = pneg %p3737
      $region50: #{tpu_custom_call.1} parent=5 // pred_check_branch
        %3740 = sbr.rel (%p3738) target = $region52
      $region51: #{tpu_custom_call.1} parent=5 // pred_region
        %s3741 = ssub.s32 %s15, 2
        // Predicated region
        $region53: #{tpu_custom_call.1} parent=51 // pred_check
          %p3742 = pneg %p154
        $region54: #{tpu_custom_call.1} parent=51 // pred_check_branch
          %3744 = sbr.rel (%p3742) target = $region56
        $region55: #{tpu_custom_call.1} parent=51 // pred_region
          %s3745 = sand.u32 %s139, 1
          %s3746 = scalar_lea.sflag [#allocation5], %s3745
          %s3747 = sand.u32 %s139, 1
          %s3748 = smul.addr %s3747, 256
          %s3749 = scalar_lea.vmem [#allocation6], %s3748
          %3750 = dma.done %s3746, 4096
        $region56: #{tpu_custom_call.1} parent=51 // pred_fallthru
          _
      $region52: #{tpu_custom_call.1} parent=5 // pred_fallthru
        _
    $region6: #{tpu_custom_call.1} parent=1 // loop_footer
      %s19 = sadd.s32 1, %s15
    $region7: #{tpu_custom_call.1} parent=1 // loop_footer_branch
      %14 = sbr.rel target = $region3
    $region8: #{tpu_custom_call.1} parent=1 // loop_exit
      _
    %3751 = vsyncpa [#allocation4], 1
    %s3752 = scalar_lea.sflag [#allocation4], 1
    %3753 = vsyncpa %s3752, 1
    %3754 = vsyncpa [#allocation5], 1
    %s3755 = scalar_lea.sflag [#allocation5], 1
    %3756 = vsyncpa %s3755, 1

</llo_original>
